<compile_context>
chip_gen: v7x
topology: tpu7x:2x2x1
jax: 0.10.0
libtpu: 0.0.40
codegen_flags: <defaults>
</compile_context>

<pallas_src>
import math

import jax
import jax.numpy as jnp
from jax import lax
from jax.experimental import pallas as pl
from jax.experimental.pallas import tpu as pltpu

# ----------------------------------------------------------------------------
# Model configuration (mirrors ConvLSTM_Model.__init__ / configs)
# ----------------------------------------------------------------------------
PATCH_SIZE    = 2
FILTER_SIZE   = 3
STRIDE        = 1
LAYER_NORM    = False
NUM_LAYERS    = 2
NUM_HIDDEN    = (32, 32)
PRE_SEQ       = 4
AFT_SEQ       = 4
IN_SHAPE      = (PRE_SEQ + AFT_SEQ, 1, 16, 16)       # (T, C, H, W)
FRAME_CHANNEL = PATCH_SIZE * PATCH_SIZE * IN_SHAPE[1]
FORGET_BIAS   = 1.0

T_STEPS = PRE_SEQ + AFT_SEQ - 1          # number of generated frames (7)
PAD     = FILTER_SIZE // 2               # SAME padding for stride-1 conv
KK      = FILTER_SIZE * FILTER_SIZE
NH      = NUM_HIDDEN[0]
CPAD    = 128                            # lane-padded [x|h] channel capacity

assert all(nh == NH for nh in NUM_HIDDEN), "kernel assumes uniform num_hidden"
assert max(FRAME_CHANNEL, NH) + NH <= CPAD


# ----------------------------------------------------------------------------
# reshape_patch / reshape_patch_back (pure JAX glue, matches einops semantics)
# ----------------------------------------------------------------------------
def reshape_patch(img, p):
    # 'b s c (h p1) (w p2) -> b s (p1 p2 c) h w'
    B, S, C, H, W = img.shape
    x = img.reshape(B, S, C, H // p, p, W // p, p)
    x = jnp.transpose(x, (0, 1, 4, 6, 2, 3, 5))        # b s p1 p2 c h w
    return x.reshape(B, S, p * p * C, H // p, W // p)


def reshape_patch_back(pt, p):
    # 'b s (p1 p2 c) h w -> b s c (h p1) (w p2)'
    B, S, CC, h, w = pt.shape
    C = CC // (p * p)
    x = pt.reshape(B, S, p, p, C, h, w)
    x = jnp.transpose(x, (0, 1, 4, 5, 2, 6, 3))        # b s c h p1 w p2
    return x.reshape(B, S, C, h * p, w * p)


# ----------------------------------------------------------------------------
# Parameters (deterministic, weights_init-style: Conv2d weights ~ N(0, 0.02))
# ----------------------------------------------------------------------------
def init_params(key):
    keys = jax.random.split(key, NUM_LAYERS + 1)
    w_cell = []
    for i in range(NUM_LAYERS):
        cin = FRAME_CHANNEL if i == 0 else NUM_HIDDEN[i - 1]
        nh = NUM_HIDDEN[i]
        # combined [conv_x ; conv_h] weights: (K*K, cin+nh, 4*nh); gate order i,f,g,o
        w = 0.02 * jax.random.normal(
            keys[i], (KK, cin + nh, 4 * nh), jnp.float32)
        w_cell.append(w)
    w_last = 0.02 * jax.random.normal(
        keys[-1], (NUM_HIDDEN[-1], FRAME_CHANNEL), jnp.float32)
    return {"w_cell": w_cell, "w_last": w_last}


def _pack_cell_weights(w_cell):
    """(KK, cin+nh, 4*nh) per layer -> stacked (L, KK*CPAD, 4*NH).

    Zero-padded so weight row (tap*CPAD + c) multiplies im2col column
    (tap*CPAD + c); padded channel rows are zero, matching the zero-padded
    channel lanes of the [x|h] scratch buffer.
    """
    packed = []
    for w in w_cell:
        kk, cpk, gates = w.shape
        wp = jnp.zeros((kk, CPAD, gates), jnp.float32).at[:, :cpk, :].set(w)
        packed.append(wp.reshape(kk * CPAD, gates))
    return jnp.stack(packed, axis=0)


# ----------------------------------------------------------------------------
# Fused Pallas kernel: whole recurrence (grid axis = time, sequential)
# ----------------------------------------------------------------------------
def _fused_convlstm_kernel(frames_ref, mask_ref, wc_ref, wl_ref, out_ref, *scratch):
    # frames_ref/mask_ref: (1, B, h, w, FC)  current timestep, NHWC patched space
    # wc_ref: (L, KK*CPAD, 4*NH)             combined [conv_x ; conv_h] im2col weights
    # wl_ref: (NH, FC)                       conv_last (1x1, bias-free)
    # out_ref: (1, B*h*w, FC)                x_gen for this timestep
    # scratch (persists across the time grid):
    #   xh_refs[l]: (B, h+2P, w+2P, CPAD)    zero-padded [x | h | zeros] per layer
    #   c_refs[l] : (B*h*w, NH)              cell state per layer
    #   xgen_ref  : (B*h*w, FC)              previous generated frame (feedback)
    #   col_ref   : (B*h*w, KK*CPAD)         im2col staging buffer
    L = wc_ref.shape[0]
    xh_refs = scratch[:L]
    c_refs = scratch[L:2 * L]
    xgen_ref = scratch[2 * L]
    col_ref = scratch[2 * L + 1]

    Bsz, Hp, Wp, Cp = xh_refs[0].shape
    Hh, Ww = Hp - 2 * PAD, Wp - 2 * PAD
    M = Bsz * Hh * Ww
    FC = frames_ref.shape[-1]
    t = pl.program_id(0)

    @pl.when(t == 0)
    def _init():
        # zero halo, zero pad lanes, zero h_0 / c_0 / x_gen feedback
        for r in (*xh_refs, *c_refs, xgen_ref):
            r[...] = jnp.zeros_like(r)

    # Scheduled sampling: mask is 1.0 for warm-up steps, so this reduces to the
    # ground-truth frame there (x_gen feedback was zeroed at t == 0).
    frame = frames_ref[0].reshape(M, FC)
    msk = mask_ref[0].reshape(M, FC)
    net = msk * frame + (1.0 - msk) * xgen_ref[...]
    xh_refs[0][:, PAD:PAD + Hh, PAD:PAD + Ww, 0:FC] = net.reshape(Bsz, Hh, Ww, FC)

    h_last = None
    for layer in range(L):
        cin = FC if layer == 0 else NUM_HIDDEN[layer - 1]
        nh = NUM_HIDDEN[layer]

        # im2col: every tap lands on a 128-lane-aligned column slab of col_ref.
        xh = xh_refs[layer][...]                              # (B, Hp, Wp, CPAD)
        for ky in range(FILTER_SIZE):
            for kx in range(FILTER_SIZE):
                tap = ky * FILTER_SIZE + kx
                col_ref[:, tap * Cp:(tap + 1) * Cp] = (
                    xh[:, ky:ky + Hh, kx:kx + Ww, :].reshape(M, Cp))

        # Single MXU contraction: conv_x(x) + conv_h(h) for all 4 gates at once.
        acc = jnp.dot(col_ref[...], wc_ref[layer],
                      preferred_element_type=jnp.float32)     # (M, 4*nh)

        # Full-width gate activations: one sigmoid + one tanh over the whole
        # tile, gate selection via lane-index mask (forget bias on f lanes only).
        lane = lax.broadcasted_iota(jnp.int32, acc.shape, 1)
        is_f = (lane >= nh) & (lane < 2 * nh)
        is_g = (lane >= 2 * nh) & (lane < 3 * nh)
        sig = jax.nn.sigmoid(acc + jnp.where(is_f, FORGET_BIAS, 0.0))
        act = jnp.where(is_g, jnp.tanh(acc), sig)             # [i_t | f_t | g_t | o_t]

        i_t = act[:, 0 * nh:1 * nh]
        f_t = act[:, 1 * nh:2 * nh]
        g_t = act[:, 2 * nh:3 * nh]
        o_t = act[:, 3 * nh:4 * nh]
        c_new = f_t * c_refs[layer][...] + i_t * g_t
        h_new = o_t * jnp.tanh(c_new)
        c_refs[layer][...] = c_new

        # h feeds (a) this layer's recurrent slot, (b) the next layer's x slot.
        h_blk = h_new.reshape(Bsz, Hh, Ww, nh)
        xh_refs[layer][:, PAD:PAD + Hh, PAD:PAD + Ww, cin:cin + nh] = h_blk
        if layer + 1 < L:
            xh_refs[layer + 1][:, PAD:PAD + Hh, PAD:PAD + Ww, 0:nh] = h_blk
        h_last = h_new

    # conv_last (1x1, bias-free) == per-pixel matmul; keep feedback in VMEM.
    x_gen = jnp.dot(h_last, wl_ref[...], preferred_element_type=jnp.float32)
    xgen_ref[...] = x_gen
    out_ref[0] = x_gen


def _fused_forward(frames_nhwc, mask_nhwc, wc, wl):
    Tm1, Bsz, Hh, Ww, FC = frames_nhwc.shape
    L = wc.shape[0]
    M = Bsz * Hh * Ww
    Hp, Wp = Hh + 2 * PAD, Ww + 2 * PAD

    scratch_shapes = (
        [pltpu.VMEM((Bsz, Hp, Wp, CPAD), jnp.float32) for _ in range(L)]    # [x|h] pads
        + [pltpu.VMEM((M, NH), jnp.float32) for _ in range(L)]              # cell state
        + [pltpu.VMEM((M, FC), jnp.float32),                                # x_gen feedback
           pltpu.VMEM((M, KK * CPAD), jnp.float32)]                         # im2col buffer
    )

    return pl.pallas_call(
        _fused_convlstm_kernel,
        out_shape=jax.ShapeDtypeStruct((Tm1, M, FC), jnp.float32),
        grid_spec=pltpu.PrefetchScalarGridSpec(
            num_scalar_prefetch=0,
            grid=(Tm1,),
            in_specs=[
                # per-timestep streamed blocks
                pl.BlockSpec((1, Bsz, Hh, Ww, FC), lambda t: (t, 0, 0, 0, 0)),
                pl.BlockSpec((1, Bsz, Hh, Ww, FC), lambda t: (t, 0, 0, 0, 0)),
                # constant index maps -> weights DMA'd to VMEM exactly once
                pl.BlockSpec((L, KK * CPAD, 4 * NH), lambda t: (0, 0, 0)),
                pl.BlockSpec((NH, FC), lambda t: (0, 0)),
            ],
            out_specs=pl.BlockSpec((1, M, FC), lambda t: (t, 0, 0)),
            scratch_shapes=scratch_shapes,
        ),
        compiler_params=pltpu.CompilerParams(
            # sequential recurrence: the time axis must not be megacore-split
            dimension_semantics=("arbitrary",),
        ),
    )(frames_nhwc, mask_nhwc, wc, wl)


# ----------------------------------------------------------------------------
# Full ConvLSTM_Model.forward (scheduled-sampling recurrence)
# ----------------------------------------------------------------------------
@jax.jit
def convlstm_forward(frames, mask_true, params):
    # frames: (B, T, C, H, W) NCHW; mask_true: (B, AFT_SEQ-1, FC, h, w) patched space
    frames_p = reshape_patch(frames, PATCH_SIZE)              # (B, T, FC, h, w)
    Bsz, _, FC, hh, ww = frames_p.shape

    # NHWC per-timestep inputs for the kernel (only the first T-1 frames are used).
    frames_nhwc = jnp.transpose(frames_p[:, :T_STEPS], (1, 0, 3, 4, 2)).astype(jnp.float32)
    mask_nhwc = jnp.transpose(mask_true, (1, 0, 3, 4, 2)).astype(jnp.float32)
    # Warm-up steps use the ground-truth frame: encode that as mask == 1.
    mask_full = jnp.concatenate(
        [jnp.ones((PRE_SEQ, Bsz, hh, ww, FC), jnp.float32), mask_nhwc], axis=0)

    wc = _pack_cell_weights(params["w_cell"])                 # (L, KK*CPAD, 4*NH)
    wl = params["w_last"].astype(jnp.float32)                 # (NH, FC)

    out = _fused_forward(frames_nhwc, mask_full, wc, wl)      # (T-1, B*h*w, FC)
    nf = out.reshape(T_STEPS, Bsz, hh, ww, FC)
    nf = jnp.transpose(nf, (1, 0, 4, 2, 3))                   # (B, T-1, FC, h, w)
    return reshape_patch_back(nf, PATCH_SIZE)                 # (B, T-1, C, H, W)


# ----------------------------------------------------------------------------
# Pure-JAX reference (lax.conv, HIGHEST precision) for the correctness check
# ----------------------------------------------------------------------------
def _ref_cell(xh, w_comb, c_prev):
    K = math.isqrt(w_comb.shape[0])
    w_hwio = w_comb.reshape(K, K, w_comb.shape[1], w_comb.shape[2])
    conv = lax.conv_general_dilated(xh, w_hwio, (1, 1), "SAME",
                                    dimension_numbers=("NHWC", "HWIO", "NHWC"),
                                    precision=lax.Precision.HIGHEST)
    i_g, f_g, g_g, o_g = jnp.split(conv, 4, axis=-1)
    i_t = jax.nn.sigmoid(i_g)
    f_t = jax.nn.sigmoid(f_g + FORGET_BIAS)
    g_t = jnp.tanh(g_g)
    c_new = f_t * c_prev + i_t * g_t
    h_new = jax.nn.sigmoid(o_g) * jnp.tanh(c_new)
    return h_new, c_new


@jax.jit
def convlstm_forward_ref(frames, mask_true, params):
    frames_p = reshape_patch(frames, PATCH_SIZE)
    B, _, FC, hh, ww = frames_p.shape
    h_t = [jnp.zeros((B, hh, ww, NUM_HIDDEN[i]), jnp.float32) for i in range(NUM_LAYERS)]
    c_t = [jnp.zeros((B, hh, ww, NUM_HIDDEN[i]), jnp.float32) for i in range(NUM_LAYERS)]
    next_frames = []
    x_gen = None
    for t in range(T_STEPS):
        if t < PRE_SEQ:
            net_nchw = frames_p[:, t]
        else:
            m = mask_true[:, t - PRE_SEQ]
            net_nchw = m * frames_p[:, t] + (1.0 - m) * x_gen
        inp = jnp.transpose(net_nchw, (0, 2, 3, 1))
        for i in range(NUM_LAYERS):
            xh = jnp.concatenate([inp, h_t[i]], axis=-1)
            h_t[i], c_t[i] = _ref_cell(xh, params["w_cell"][i], c_t[i])
            inp = h_t[i]
        x_gen_nhwc = jnp.einsum("bhwc,co->bhwo", h_t[-1], params["w_last"],
                                precision=lax.Precision.HIGHEST)
        x_gen = jnp.transpose(x_gen_nhwc, (0, 3, 1, 2))
        next_frames.append(x_gen)
    nf = jnp.stack(next_frames, axis=1)
    return reshape_patch_back(nf, PATCH_SIZE)


# ----------------------------------------------------------------------------
if __name__ == "__main__":
    key = jax.random.PRNGKey(0)
    k_param, k_frames, k_mask = jax.random.split(key, 3)

    B = 2
    T, C, H, W = IN_SHAPE
    hh, ww = H // PATCH_SIZE, W // PATCH_SIZE

    params = init_params(k_param)
    frames = jax.random.normal(k_frames, (B, T, C, H, W), jnp.float32)
    # scheduled-sampling mask lives in patched space (as in the PyTorch code)
    mask_true = (jax.random.uniform(k_mask, (B, AFT_SEQ - 1, FRAME_CHANNEL, hh, ww))
                 < 0.5).astype(jnp.float32)

    out = jax.block_until_ready(convlstm_forward(frames, mask_true, params))
    ref = jax.block_until_ready(convlstm_forward_ref(frames, mask_true, params))

    assert out.shape == (B, T_STEPS, C, H, W), out.shape
    err = float(jnp.max(jnp.abs(out - ref)))
    assert err < 1e-3, err

    print("KERNEL_OK")
</pallas_src>

<mosaic_0001>
module attributes {stable_mosaic.version = 11 : i64} {
  func.func @_fused_convlstm_kernel(%arg0: i32, %arg1: memref<1x2x8x8x4xf32, #tpu.memory_space<vmem>>, %arg2: memref<1x2x8x8x4xf32, #tpu.memory_space<vmem>>, %arg3: memref<2x1152x128xf32, #tpu.memory_space<vmem>>, %arg4: memref<32x4xf32, #tpu.memory_space<vmem>>, %arg5: memref<1x128x4xf32, #tpu.memory_space<vmem>>, %arg6: memref<2x10x10x128xf32, #tpu.memory_space<vmem>>, %arg7: memref<2x10x10x128xf32, #tpu.memory_space<vmem>>, %arg8: memref<128x32xf32, #tpu.memory_space<vmem>>, %arg9: memref<128x32xf32, #tpu.memory_space<vmem>>, %arg10: memref<128x4xf32, #tpu.memory_space<vmem>>, %arg11: memref<128x1152xf32, #tpu.memory_space<vmem>>) attributes {dimension_semantics = [#tpu.dimension_semantics<arbitrary>], iteration_bounds = array<i64: 7>, scalar_prefetch = 0 : i64, scratch_operands = 6 : i64, tpu.core_type = #tpu.core_type<tc>, window_params = [{transform_indices = @transform_0, window_bounds = array<i64: 1, 2, 8, 8, 4>}, {transform_indices = @transform_1, window_bounds = array<i64: 1, 2, 8, 8, 4>}, {pipeline_mode = #tpu.pipeline_mode<synchronous>, transform_indices = @transform_2, window_bounds = array<i64: 2, 1152, 128>}, {pipeline_mode = #tpu.pipeline_mode<synchronous>, transform_indices = @transform_3, window_bounds = array<i64: 32, 4>}, {transform_indices = @transform_4, window_bounds = array<i64: 1, 128, 4>}]} {
    %c0_i32 = arith.constant 0 : i32
    %0 = arith.cmpi eq, %arg0, %c0_i32 : i32
    %1 = arith.extui %0 : i1 to i32
    %c0_i32_0 = arith.constant 0 : i32
    %2 = arith.cmpi ne, %1, %c0_i32_0 : i32
    scf.if %2 {
      %cst_100 = arith.constant 0.000000e+00 : f32
      %158 = vector.broadcast %cst_100 : f32 to vector<2x10x10x128xf32>
      %c0_101 = arith.constant 0 : index
      %c0_102 = arith.constant 0 : index
      %c0_103 = arith.constant 0 : index
      %c0_104 = arith.constant 0 : index
      %159 = vector.load %arg6[%c0_101, %c0_102, %c0_103, %c0_104] : memref<2x10x10x128xf32, #tpu.memory_space<vmem>>, vector<2x10x10x128xf32>
      tpu.vector_store %arg6[%c0_101, %c0_102, %c0_103, %c0_104], %158 {strides = array<i32>} : memref<2x10x10x128xf32, #tpu.memory_space<vmem>>, vector<2x10x10x128xf32>,
      %cst_105 = arith.constant 0.000000e+00 : f32
      %160 = vector.broadcast %cst_105 : f32 to vector<2x10x10x128xf32>
      %c0_106 = arith.constant 0 : index
      %c0_107 = arith.constant 0 : index
      %c0_108 = arith.constant 0 : index
      %c0_109 = arith.constant 0 : index
      %161 = vector.load %arg7[%c0_106, %c0_107, %c0_108, %c0_109] : memref<2x10x10x128xf32, #tpu.memory_space<vmem>>, vector<2x10x10x128xf32>
      tpu.vector_store %arg7[%c0_106, %c0_107, %c0_108, %c0_109], %160 {strides = array<i32>} : memref<2x10x10x128xf32, #tpu.memory_space<vmem>>, vector<2x10x10x128xf32>,
      %cst_110 = arith.constant 0.000000e+00 : f32
      %162 = vector.broadcast %cst_110 : f32 to vector<128x32xf32>
      %c0_111 = arith.constant 0 : index
      %c0_112 = arith.constant 0 : index
      %163 = vector.load %arg8[%c0_111, %c0_112] : memref<128x32xf32, #tpu.memory_space<vmem>>, vector<128x32xf32>
      tpu.vector_store %arg8[%c0_111, %c0_112], %162 {strides = array<i32>} : memref<128x32xf32, #tpu.memory_space<vmem>>, vector<128x32xf32>,
      %cst_113 = arith.constant 0.000000e+00 : f32
      %164 = vector.broadcast %cst_113 : f32 to vector<128x32xf32>
      %c0_114 = arith.constant 0 : index
      %c0_115 = arith.constant 0 : index
      %165 = vector.load %arg9[%c0_114, %c0_115] : memref<128x32xf32, #tpu.memory_space<vmem>>, vector<128x32xf32>
      tpu.vector_store %arg9[%c0_114, %c0_115], %164 {strides = array<i32>} : memref<128x32xf32, #tpu.memory_space<vmem>>, vector<128x32xf32>,
      %cst_116 = arith.constant 0.000000e+00 : f32
      %166 = vector.broadcast %cst_116 : f32 to vector<128x4xf32>
      %c0_117 = arith.constant 0 : index
      %c0_118 = arith.constant 0 : index
      %167 = vector.load %arg10[%c0_117, %c0_118] : memref<128x4xf32, #tpu.memory_space<vmem>>, vector<128x4xf32>
      tpu.vector_store %arg10[%c0_117, %c0_118], %166 {strides = array<i32>} : memref<128x4xf32, #tpu.memory_space<vmem>>, vector<128x4xf32>,
    } else {
    }
    %c0 = arith.constant 0 : index
    %c0_1 = arith.constant 0 : index
    %c0_2 = arith.constant 0 : index
    %c0_3 = arith.constant 0 : index
    %c0_4 = arith.constant 0 : index
    %3 = vector.load %arg1[%c0, %c0_1, %c0_2, %c0_3, %c0_4] : memref<1x2x8x8x4xf32, #tpu.memory_space<vmem>>, vector<1x2x8x8x4xf32>
    %4 = vector.shape_cast %3 : vector<1x2x8x8x4xf32> to vector<2x8x8x4xf32>
    %5 = vector.shape_cast %4 : vector<2x8x8x4xf32> to vector<128x4xf32>
    %c0_5 = arith.constant 0 : index
    %c0_6 = arith.constant 0 : index
    %c0_7 = arith.constant 0 : index
    %c0_8 = arith.constant 0 : index
    %c0_9 = arith.constant 0 : index
    %6 = vector.load %arg2[%c0_5, %c0_6, %c0_7, %c0_8, %c0_9] : memref<1x2x8x8x4xf32, #tpu.memory_space<vmem>>, vector<1x2x8x8x4xf32>
    %7 = vector.shape_cast %6 : vector<1x2x8x8x4xf32> to vector<2x8x8x4xf32>
    %8 = vector.shape_cast %7 : vector<2x8x8x4xf32> to vector<128x4xf32>
    %9 = arith.mulf %8, %5 : vector<128x4xf32>
    %cst = arith.constant 1.000000e+00 : f32
    %10 = vector.broadcast %cst : f32 to vector<128x4xf32>
    %11 = arith.subf %10, %8 : vector<128x4xf32>
    %c0_10 = arith.constant 0 : index
    %c0_11 = arith.constant 0 : index
    %12 = vector.load %arg10[%c0_10, %c0_11] : memref<128x4xf32, #tpu.memory_space<vmem>>, vector<128x4xf32>
    %13 = arith.mulf %11, %12 : vector<128x4xf32>
    %14 = arith.addf %9, %13 : vector<128x4xf32>
    %15 = vector.shape_cast %14 : vector<128x4xf32> to vector<2x8x8x4xf32>
    %c0_12 = arith.constant 0 : index
    %c1 = arith.constant 1 : index
    %c1_13 = arith.constant 1 : index
    %c0_14 = arith.constant 0 : index
    %16 = vector.load %arg6[%c0_12, %c1, %c1_13, %c0_14] : memref<2x10x10x128xf32, #tpu.memory_space<vmem>>, vector<2x8x8x4xf32>
    tpu.vector_store %arg6[%c0_12, %c1, %c1_13, %c0_14], %15 {strides = array<i32>} : memref<2x10x10x128xf32, #tpu.memory_space<vmem>>, vector<2x8x8x4xf32>,
    %c0_15 = arith.constant 0 : index
    %c0_16 = arith.constant 0 : index
    %c0_17 = arith.constant 0 : index
    %c0_18 = arith.constant 0 : index
    %17 = vector.load %arg6[%c0_15, %c0_16, %c0_17, %c0_18] : memref<2x10x10x128xf32, #tpu.memory_space<vmem>>, vector<2x10x10x128xf32>
    %18 = vector.extract_strided_slice %17 {offsets = [0, 0, 0, 0], sizes = [2, 8, 8, 128], strides = [1, 1, 1, 1]} : vector<2x10x10x128xf32> to vector<2x8x8x128xf32>
    %19 = vector.shape_cast %18 : vector<2x8x8x128xf32> to vector<128x128xf32>
    %c0_19 = arith.constant 0 : index
    %c0_20 = arith.constant 0 : index
    %20 = vector.load %arg11[%c0_19, %c0_20] : memref<128x1152xf32, #tpu.memory_space<vmem>>, vector<128x128xf32>
    tpu.vector_store %arg11[%c0_19, %c0_20], %19 {strides = array<i32>} : memref<128x1152xf32, #tpu.memory_space<vmem>>, vector<128x128xf32>,
    %21 = vector.extract_strided_slice %17 {offsets = [0, 0, 1, 0], sizes = [2, 8, 8, 128], strides = [1, 1, 1, 1]} : vector<2x10x10x128xf32> to vector<2x8x8x128xf32>
    %22 = vector.shape_cast %21 : vector<2x8x8x128xf32> to vector<128x128xf32>
    %c0_21 = arith.constant 0 : index
    %c128 = arith.constant 128 : index
    %23 = vector.load %arg11[%c0_21, %c128] : memref<128x1152xf32, #tpu.memory_space<vmem>>, vector<128x128xf32>
    tpu.vector_store %arg11[%c0_21, %c128], %22 {strides = array<i32>} : memref<128x1152xf32, #tpu.memory_space<vmem>>, vector<128x128xf32>,
    %24 = vector.extract_strided_slice %17 {offsets = [0, 0, 2, 0], sizes = [2, 8, 8, 128], strides = [1, 1, 1, 1]} : vector<2x10x10x128xf32> to vector<2x8x8x128xf32>
    %25 = vector.shape_cast %24 : vector<2x8x8x128xf32> to vector<128x128xf32>
    %c0_22 = arith.constant 0 : index
    %c256 = arith.constant 256 : index
    %26 = vector.load %arg11[%c0_22, %c256] : memref<128x1152xf32, #tpu.memory_space<vmem>>, vector<128x128xf32>
    tpu.vector_store %arg11[%c0_22, %c256], %25 {strides = array<i32>} : memref<128x1152xf32, #tpu.memory_space<vmem>>, vector<128x128xf32>,
    %27 = vector.extract_strided_slice %17 {offsets = [0, 1, 0, 0], sizes = [2, 8, 8, 128], strides = [1, 1, 1, 1]} : vector<2x10x10x128xf32> to vector<2x8x8x128xf32>
    %28 = vector.shape_cast %27 : vector<2x8x8x128xf32> to vector<128x128xf32>
    %c0_23 = arith.constant 0 : index
    %c384 = arith.constant 384 : index
    %29 = vector.load %arg11[%c0_23, %c384] : memref<128x1152xf32, #tpu.memory_space<vmem>>, vector<128x128xf32>
    tpu.vector_store %arg11[%c0_23, %c384], %28 {strides = array<i32>} : memref<128x1152xf32, #tpu.memory_space<vmem>>, vector<128x128xf32>,
    %30 = vector.extract_strided_slice %17 {offsets = [0, 1, 1, 0], sizes = [2, 8, 8, 128], strides = [1, 1, 1, 1]} : vector<2x10x10x128xf32> to vector<2x8x8x128xf32>
    %31 = vector.shape_cast %30 : vector<2x8x8x128xf32> to vector<128x128xf32>
    %c0_24 = arith.constant 0 : index
    %c512 = arith.constant 512 : index
    %32 = vector.load %arg11[%c0_24, %c512] : memref<128x1152xf32, #tpu.memory_space<vmem>>, vector<128x128xf32>
    tpu.vector_store %arg11[%c0_24, %c512], %31 {strides = array<i32>} : memref<128x1152xf32, #tpu.memory_space<vmem>>, vector<128x128xf32>,
    %33 = vector.extract_strided_slice %17 {offsets = [0, 1, 2, 0], sizes = [2, 8, 8, 128], strides = [1, 1, 1, 1]} : vector<2x10x10x128xf32> to vector<2x8x8x128xf32>
    %34 = vector.shape_cast %33 : vector<2x8x8x128xf32> to vector<128x128xf32>
    %c0_25 = arith.constant 0 : index
    %c640 = arith.constant 640 : index
    %35 = vector.load %arg11[%c0_25, %c640] : memref<128x1152xf32, #tpu.memory_space<vmem>>, vector<128x128xf32>
    tpu.vector_store %arg11[%c0_25, %c640], %34 {strides = array<i32>} : memref<128x1152xf32, #tpu.memory_space<vmem>>, vector<128x128xf32>,
    %36 = vector.extract_strided_slice %17 {offsets = [0, 2, 0, 0], sizes = [2, 8, 8, 128], strides = [1, 1, 1, 1]} : vector<2x10x10x128xf32> to vector<2x8x8x128xf32>
    %37 = vector.shape_cast %36 : vector<2x8x8x128xf32> to vector<128x128xf32>
    %c0_26 = arith.constant 0 : index
    %c768 = arith.constant 768 : index
    %38 = vector.load %arg11[%c0_26, %c768] : memref<128x1152xf32, #tpu.memory_space<vmem>>, vector<128x128xf32>
    tpu.vector_store %arg11[%c0_26, %c768], %37 {strides = array<i32>} : memref<128x1152xf32, #tpu.memory_space<vmem>>, vector<128x128xf32>,
    %39 = vector.extract_strided_slice %17 {offsets = [0, 2, 1, 0], sizes = [2, 8, 8, 128], strides = [1, 1, 1, 1]} : vector<2x10x10x128xf32> to vector<2x8x8x128xf32>
    %40 = vector.shape_cast %39 : vector<2x8x8x128xf32> to vector<128x128xf32>
    %c0_27 = arith.constant 0 : index
    %c896 = arith.constant 896 : index
    %41 = vector.load %arg11[%c0_27, %c896] : memref<128x1152xf32, #tpu.memory_space<vmem>>, vector<128x128xf32>
    tpu.vector_store %arg11[%c0_27, %c896], %40 {strides = array<i32>} : memref<128x1152xf32, #tpu.memory_space<vmem>>, vector<128x128xf32>,
    %42 = vector.extract_strided_slice %17 {offsets = [0, 2, 2, 0], sizes = [2, 8, 8, 128], strides = [1, 1, 1, 1]} : vector<2x10x10x128xf32> to vector<2x8x8x128xf32>
    %43 = vector.shape_cast %42 : vector<2x8x8x128xf32> to vector<128x128xf32>
    %c0_28 = arith.constant 0 : index
    %c1024 = arith.constant 1024 : index
    %44 = vector.load %arg11[%c0_28, %c1024] : memref<128x1152xf32, #tpu.memory_space<vmem>>, vector<128x128xf32>
    tpu.vector_store %arg11[%c0_28, %c1024], %43 {strides = array<i32>} : memref<128x1152xf32, #tpu.memory_space<vmem>>, vector<128x128xf32>,
    %c0_29 = arith.constant 0 : index
    %c0_30 = arith.constant 0 : index
    %45 = vector.load %arg11[%c0_29, %c0_30] : memref<128x1152xf32, #tpu.memory_space<vmem>>, vector<128x1152xf32>
    %c0_31 = arith.constant 0 : index
    %c0_32 = arith.constant 0 : index
    %c0_33 = arith.constant 0 : index
    %46 = vector.load %arg3[%c0_31, %c0_32, %c0_33] : memref<2x1152x128xf32, #tpu.memory_space<vmem>>, vector<1x1152x128xf32>
    %47 = vector.shape_cast %46 : vector<1x1152x128xf32> to vector<1152x128xf32>
    %cst_34 = arith.constant dense<0.000000e+00> : vector<128x128xf32>
    %48 = tpu.matmul %45, %47, %cst_34 {dimension_numbers = #tpu.dot_dimension_numbers<[1], [0], [0], [1], [0, 0, 1, 1], [], []>} : vector<128x1152xf32>, vector<1152x128xf32>, vector<128x128xf32> -> vector<128x128xf32>
    %49 = tpu.iota {dimensions = array<i32: 1>} : vector<128x128xi32>
    %c32_i32 = arith.constant 32 : i32
    %50 = vector.broadcast %c32_i32 : i32 to vector<128x128xi32>
    %51 = arith.cmpi sge, %49, %50 : vector<128x128xi32>
    %c64_i32 = arith.constant 64 : i32
    %52 = vector.broadcast %c64_i32 : i32 to vector<128x128xi32>
    %53 = arith.cmpi slt, %49, %52 : vector<128x128xi32>
    %54 = arith.andi %51, %53 : vector<128x128xi1>
    %c64_i32_35 = arith.constant 64 : i32
    %55 = vector.broadcast %c64_i32_35 : i32 to vector<128x128xi32>
    %56 = arith.cmpi sge, %49, %55 : vector<128x128xi32>
    %c96_i32 = arith.constant 96 : i32
    %57 = vector.broadcast %c96_i32 : i32 to vector<128x128xi32>
    %58 = arith.cmpi slt, %49, %57 : vector<128x128xi32>
    %59 = arith.andi %56, %58 : vector<128x128xi1>
    %cst_36 = arith.constant 1.000000e+00 : f32
    %cst_37 = arith.constant 0.000000e+00 : f32
    %60 = vector.broadcast %cst_36 : f32 to vector<128x128xf32>
    %61 = vector.broadcast %cst_37 : f32 to vector<128x128xf32>
    %62 = arith.select %54, %60, %61 : vector<128x128xi1>, vector<128x128xf32>
    %63 = arith.addf %48, %62 : vector<128x128xf32>
    %64 = arith.negf %63 : vector<128x128xf32>
    %65 = math.exp %64 : vector<128x128xf32>
    %cst_38 = arith.constant 1.000000e+00 : f32
    %66 = vector.broadcast %cst_38 : f32 to vector<128x128xf32>
    %67 = arith.addf %66, %65 : vector<128x128xf32>
    %68 = arith.divf %66, %67 : vector<128x128xf32>
    %69 = math.tanh %48 : vector<128x128xf32>
    %70 = arith.select %59, %69, %68 : vector<128x128xi1>, vector<128x128xf32>
    %71 = vector.extract_strided_slice %70 {offsets = [0, 0], sizes = [128, 32], strides = [1, 1]} : vector<128x128xf32> to vector<128x32xf32>
    %72 = vector.extract_strided_slice %70 {offsets = [0, 32], sizes = [128, 32], strides = [1, 1]} : vector<128x128xf32> to vector<128x32xf32>
    %73 = vector.extract_strided_slice %70 {offsets = [0, 64], sizes = [128, 32], strides = [1, 1]} : vector<128x128xf32> to vector<128x32xf32>
    %74 = vector.extract_strided_slice %70 {offsets = [0, 96], sizes = [128, 32], strides = [1, 1]} : vector<128x128xf32> to vector<128x32xf32>
    %c0_39 = arith.constant 0 : index
    %c0_40 = arith.constant 0 : index
    %75 = vector.load %arg8[%c0_39, %c0_40] : memref<128x32xf32, #tpu.memory_space<vmem>>, vector<128x32xf32>
    %76 = arith.mulf %72, %75 : vector<128x32xf32>
    %77 = arith.mulf %71, %73 : vector<128x32xf32>
    %78 = arith.addf %76, %77 : vector<128x32xf32>
    %79 = math.tanh %78 : vector<128x32xf32>
    %80 = arith.mulf %74, %79 : vector<128x32xf32>
    %c0_41 = arith.constant 0 : index
    %c0_42 = arith.constant 0 : index
    %81 = vector.load %arg8[%c0_41, %c0_42] : memref<128x32xf32, #tpu.memory_space<vmem>>, vector<128x32xf32>
    tpu.vector_store %arg8[%c0_41, %c0_42], %78 {strides = array<i32>} : memref<128x32xf32, #tpu.memory_space<vmem>>, vector<128x32xf32>,
    %82 = vector.shape_cast %80 : vector<128x32xf32> to vector<2x8x8x32xf32>
    %c0_43 = arith.constant 0 : index
    %c1_44 = arith.constant 1 : index
    %c1_45 = arith.constant 1 : index
    %c4 = arith.constant 4 : index
    %83 = vector.load %arg6[%c0_43, %c1_44, %c1_45, %c4] : memref<2x10x10x128xf32, #tpu.memory_space<vmem>>, vector<2x8x8x32xf32>
    tpu.vector_store %arg6[%c0_43, %c1_44, %c1_45, %c4], %82 {strides = array<i32>} : memref<2x10x10x128xf32, #tpu.memory_space<vmem>>, vector<2x8x8x32xf32>,
    %c0_46 = arith.constant 0 : index
    %c1_47 = arith.constant 1 : index
    %c1_48 = arith.constant 1 : index
    %c0_49 = arith.constant 0 : index
    %84 = vector.load %arg7[%c0_46, %c1_47, %c1_48, %c0_49] : memref<2x10x10x128xf32, #tpu.memory_space<vmem>>, vector<2x8x8x32xf32>
    tpu.vector_store %arg7[%c0_46, %c1_47, %c1_48, %c0_49], %82 {strides = array<i32>} : memref<2x10x10x128xf32, #tpu.memory_space<vmem>>, vector<2x8x8x32xf32>,
    %c0_50 = arith.constant 0 : index
    %c0_51 = arith.constant 0 : index
    %c0_52 = arith.constant 0 : index
    %c0_53 = arith.constant 0 : index
    %85 = vector.load %arg7[%c0_50, %c0_51, %c0_52, %c0_53] : memref<2x10x10x128xf32, #tpu.memory_space<vmem>>, vector<2x10x10x128xf32>
    %86 = vector.extract_strided_slice %85 {offsets = [0, 0, 0, 0], sizes = [2, 8, 8, 128], strides = [1, 1, 1, 1]} : vector<2x10x10x128xf32> to vector<2x8x8x128xf32>
    %87 = vector.shape_cast %86 : vector<2x8x8x128xf32> to vector<128x128xf32>
    %c0_54 = arith.constant 0 : index
    %c0_55 = arith.constant 0 : index
    %88 = vector.load %arg11[%c0_54, %c0_55] : memref<128x1152xf32, #tpu.memory_space<vmem>>, vector<128x128xf32>
    tpu.vector_store %arg11[%c0_54, %c0_55], %87 {strides = array<i32>} : memref<128x1152xf32, #tpu.memory_space<vmem>>, vector<128x128xf32>,
    %89 = vector.extract_strided_slice %85 {offsets = [0, 0, 1, 0], sizes = [2, 8, 8, 128], strides = [1, 1, 1, 1]} : vector<2x10x10x128xf32> to vector<2x8x8x128xf32>
    %90 = vector.shape_cast %89 : vector<2x8x8x128xf32> to vector<128x128xf32>
    %c0_56 = arith.constant 0 : index
    %c128_57 = arith.constant 128 : index
    %91 = vector.load %arg11[%c0_56, %c128_57] : memref<128x1152xf32, #tpu.memory_space<vmem>>, vector<128x128xf32>
    tpu.vector_store %arg11[%c0_56, %c128_57], %90 {strides = array<i32>} : memref<128x1152xf32, #tpu.memory_space<vmem>>, vector<128x128xf32>,
    %92 = vector.extract_strided_slice %85 {offsets = [0, 0, 2, 0], sizes = [2, 8, 8, 128], strides = [1, 1, 1, 1]} : vector<2x10x10x128xf32> to vector<2x8x8x128xf32>
    %93 = vector.shape_cast %92 : vector<2x8x8x128xf32> to vector<128x128xf32>
    %c0_58 = arith.constant 0 : index
    %c256_59 = arith.constant 256 : index
    %94 = vector.load %arg11[%c0_58, %c256_59] : memref<128x1152xf32, #tpu.memory_space<vmem>>, vector<128x128xf32>
    tpu.vector_store %arg11[%c0_58, %c256_59], %93 {strides = array<i32>} : memref<128x1152xf32, #tpu.memory_space<vmem>>, vector<128x128xf32>,
    %95 = vector.extract_strided_slice %85 {offsets = [0, 1, 0, 0], sizes = [2, 8, 8, 128], strides = [1, 1, 1, 1]} : vector<2x10x10x128xf32> to vector<2x8x8x128xf32>
    %96 = vector.shape_cast %95 : vector<2x8x8x128xf32> to vector<128x128xf32>
    %c0_60 = arith.constant 0 : index
    %c384_61 = arith.constant 384 : index
    %97 = vector.load %arg11[%c0_60, %c384_61] : memref<128x1152xf32, #tpu.memory_space<vmem>>, vector<128x128xf32>
    tpu.vector_store %arg11[%c0_60, %c384_61], %96 {strides = array<i32>} : memref<128x1152xf32, #tpu.memory_space<vmem>>, vector<128x128xf32>,
    %98 = vector.extract_strided_slice %85 {offsets = [0, 1, 1, 0], sizes = [2, 8, 8, 128], strides = [1, 1, 1, 1]} : vector<2x10x10x128xf32> to vector<2x8x8x128xf32>
    %99 = vector.shape_cast %98 : vector<2x8x8x128xf32> to vector<128x128xf32>
    %c0_62 = arith.constant 0 : index
    %c512_63 = arith.constant 512 : index
    %100 = vector.load %arg11[%c0_62, %c512_63] : memref<128x1152xf32, #tpu.memory_space<vmem>>, vector<128x128xf32>
    tpu.vector_store %arg11[%c0_62, %c512_63], %99 {strides = array<i32>} : memref<128x1152xf32, #tpu.memory_space<vmem>>, vector<128x128xf32>,
    %101 = vector.extract_strided_slice %85 {offsets = [0, 1, 2, 0], sizes = [2, 8, 8, 128], strides = [1, 1, 1, 1]} : vector<2x10x10x128xf32> to vector<2x8x8x128xf32>
    %102 = vector.shape_cast %101 : vector<2x8x8x128xf32> to vector<128x128xf32>
    %c0_64 = arith.constant 0 : index
    %c640_65 = arith.constant 640 : index
    %103 = vector.load %arg11[%c0_64, %c640_65] : memref<128x1152xf32, #tpu.memory_space<vmem>>, vector<128x128xf32>
    tpu.vector_store %arg11[%c0_64, %c640_65], %102 {strides = array<i32>} : memref<128x1152xf32, #tpu.memory_space<vmem>>, vector<128x128xf32>,
    %104 = vector.extract_strided_slice %85 {offsets = [0, 2, 0, 0], sizes = [2, 8, 8, 128], strides = [1, 1, 1, 1]} : vector<2x10x10x128xf32> to vector<2x8x8x128xf32>
    %105 = vector.shape_cast %104 : vector<2x8x8x128xf32> to vector<128x128xf32>
    %c0_66 = arith.constant 0 : index
    %c768_67 = arith.constant 768 : index
    %106 = vector.load %arg11[%c0_66, %c768_67] : memref<128x1152xf32, #tpu.memory_space<vmem>>, vector<128x128xf32>
    tpu.vector_store %arg11[%c0_66, %c768_67], %105 {strides = array<i32>} : memref<128x1152xf32, #tpu.memory_space<vmem>>, vector<128x128xf32>,
    %107 = vector.extract_strided_slice %85 {offsets = [0, 2, 1, 0], sizes = [2, 8, 8, 128], strides = [1, 1, 1, 1]} : vector<2x10x10x128xf32> to vector<2x8x8x128xf32>
    %108 = vector.shape_cast %107 : vector<2x8x8x128xf32> to vector<128x128xf32>
    %c0_68 = arith.constant 0 : index
    %c896_69 = arith.constant 896 : index
    %109 = vector.load %arg11[%c0_68, %c896_69] : memref<128x1152xf32, #tpu.memory_space<vmem>>, vector<128x128xf32>
    tpu.vector_store %arg11[%c0_68, %c896_69], %108 {strides = array<i32>} : memref<128x1152xf32, #tpu.memory_space<vmem>>, vector<128x128xf32>,
    %110 = vector.extract_strided_slice %85 {offsets = [0, 2, 2, 0], sizes = [2, 8, 8, 128], strides = [1, 1, 1, 1]} : vector<2x10x10x128xf32> to vector<2x8x8x128xf32>
    %111 = vector.shape_cast %110 : vector<2x8x8x128xf32> to vector<128x128xf32>
    %c0_70 = arith.constant 0 : index
    %c1024_71 = arith.constant 1024 : index
    %112 = vector.load %arg11[%c0_70, %c1024_71] : memref<128x1152xf32, #tpu.memory_space<vmem>>, vector<128x128xf32>
    tpu.vector_store %arg11[%c0_70, %c1024_71], %111 {strides = array<i32>} : memref<128x1152xf32, #tpu.memory_space<vmem>>, vector<128x128xf32>,
    %c0_72 = arith.constant 0 : index
    %c0_73 = arith.constant 0 : index
    %113 = vector.load %arg11[%c0_72, %c0_73] : memref<128x1152xf32, #tpu.memory_space<vmem>>, vector<128x1152xf32>
    %c1_74 = arith.constant 1 : index
    %c0_75 = arith.constant 0 : index
    %c0_76 = arith.constant 0 : index
    %114 = vector.load %arg3[%c1_74, %c0_75, %c0_76] : memref<2x1152x128xf32, #tpu.memory_space<vmem>>, vector<1x1152x128xf32>
    %115 = vector.shape_cast %114 : vector<1x1152x128xf32> to vector<1152x128xf32>
    %cst_77 = arith.constant dense<0.000000e+00> : vector<128x128xf32>
    %116 = tpu.matmul %113, %115, %cst_77 {dimension_numbers = #tpu.dot_dimension_numbers<[1], [0], [0], [1], [0, 0, 1, 1], [], []>} : vector<128x1152xf32>, vector<1152x128xf32>, vector<128x128xf32> -> vector<128x128xf32>
    %117 = tpu.iota {dimensions = array<i32: 1>} : vector<128x128xi32>
    %c32_i32_78 = arith.constant 32 : i32
    %118 = vector.broadcast %c32_i32_78 : i32 to vector<128x128xi32>
    %119 = arith.cmpi sge, %117, %118 : vector<128x128xi32>
    %c64_i32_79 = arith.constant 64 : i32
    %120 = vector.broadcast %c64_i32_79 : i32 to vector<128x128xi32>
    %121 = arith.cmpi slt, %117, %120 : vector<128x128xi32>
    %122 = arith.andi %119, %121 : vector<128x128xi1>
    %c64_i32_80 = arith.constant 64 : i32
    %123 = vector.broadcast %c64_i32_80 : i32 to vector<128x128xi32>
    %124 = arith.cmpi sge, %117, %123 : vector<128x128xi32>
    %c96_i32_81 = arith.constant 96 : i32
    %125 = vector.broadcast %c96_i32_81 : i32 to vector<128x128xi32>
    %126 = arith.cmpi slt, %117, %125 : vector<128x128xi32>
    %127 = arith.andi %124, %126 : vector<128x128xi1>
    %cst_82 = arith.constant 1.000000e+00 : f32
    %cst_83 = arith.constant 0.000000e+00 : f32
    %128 = vector.broadcast %cst_82 : f32 to vector<128x128xf32>
    %129 = vector.broadcast %cst_83 : f32 to vector<128x128xf32>
    %130 = arith.select %122, %128, %129 : vector<128x128xi1>, vector<128x128xf32>
    %131 = arith.addf %116, %130 : vector<128x128xf32>
    %132 = arith.negf %131 : vector<128x128xf32>
    %133 = math.exp %132 : vector<128x128xf32>
    %cst_84 = arith.constant 1.000000e+00 : f32
    %134 = vector.broadcast %cst_84 : f32 to vector<128x128xf32>
    %135 = arith.addf %134, %133 : vector<128x128xf32>
    %136 = arith.divf %134, %135 : vector<128x128xf32>
    %137 = math.tanh %116 : vector<128x128xf32>
    %138 = arith.select %127, %137, %136 : vector<128x128xi1>, vector<128x128xf32>
    %139 = vector.extract_strided_slice %138 {offsets = [0, 0], sizes = [128, 32], strides = [1, 1]} : vector<128x128xf32> to vector<128x32xf32>
    %140 = vector.extract_strided_slice %138 {offsets = [0, 32], sizes = [128, 32], strides = [1, 1]} : vector<128x128xf32> to vector<128x32xf32>
    %141 = vector.extract_strided_slice %138 {offsets = [0, 64], sizes = [128, 32], strides = [1, 1]} : vector<128x128xf32> to vector<128x32xf32>
    %142 = vector.extract_strided_slice %138 {offsets = [0, 96], sizes = [128, 32], strides = [1, 1]} : vector<128x128xf32> to vector<128x32xf32>
    %c0_85 = arith.constant 0 : index
    %c0_86 = arith.constant 0 : index
    %143 = vector.load %arg9[%c0_85, %c0_86] : memref<128x32xf32, #tpu.memory_space<vmem>>, vector<128x32xf32>
    %144 = arith.mulf %140, %143 : vector<128x32xf32>
    %145 = arith.mulf %139, %141 : vector<128x32xf32>
    %146 = arith.addf %144, %145 : vector<128x32xf32>
    %147 = math.tanh %146 : vector<128x32xf32>
    %148 = arith.mulf %142, %147 : vector<128x32xf32>
    %c0_87 = arith.constant 0 : index
    %c0_88 = arith.constant 0 : index
    %149 = vector.load %arg9[%c0_87, %c0_88] : memref<128x32xf32, #tpu.memory_space<vmem>>, vector<128x32xf32>
    tpu.vector_store %arg9[%c0_87, %c0_88], %146 {strides = array<i32>} : memref<128x32xf32, #tpu.memory_space<vmem>>, vector<128x32xf32>,
    %150 = vector.shape_cast %148 : vector<128x32xf32> to vector<2x8x8x32xf32>
    %c0_89 = arith.constant 0 : index
    %c1_90 = arith.constant 1 : index
    %c1_91 = arith.constant 1 : index
    %c32 = arith.constant 32 : index
    %151 = vector.load %arg7[%c0_89, %c1_90, %c1_91, %c32] : memref<2x10x10x128xf32, #tpu.memory_space<vmem>>, vector<2x8x8x32xf32>
    tpu.vector_store %arg7[%c0_89, %c1_90, %c1_91, %c32], %150 {strides = array<i32>} : memref<2x10x10x128xf32, #tpu.memory_space<vmem>>, vector<2x8x8x32xf32>,
    %c0_92 = arith.constant 0 : index
    %c0_93 = arith.constant 0 : index
    %152 = vector.load %arg4[%c0_92, %c0_93] : memref<32x4xf32, #tpu.memory_space<vmem>>, vector<32x4xf32>
    %cst_94 = arith.constant dense<0.000000e+00> : vector<128x4xf32>
    %153 = tpu.matmul %148, %152, %cst_94 {dimension_numbers = #tpu.dot_dimension_numbers<[1], [0], [0], [1], [0, 0, 1, 1], [], []>} : vector<128x32xf32>, vector<32x4xf32>, vector<128x4xf32> -> vector<128x4xf32>
    %c0_95 = arith.constant 0 : index
    %c0_96 = arith.constant 0 : index
    %154 = vector.load %arg10[%c0_95, %c0_96] : memref<128x4xf32, #tpu.memory_space<vmem>>, vector<128x4xf32>
    tpu.vector_store %arg10[%c0_95, %c0_96], %153 {strides = array<i32>} : memref<128x4xf32, #tpu.memory_space<vmem>>, vector<128x4xf32>,
    %c0_97 = arith.constant 0 : index
    %c0_98 = arith.constant 0 : index
    %c0_99 = arith.constant 0 : index
    %155 = vector.load %arg5[%c0_97, %c0_98, %c0_99] : memref<1x128x4xf32, #tpu.memory_space<vmem>>, vector<1x128x4xf32>
    %156 = vector.shape_cast %155 : vector<1x128x4xf32> to vector<128x4xf32>
    %157 = vector.shape_cast %153 : vector<128x4xf32> to vector<1x128x4xf32>
    tpu.vector_store %arg5[%c0_97, %c0_98, %c0_99], %157 {strides = array<i32>} : memref<1x128x4xf32, #tpu.memory_space<vmem>>, vector<1x128x4xf32>,
    return
  }
  func.func @transform_0(%arg0: i32) -> (i32, i32, i32, i32, i32) {
    %c0_i32 = arith.constant 0 : i32
    %c0_i32_0 = arith.constant 0 : i32
    %c0_i32_1 = arith.constant 0 : i32
    %c0_i32_2 = arith.constant 0 : i32
    %c0_i32_3 = arith.constant 0 : i32
    return %arg0, %c0_i32, %c0_i32_0, %c0_i32_1, %c0_i32_2 : i32, i32, i32, i32, i32
  }
  func.func @transform_1(%arg0: i32) -> (i32, i32, i32, i32, i32) {
    %c0_i32 = arith.constant 0 : i32
    %c0_i32_0 = arith.constant 0 : i32
    %c0_i32_1 = arith.constant 0 : i32
    %c0_i32_2 = arith.constant 0 : i32
    %c0_i32_3 = arith.constant 0 : i32
    return %arg0, %c0_i32, %c0_i32_0, %c0_i32_1, %c0_i32_2 : i32, i32, i32, i32, i32
  }
  func.func @transform_2(%arg0: i32) -> (i32, i32, i32) {
    %c0_i32 = arith.constant 0 : i32
    %c0_i32_0 = arith.constant 0 : i32
    %c0_i32_1 = arith.constant 0 : i32
    %c0_i32_2 = arith.constant 0 : i32
    return %c0_i32, %c0_i32_0, %c0_i32_1 : i32, i32, i32
  }
  func.func @transform_3(%arg0: i32) -> (i32, i32) {
    %c0_i32 = arith.constant 0 : i32
    %c0_i32_0 = arith.constant 0 : i32
    %c0_i32_1 = arith.constant 0 : i32
    return %c0_i32, %c0_i32_0 : i32, i32
  }
  func.func @transform_4(%arg0: i32) -> (i32, i32, i32) {
    %c0_i32 = arith.constant 0 : i32
    %c0_i32_0 = arith.constant 0 : i32
    %c0_i32_1 = arith.constant 0 : i32
    return %arg0, %c0_i32, %c0_i32_0 : i32, i32, i32
  }
}

</mosaic_0001>

<llo_original>
// kernel: convlstm_forward.1
$region0: #{convlstm_forward.1}
  #allocation0 [shape = 'u32[]', space=smem, size = 0x4, offset = 0x4, fixed_abs, tag = 'smem constant byte address 0x4 - core index']
  #allocation1 [shape = 'u32[144,128]{1,0:T(1,128)}', space=vmem, size = 0x12000, scoped, tag = 'internal scratch']
  #allocation2 [shape = 'f32[2,10,10,128]{3,2,1,0:T(8,128)}', space=vmem, size = 0x28000, scoped, tag = 'scratch operand']
  #allocation3 [shape = 'f32[2,10,10,128]{3,2,1,0:T(8,128)}', space=vmem, size = 0x28000, scoped, tag = 'scratch operand']
  #allocation4 [shape = 'f32[128,32]{1,0:T(8,128)}', space=vmem, size = 0x10000, scoped, tag = 'scratch operand']
  #allocation5 [shape = 'f32[128,32]{1,0:T(8,128)}', space=vmem, size = 0x10000, scoped, tag = 'scratch operand']
  #allocation6 [shape = 'f32[128,4]{1,0:T(8,128)}', space=vmem, size = 0x10000, scoped, tag = 'scratch operand']
  #allocation7 [shape = 'f32[128,1152]{1,0:T(8,128)}', space=vmem, size = 0x90000, scoped, tag = 'scratch operand']
  %s0 = inlined_call_operand.vmem [shape: f32[7,2,8,8,4], index: 0, kind: input, shape index: {}]
  %s1 = inlined_call_operand.vmem [shape: f32[7,2,8,8,4], index: 1, kind: input, shape index: {}]
  %s2 = inlined_call_operand.vmem [shape: f32[2,1152,128], index: 2, kind: input, shape index: {}]
  %s3 = inlined_call_operand.vmem [shape: f32[32,4], index: 3, kind: input, shape index: {}]
  %s4 = inlined_call_operand.vmem [shape: f32[7,128,4], index: 4, kind: output, shape index: {}]
  %s5 = sld [smem:[#allocation0]]
  $region53: #{convlstm_forward.1} parent=0
    _
  %s7 = ssub.s32 1, %s5
  %s8 = scalar_select 0, %s7, %s5
  loop: start=0, step=1, limit=9
  $region2: #{convlstm_forward.1} parent=0 // loop_pre_header
    _
  $region3: #{convlstm_forward.1} parent=0 // loop_header
    %s10 = sphi 0, %s14
    %p11 = scmp.ge.s32.totalorder %s10, 9
    %s20 = sphi 0, %s22
    %s23 = sphi 0, %s20
    %s24 = sphi 0, %s23
    %s40 = sphi 0, %s24
    %s46 = sphi 0, %s48
    %s49 = sphi 0, %s46
    %s50 = sphi 0, %s49
    %s66 = sphi 0, %s50
    %s70 = sphi 0, %s70
    %s72 = sphi 0, %s70
    %s73 = sphi 0, %s72
    %s87 = sphi 0, %s73
    %s91 = sphi 0, %s91
    %s93 = sphi 0, %s91
    %s94 = sphi 0, %s93
    %s108 = sphi 0, %s94
    %s114 = sphi 0, %s116
    %s117 = sphi 0, %s114
    %s118 = sphi 0, %s117
    %s134 = sphi 0, %s118
  $region4: #{convlstm_forward.1} parent=0 // loop_header_branch
    %13 = sbr.rel (%p11) target = $region8
  $region5: #{convlstm_forward.1} parent=0 // loop_body
    %s15 = ssub.s32 %s10, 1
    %s16 = ssub.s32 %s10, 2
    %s17 = sadd.s32 %s10, 1
    %s18 = ssub.s32 %s10, %s17
    %p19 = scmp.eq.s32.totalorder %s18, 0
    %s21 = sadd.s32 %s20, 1
    %s22 = scalar_select %p19, %s20, %s21
    %p25 = pneg %p19
    %p26 = scmp.eq.s32.totalorder %s10, 6
    %p27 = por %p25, %p26
    %p28 = scmp.ne.s32.totalorder %s20, %s23
    %p29 = scmp.eq.s32.totalorder %s10, 0
    %p30 = por %p28, %p29
    %p31 = scmp.ne.s32.totalorder %s20, %s23
    %p32 = scmp.eq.s32.totalorder %s15, 6
    %p33 = por %p31, %p32
    %p34 = scmp.ne.s32.totalorder %s23, %s24
    %p35 = scmp.eq.s32.totalorder %s15, 0
    %p36 = por %p34, %p35
    %p37 = scmp.ne.s32.totalorder %s23, %s24
    %p38 = scmp.eq.s32.totalorder %s16, 6
    %p39 = por %p37, %p38
    %p41 = scmp.ne.s32.totalorder %s24, %s40
    %p42 = scmp.eq.s32.totalorder %s16, 0
    %p43 = por %p41, %p42
    %s44 = ssub.s32 %s10, %s17
    %p45 = scmp.eq.s32.totalorder %s44, 0
    %s47 = sadd.s32 %s46, 1
    %s48 = scalar_select %p45, %s46, %s47
    %p51 = pneg %p45
    %p52 = scmp.eq.s32.totalorder %s10, 6
    %p53 = por %p51, %p52
    %p54 = scmp.ne.s32.totalorder %s46, %s49
    %p55 = scmp.eq.s32.totalorder %s10, 0
    %p56 = por %p54, %p55
    %p57 = scmp.ne.s32.totalorder %s46, %s49
    %p58 = scmp.eq.s32.totalorder %s15, 6
    %p59 = por %p57, %p58
    %p60 = scmp.ne.s32.totalorder %s49, %s50
    %p61 = scmp.eq.s32.totalorder %s15, 0
    %p62 = por %p60, %p61
    %p63 = scmp.ne.s32.totalorder %s49, %s50
    %p64 = scmp.eq.s32.totalorder %s16, 6
    %p65 = por %p63, %p64
    %p67 = scmp.ne.s32.totalorder %s50, %s66
    %p68 = scmp.eq.s32.totalorder %s16, 0
    %p69 = por %p67, %p68
    %s71 = sadd.s32 %s70, 1
    %p74 = scmp.eq.s32.totalorder %s10, 6
    %p75 = scmp.ne.s32.totalorder %s70, %s72
    %p76 = scmp.eq.s32.totalorder %s10, 0
    %p77 = por %p75, %p76
    %p78 = scmp.ne.s32.totalorder %s70, %s72
    %p79 = scmp.eq.s32.totalorder %s15, 6
    %p80 = por %p78, %p79
    %p81 = scmp.ne.s32.totalorder %s72, %s73
    %p82 = scmp.eq.s32.totalorder %s15, 0
    %p83 = por %p81, %p82
    %p84 = scmp.ne.s32.totalorder %s72, %s73
    %p85 = scmp.eq.s32.totalorder %s16, 6
    %p86 = por %p84, %p85
    %p88 = scmp.ne.s32.totalorder %s73, %s87
    %p89 = scmp.eq.s32.totalorder %s16, 0
    %p90 = por %p88, %p89
    %s92 = sadd.s32 %s91, 1
    %p95 = scmp.eq.s32.totalorder %s10, 6
    %p96 = scmp.ne.s32.totalorder %s91, %s93
    %p97 = scmp.eq.s32.totalorder %s10, 0
    %p98 = por %p96, %p97
    %p99 = scmp.ne.s32.totalorder %s91, %s93
    %p100 = scmp.eq.s32.totalorder %s15, 6
    %p101 = por %p99, %p100
    %p102 = scmp.ne.s32.totalorder %s93, %s94
    %p103 = scmp.eq.s32.totalorder %s15, 0
    %p104 = por %p102, %p103
    %p105 = scmp.ne.s32.totalorder %s93, %s94
    %p106 = scmp.eq.s32.totalorder %s16, 6
    %p107 = por %p105, %p106
    %p109 = scmp.ne.s32.totalorder %s94, %s108
    %p110 = scmp.eq.s32.totalorder %s16, 0
    %p111 = por %p109, %p110
    %s112 = ssub.s32 %s10, %s17
    %p113 = scmp.eq.s32.totalorder %s112, 0
    %s115 = sadd.s32 %s114, 1
    %s116 = scalar_select %p113, %s114, %s115
    %p119 = pneg %p113
    %p120 = scmp.eq.s32.totalorder %s10, 6
    %p121 = por %p119, %p120
    %p122 = scmp.ne.s32.totalorder %s114, %s117
    %p123 = scmp.eq.s32.totalorder %s10, 0
    %p124 = por %p122, %p123
    %p125 = scmp.ne.s32.totalorder %s114, %s117
    %p126 = scmp.eq.s32.totalorder %s15, 6
    %p127 = por %p125, %p126
    %p128 = scmp.ne.s32.totalorder %s117, %s118
    %p129 = scmp.eq.s32.totalorder %s15, 0
    %p130 = por %p128, %p129
    %p131 = scmp.ne.s32.totalorder %s117, %s118
    %p132 = scmp.eq.s32.totalorder %s16, 6
    %p133 = por %p131, %p132
    %p135 = scmp.ne.s32.totalorder %s118, %s134
    %p136 = scmp.eq.s32.totalorder %s16, 0
    %p137 = por %p135, %p136
    %p138 = scmp.le.s32.totalorder 1, %s10
    %p139 = scmp.lt.s32.totalorder %s10, 8
    %p140 = pnand %p138, %p139
    %p141 = pneg %p140
    // Predicated region
    $region9: #{convlstm_forward.1} parent=5 // pred_check
      _
    $region10: #{convlstm_forward.1} parent=5 // pred_check_branch
      %143 = sbr.rel (%p140) target = $region12
    $region11: #{convlstm_forward.1} parent=5 // pred_region
      %s144 = ssub.s32 %s10, 1
      // Predicated region
      $region13: #{convlstm_forward.1} parent=11 // pred_check
        %p145 = pneg %p83
      $region14: #{convlstm_forward.1} parent=11 // pred_check_branch
        %147 = sbr.rel (%p145) target = $region16
      $region15: #{convlstm_forward.1} parent=11 // pred_region
        _
      $region16: #{convlstm_forward.1} parent=11 // pred_fallthru
        _
      // Predicated region
      $region17: #{convlstm_forward.1} parent=11 // pred_check
        %p148 = pneg %p104
      $region18: #{convlstm_forward.1} parent=11 // pred_check_branch
        %150 = sbr.rel (%p148) target = $region20
      $region19: #{convlstm_forward.1} parent=11 // pred_region
        _
      $region20: #{convlstm_forward.1} parent=11 // pred_fallthru
        _
    $region12: #{convlstm_forward.1} parent=5 // pred_fallthru
      _
    %p151 = scmp.lt.s32.totalorder %s10, 7
    // Predicated region
    $region21: #{convlstm_forward.1} parent=5 // pred_check
      %p152 = pneg %p151
    $region22: #{convlstm_forward.1} parent=5 // pred_check_branch
      %154 = sbr.rel (%p152) target = $region24
    $region23: #{convlstm_forward.1} parent=5 // pred_region
      // Predicated region
      $region25: #{convlstm_forward.1} parent=23 // pred_check
        %p155 = pneg %p30
      $region26: #{convlstm_forward.1} parent=23 // pred_check_branch
        %157 = sbr.rel (%p155) target = $region28
      $region27: #{convlstm_forward.1} parent=23 // pred_region
        %p158 = scmp.lt.s32.totalorder %s10, 6
        %s159 = scalar_select %p158, %s10, 6
        %s160 = smul.addr %s159, 16
        %s161 = smul.addr %s160, 8
        %s162 = scalar_lea.vmem %s0, %s161
      $region28: #{convlstm_forward.1} parent=23 // pred_fallthru
        _
      // Predicated region
      $region29: #{convlstm_forward.1} parent=23 // pred_check
        %p163 = pneg %p56
      $region30: #{convlstm_forward.1} parent=23 // pred_check_branch
        %165 = sbr.rel (%p163) target = $region32
      $region31: #{convlstm_forward.1} parent=23 // pred_region
        %p166 = scmp.lt.s32.totalorder %s10, 6
        %s167 = scalar_select %p166, %s10, 6
        %s168 = smul.addr %s167, 16
        %s169 = smul.addr %s168, 8
        %s170 = scalar_lea.vmem %s1, %s169
      $region32: #{convlstm_forward.1} parent=23 // pred_fallthru
        _
    $region24: #{convlstm_forward.1} parent=5 // pred_fallthru
      _
    %p171 = scmp.le.s32.totalorder 1, %s10
    %p172 = scmp.lt.s32.totalorder %s10, 8
    %p173 = pnand %p171, %p172
    %p174 = pneg %p173
    // Predicated region
    $region33: #{convlstm_forward.1} parent=5 // pred_check
      _
    $region34: #{convlstm_forward.1} parent=5 // pred_check_branch
      %176 = sbr.rel (%p173) target = $region36
    $region35: #{convlstm_forward.1} parent=5 // pred_region
      %s177 = ssub.s32 %s10, 1
      %p178 = scmp.lt.s32.totalorder %s15, 6
      %s179 = scalar_select %p178, %s15, 6
      %s180 = smul.addr %s179, 16
      %s181 = smul.addr %s180, 8
      %s182 = scalar_lea.vmem %s0, %s181
      %p183 = pneg %p36
      %p184 = pneg %p33
      %p185 = scmp.lt.s32.totalorder %s15, 6
      %s186 = scalar_select %p185, %s15, 6
      %s187 = smul.addr %s186, 16
      %s188 = smul.addr %s187, 8
      %s189 = scalar_lea.vmem %s1, %s188
      %p190 = pneg %p62
      %p191 = pneg %p59
      %p192 = pneg %p83
      %p193 = pneg %p80
      %p194 = pneg %p104
      %p195 = pneg %p101
      %p196 = pneg %p130
      %p197 = pneg %p127
      %p198 = scmp.lt.s32.totalorder %s15, 6
      %s199 = scalar_select %p198, %s15, 6
      %s200 = smul.addr %s199, 16
      %s201 = smul.addr %s200, 8
      %s202 = scalar_lea.vmem %s4, %s201
      %p203 = scmp.lt.s32.totalorder %s15, 6
      %s204 = scalar_select %p203, %s15, 6
      %s205 = smul.addr %s204, 16
      %s206 = smul.addr %s205, 8
      %s207 = scalar_lea.vmem %s0, %s206
      %p208 = scmp.lt.s32.totalorder %s15, 6
      %s209 = scalar_select %p208, %s15, 6
      %s210 = smul.addr %s209, 16
      %s211 = smul.addr %s210, 8
      %s212 = scalar_lea.vmem %s1, %s211
      %p213 = scmp.lt.s32.totalorder %s15, 6
      %s214 = scalar_select %p213, %s15, 6
      %s215 = smul.addr %s214, 16
      %s216 = smul.addr %s215, 8
      %s217 = scalar_lea.vmem %s4, %s216
      %p218 = scmp.eq.s32.totalorder %s15, 0
      // Predicated region
      $region37: #{convlstm_forward.1} parent=35 // pred_check
        %p219 = pneg %p218
      $region38: #{convlstm_forward.1} parent=35 // pred_check_branch
        %221 = sbr.rel (%p219) target = $region40
      $region39: #{convlstm_forward.1} parent=35 // pred_region
        %222 = vst [vmem:[#allocation2] sm:$0xff] 0.0
        %223 = vst [vmem:[#allocation2 + $0x8] sm:$0x3] 0.0
        %224 = vst [vmem:[#allocation2 + $0x10] sm:$0xff] 0.0
        %225 = vst [vmem:[#allocation2 + $0x18] sm:$0x3] 0.0
        %226 = vst [vmem:[#allocation2 + $0x20] sm:$0xff] 0.0
        %227 = vst [vmem:[#allocation2 + $0x28] sm:$0x3] 0.0
        %228 = vst [vmem:[#allocation2 + $0x30] sm:$0xff] 0.0
        %229 = vst [vmem:[#allocation2 + $0x38] sm:$0x3] 0.0
        %230 = vst [vmem:[#allocation2 + $0x40] sm:$0xff] 0.0
        %231 = vst [vmem:[#allocation2 + $0x48] sm:$0x3] 0.0
        %232 = vst [vmem:[#allocation2 + $0x50] sm:$0xff] 0.0
        %233 = vst [vmem:[#allocation2 + $0x58] sm:$0x3] 0.0
        %234 = vst [vmem:[#allocation2 + $0x60] sm:$0xff] 0.0
        %235 = vst [vmem:[#allocation2 + $0x68] sm:$0x3] 0.0
        %236 = vst [vmem:[#allocation2 + $0x70] sm:$0xff] 0.0
        %237 = vst [vmem:[#allocation2 + $0x78] sm:$0x3] 0.0
        %238 = vst [vmem:[#allocation2 + $0x80] sm:$0xff] 0.0
        %239 = vst [vmem:[#allocation2 + $0x88] sm:$0x3] 0.0
        %240 = vst [vmem:[#allocation2 + $0x90] sm:$0xff] 0.0
        %241 = vst [vmem:[#allocation2 + $0x98] sm:$0x3] 0.0
        %242 = vst [vmem:[#allocation2 + $0xa0] sm:$0xff] 0.0
        %243 = vst [vmem:[#allocation2 + $0xa8] sm:$0x3] 0.0
        %244 = vst [vmem:[#allocation2 + $0xb0] sm:$0xff] 0.0
        %245 = vst [vmem:[#allocation2 + $0xb8] sm:$0x3] 0.0
        %246 = vst [vmem:[#allocation2 + $0xc0] sm:$0xff] 0.0
        %247 = vst [vmem:[#allocation2 + $0xc8] sm:$0x3] 0.0
        %248 = vst [vmem:[#allocation2 + $0xd0] sm:$0xff] 0.0
        %249 = vst [vmem:[#allocation2 + $0xd8] sm:$0x3] 0.0
        %250 = vst [vmem:[#allocation2 + $0xe0] sm:$0xff] 0.0
        %251 = vst [vmem:[#allocation2 + $0xe8] sm:$0x3] 0.0
        %252 = vst [vmem:[#allocation2 + $0xf0] sm:$0xff] 0.0
        %253 = vst [vmem:[#allocation2 + $0xf8] sm:$0x3] 0.0
        %254 = vst [vmem:[#allocation2 + $0x100] sm:$0xff] 0.0
        %255 = vst [vmem:[#allocation2 + $0x108] sm:$0x3] 0.0
        %256 = vst [vmem:[#allocation2 + $0x110] sm:$0xff] 0.0
        %257 = vst [vmem:[#allocation2 + $0x118] sm:$0x3] 0.0
        %258 = vst [vmem:[#allocation2 + $0x120] sm:$0xff] 0.0
        %259 = vst [vmem:[#allocation2 + $0x128] sm:$0x3] 0.0
        %260 = vst [vmem:[#allocation2 + $0x130] sm:$0xff] 0.0
        %261 = vst [vmem:[#allocation2 + $0x138] sm:$0x3] 0.0
        %262 = vst [vmem:[#allocation3] sm:$0xff] 0.0
        %263 = vst [vmem:[#allocation3 + $0x8] sm:$0x3] 0.0
        %264 = vst [vmem:[#allocation3 + $0x10] sm:$0xff] 0.0
        %265 = vst [vmem:[#allocation3 + $0x18] sm:$0x3] 0.0
        %266 = vst [vmem:[#allocation3 + $0x20] sm:$0xff] 0.0
        %267 = vst [vmem:[#allocation3 + $0x28] sm:$0x3] 0.0
        %268 = vst [vmem:[#allocation3 + $0x30] sm:$0xff] 0.0
        %269 = vst [vmem:[#allocation3 + $0x38] sm:$0x3] 0.0
        %270 = vst [vmem:[#allocation3 + $0x40] sm:$0xff] 0.0
        %271 = vst [vmem:[#allocation3 + $0x48] sm:$0x3] 0.0
        %272 = vst [vmem:[#allocation3 + $0x50] sm:$0xff] 0.0
        %273 = vst [vmem:[#allocation3 + $0x58] sm:$0x3] 0.0
        %274 = vst [vmem:[#allocation3 + $0x60] sm:$0xff] 0.0
        %275 = vst [vmem:[#allocation3 + $0x68] sm:$0x3] 0.0
        %276 = vst [vmem:[#allocation3 + $0x70] sm:$0xff] 0.0
        %277 = vst [vmem:[#allocation3 + $0x78] sm:$0x3] 0.0
        %278 = vst [vmem:[#allocation3 + $0x80] sm:$0xff] 0.0
        %279 = vst [vmem:[#allocation3 + $0x88] sm:$0x3] 0.0
        %280 = vst [vmem:[#allocation3 + $0x90] sm:$0xff] 0.0
        %281 = vst [vmem:[#allocation3 + $0x98] sm:$0x3] 0.0
        %282 = vst [vmem:[#allocation3 + $0xa0] sm:$0xff] 0.0
        %283 = vst [vmem:[#allocation3 + $0xa8] sm:$0x3] 0.0
        %284 = vst [vmem:[#allocation3 + $0xb0] sm:$0xff] 0.0
        %285 = vst [vmem:[#allocation3 + $0xb8] sm:$0x3] 0.0
        %286 = vst [vmem:[#allocation3 + $0xc0] sm:$0xff] 0.0
        %287 = vst [vmem:[#allocation3 + $0xc8] sm:$0x3] 0.0
        %288 = vst [vmem:[#allocation3 + $0xd0] sm:$0xff] 0.0
        %289 = vst [vmem:[#allocation3 + $0xd8] sm:$0x3] 0.0
        %290 = vst [vmem:[#allocation3 + $0xe0] sm:$0xff] 0.0
        %291 = vst [vmem:[#allocation3 + $0xe8] sm:$0x3] 0.0
        %292 = vst [vmem:[#allocation3 + $0xf0] sm:$0xff] 0.0
        %293 = vst [vmem:[#allocation3 + $0xf8] sm:$0x3] 0.0
        %294 = vst [vmem:[#allocation3 + $0x100] sm:$0xff] 0.0
        %295 = vst [vmem:[#allocation3 + $0x108] sm:$0x3] 0.0
        %296 = vst [vmem:[#allocation3 + $0x110] sm:$0xff] 0.0
        %297 = vst [vmem:[#allocation3 + $0x118] sm:$0x3] 0.0
        %298 = vst [vmem:[#allocation3 + $0x120] sm:$0xff] 0.0
        %299 = vst [vmem:[#allocation3 + $0x128] sm:$0x3] 0.0
        %300 = vst [vmem:[#allocation3 + $0x130] sm:$0xff] 0.0
        %301 = vst [vmem:[#allocation3 + $0x138] sm:$0x3] 0.0
        %vm302 = vcmask 261120
        %303 = vst.msk [vmem:[#allocation4] sm:$0xff] %vm302, 0.0
        %304 = vst.msk [vmem:[#allocation4 + $0x8] sm:$0xff] %vm302, 0.0
        %305 = vst.msk [vmem:[#allocation4 + $0x10] sm:$0xff] %vm302, 0.0
        %306 = vst.msk [vmem:[#allocation4 + $0x18] sm:$0xff] %vm302, 0.0
        %307 = vst.msk [vmem:[#allocation4 + $0x20] sm:$0xff] %vm302, 0.0
        %308 = vst.msk [vmem:[#allocation4 + $0x28] sm:$0xff] %vm302, 0.0
        %309 = vst.msk [vmem:[#allocation4 + $0x30] sm:$0xff] %vm302, 0.0
        %310 = vst.msk [vmem:[#allocation4 + $0x38] sm:$0xff] %vm302, 0.0
        %311 = vst.msk [vmem:[#allocation4 + $0x40] sm:$0xff] %vm302, 0.0
        %312 = vst.msk [vmem:[#allocation4 + $0x48] sm:$0xff] %vm302, 0.0
        %313 = vst.msk [vmem:[#allocation4 + $0x50] sm:$0xff] %vm302, 0.0
        %314 = vst.msk [vmem:[#allocation4 + $0x58] sm:$0xff] %vm302, 0.0
        %315 = vst.msk [vmem:[#allocation4 + $0x60] sm:$0xff] %vm302, 0.0
        %316 = vst.msk [vmem:[#allocation4 + $0x68] sm:$0xff] %vm302, 0.0
        %317 = vst.msk [vmem:[#allocation4 + $0x70] sm:$0xff] %vm302, 0.0
        %318 = vst.msk [vmem:[#allocation4 + $0x78] sm:$0xff] %vm302, 0.0
        %319 = vst.msk [vmem:[#allocation5] sm:$0xff] %vm302, 0.0
        %320 = vst.msk [vmem:[#allocation5 + $0x8] sm:$0xff] %vm302, 0.0
        %321 = vst.msk [vmem:[#allocation5 + $0x10] sm:$0xff] %vm302, 0.0
        %322 = vst.msk [vmem:[#allocation5 + $0x18] sm:$0xff] %vm302, 0.0
        %323 = vst.msk [vmem:[#allocation5 + $0x20] sm:$0xff] %vm302, 0.0
        %324 = vst.msk [vmem:[#allocation5 + $0x28] sm:$0xff] %vm302, 0.0
        %325 = vst.msk [vmem:[#allocation5 + $0x30] sm:$0xff] %vm302, 0.0
        %326 = vst.msk [vmem:[#allocation5 + $0x38] sm:$0xff] %vm302, 0.0
        %327 = vst.msk [vmem:[#allocation5 + $0x40] sm:$0xff] %vm302, 0.0
        %328 = vst.msk [vmem:[#allocation5 + $0x48] sm:$0xff] %vm302, 0.0
        %329 = vst.msk [vmem:[#allocation5 + $0x50] sm:$0xff] %vm302, 0.0
        %330 = vst.msk [vmem:[#allocation5 + $0x58] sm:$0xff] %vm302, 0.0
        %331 = vst.msk [vmem:[#allocation5 + $0x60] sm:$0xff] %vm302, 0.0
        %332 = vst.msk [vmem:[#allocation5 + $0x68] sm:$0xff] %vm302, 0.0
        %333 = vst.msk [vmem:[#allocation5 + $0x70] sm:$0xff] %vm302, 0.0
        %334 = vst.msk [vmem:[#allocation5 + $0x78] sm:$0xff] %vm302, 0.0
        %vm335 = vcmask 31744
        %336 = vst.msk [vmem:[#allocation6] sm:$0xff] %vm335, 0.0
        %337 = vst.msk [vmem:[#allocation6 + $0x8] sm:$0xff] %vm335, 0.0
        %338 = vst.msk [vmem:[#allocation6 + $0x10] sm:$0xff] %vm335, 0.0
        %339 = vst.msk [vmem:[#allocation6 + $0x18] sm:$0xff] %vm335, 0.0
        %340 = vst.msk [vmem:[#allocation6 + $0x20] sm:$0xff] %vm335, 0.0
        %341 = vst.msk [vmem:[#allocation6 + $0x28] sm:$0xff] %vm335, 0.0
        %342 = vst.msk [vmem:[#allocation6 + $0x30] sm:$0xff] %vm335, 0.0
        %343 = vst.msk [vmem:[#allocation6 + $0x38] sm:$0xff] %vm335, 0.0
        %344 = vst.msk [vmem:[#allocation6 + $0x40] sm:$0xff] %vm335, 0.0
        %345 = vst.msk [vmem:[#allocation6 + $0x48] sm:$0xff] %vm335, 0.0
        %346 = vst.msk [vmem:[#allocation6 + $0x50] sm:$0xff] %vm335, 0.0
        %347 = vst.msk [vmem:[#allocation6 + $0x58] sm:$0xff] %vm335, 0.0
        %348 = vst.msk [vmem:[#allocation6 + $0x60] sm:$0xff] %vm335, 0.0
        %349 = vst.msk [vmem:[#allocation6 + $0x68] sm:$0xff] %vm335, 0.0
        %350 = vst.msk [vmem:[#allocation6 + $0x70] sm:$0xff] %vm335, 0.0
        %351 = vst.msk [vmem:[#allocation6 + $0x78] sm:$0xff] %vm335, 0.0
      $region40: #{convlstm_forward.1} parent=35 // pred_fallthru
        _
      %v352 = vld [vmem:[%s207] sm:$0xff]
      %v353 = vld [vmem:[%s207 + $0x8] sm:$0xff]
      %v354 = vld [vmem:[%s207 + $0x10] sm:$0xff]
      %v355 = vld [vmem:[%s207 + $0x18] sm:$0xff]
      %v356 = vld [vmem:[%s207 + $0x20] sm:$0xff]
      %v357 = vld [vmem:[%s207 + $0x28] sm:$0xff]
      %v358 = vld [vmem:[%s207 + $0x30] sm:$0xff]
      %v359 = vld [vmem:[%s207 + $0x38] sm:$0xff]
      %v360 = vld [vmem:[%s207 + $0x40] sm:$0xff]
      %v361 = vld [vmem:[%s207 + $0x48] sm:$0xff]
      %v362 = vld [vmem:[%s207 + $0x50] sm:$0xff]
      %v363 = vld [vmem:[%s207 + $0x58] sm:$0xff]
      %v364 = vld [vmem:[%s207 + $0x60] sm:$0xff]
      %v365 = vld [vmem:[%s207 + $0x68] sm:$0xff]
      %v366 = vld [vmem:[%s207 + $0x70] sm:$0xff]
      %v367 = vld [vmem:[%s207 + $0x78] sm:$0xff]
      %v368 = vld [vmem:[%s212] sm:$0xff]
      %v369 = vld [vmem:[%s212 + $0x8] sm:$0xff]
      %v370 = vld [vmem:[%s212 + $0x10] sm:$0xff]
      %v371 = vld [vmem:[%s212 + $0x18] sm:$0xff]
      %v372 = vld [vmem:[%s212 + $0x20] sm:$0xff]
      %v373 = vld [vmem:[%s212 + $0x28] sm:$0xff]
      %v374 = vld [vmem:[%s212 + $0x30] sm:$0xff]
      %v375 = vld [vmem:[%s212 + $0x38] sm:$0xff]
      %v376 = vld [vmem:[%s212 + $0x40] sm:$0xff]
      %v377 = vld [vmem:[%s212 + $0x48] sm:$0xff]
      %v378 = vld [vmem:[%s212 + $0x50] sm:$0xff]
      %v379 = vld [vmem:[%s212 + $0x58] sm:$0xff]
      %v380 = vld [vmem:[%s212 + $0x60] sm:$0xff]
      %v381 = vld [vmem:[%s212 + $0x68] sm:$0xff]
      %v382 = vld [vmem:[%s212 + $0x70] sm:$0xff]
      %v383 = vld [vmem:[%s212 + $0x78] sm:$0xff]
      %v384 = vmul.f32 %v368, %v352
      %v385 = vmul.f32 %v369, %v353
      %v386 = vmul.f32 %v370, %v354
      %v387 = vmul.f32 %v371, %v355
      %v388 = vmul.f32 %v372, %v356
      %v389 = vmul.f32 %v373, %v357
      %v390 = vmul.f32 %v374, %v358
      %v391 = vmul.f32 %v375, %v359
      %v392 = vmul.f32 %v376, %v360
      %v393 = vmul.f32 %v377, %v361
      %v394 = vmul.f32 %v378, %v362
      %v395 = vmul.f32 %v379, %v363
      %v396 = vmul.f32 %v380, %v364
      %v397 = vmul.f32 %v381, %v365
      %v398 = vmul.f32 %v382, %v366
      %v399 = vmul.f32 %v383, %v367
      %v400 = vsub.f32 1.0, %v368
      %v401 = vsub.f32 1.0, %v369
      %v402 = vsub.f32 1.0, %v370
      %v403 = vsub.f32 1.0, %v371
      %v404 = vsub.f32 1.0, %v372
      %v405 = vsub.f32 1.0, %v373
      %v406 = vsub.f32 1.0, %v374
      %v407 = vsub.f32 1.0, %v375
      %v408 = vsub.f32 1.0, %v376
      %v409 = vsub.f32 1.0, %v377
      %v410 = vsub.f32 1.0, %v378
      %v411 = vsub.f32 1.0, %v379
      %v412 = vsub.f32 1.0, %v380
      %v413 = vsub.f32 1.0, %v381
      %v414 = vsub.f32 1.0, %v382
      %v415 = vsub.f32 1.0, %v383
      %v416 = vld [vmem:[#allocation6] sm:$0xff]
      %v417 = vld [vmem:[#allocation6 + $0x8] sm:$0xff]
      %v418 = vld [vmem:[#allocation6 + $0x10] sm:$0xff]
      %v419 = vld [vmem:[#allocation6 + $0x18] sm:$0xff]
      %v420 = vld [vmem:[#allocation6 + $0x20] sm:$0xff]
      %v421 = vld [vmem:[#allocation6 + $0x28] sm:$0xff]
      %v422 = vld [vmem:[#allocation6 + $0x30] sm:$0xff]
      %v423 = vld [vmem:[#allocation6 + $0x38] sm:$0xff]
      %v424 = vld [vmem:[#allocation6 + $0x40] sm:$0xff]
      %v425 = vld [vmem:[#allocation6 + $0x48] sm:$0xff]
      %v426 = vld [vmem:[#allocation6 + $0x50] sm:$0xff]
      %v427 = vld [vmem:[#allocation6 + $0x58] sm:$0xff]
      %v428 = vld [vmem:[#allocation6 + $0x60] sm:$0xff]
      %v429 = vld [vmem:[#allocation6 + $0x68] sm:$0xff]
      %v430 = vld [vmem:[#allocation6 + $0x70] sm:$0xff]
      %v431 = vld [vmem:[#allocation6 + $0x78] sm:$0xff]
      %v432 = vmul.f32 %v400, %v416
      %v433 = vmul.f32 %v401, %v417
      %v434 = vmul.f32 %v402, %v418
      %v435 = vmul.f32 %v403, %v419
      %v436 = vmul.f32 %v404, %v420
      %v437 = vmul.f32 %v405, %v421
      %v438 = vmul.f32 %v406, %v422
      %v439 = vmul.f32 %v407, %v423
      %v440 = vmul.f32 %v408, %v424
      %v441 = vmul.f32 %v409, %v425
      %v442 = vmul.f32 %v410, %v426
      %v443 = vmul.f32 %v411, %v427
      %v444 = vmul.f32 %v412, %v428
      %v445 = vmul.f32 %v413, %v429
      %v446 = vmul.f32 %v414, %v430
      %v447 = vmul.f32 %v415, %v431
      %v448 = vadd.f32 %v384, %v432
      %v449 = vadd.f32 %v385, %v433
      %v450 = vadd.f32 %v386, %v434
      %v451 = vadd.f32 %v387, %v435
      %v452 = vadd.f32 %v388, %v436
      %v453 = vadd.f32 %v389, %v437
      %v454 = vadd.f32 %v390, %v438
      %v455 = vadd.f32 %v391, %v439
      %v456 = vadd.f32 %v392, %v440
      %v457 = vadd.f32 %v393, %v441
      %v458 = vadd.f32 %v394, %v442
      %v459 = vadd.f32 %v395, %v443
      %v460 = vadd.f32 %v396, %v444
      %v461 = vadd.f32 %v397, %v445
      %v462 = vadd.f32 %v398, %v446
      %v463 = vadd.f32 %v399, %v447
      %s464 = scalar_lea.vmem [#allocation2], 16
      %vm465 = vcmask 31744
      %466 = vst.msk [vmem:[%s464 + $0x1] sm:$0xff] %vm465, %v448
      %467 = vst.msk [vmem:[%s464 + $0x11] sm:$0xff] %vm465, %v449
      %468 = vst.msk [vmem:[%s464 + $0x21] sm:$0xff] %vm465, %v450
      %469 = vst.msk [vmem:[%s464 + $0x31] sm:$0xff] %vm465, %v451
      %470 = vst.msk [vmem:[%s464 + $0x41] sm:$0xff] %vm465, %v452
      %471 = vst.msk [vmem:[%s464 + $0x51] sm:$0xff] %vm465, %v453
      %472 = vst.msk [vmem:[%s464 + $0x61] sm:$0xff] %vm465, %v454
      %473 = vst.msk [vmem:[%s464 + $0x71] sm:$0xff] %vm465, %v455
      %474 = vst.msk [vmem:[%s464 + $0xa1] sm:$0xff] %vm465, %v456
      %475 = vst.msk [vmem:[%s464 + $0xb1] sm:$0xff] %vm465, %v457
      %476 = vst.msk [vmem:[%s464 + $0xc1] sm:$0xff] %vm465, %v458
      %477 = vst.msk [vmem:[%s464 + $0xd1] sm:$0xff] %vm465, %v459
      %478 = vst.msk [vmem:[%s464 + $0xe1] sm:$0xff] %vm465, %v460
      %479 = vst.msk [vmem:[%s464 + $0xf1] sm:$0xff] %vm465, %v461
      %480 = vst.msk [vmem:[%s464 + $0x101] sm:$0xff] %vm465, %v462
      %481 = vst.msk [vmem:[%s464 + $0x111] sm:$0xff] %vm465, %v463
      %v482 = vld [vmem:[#allocation2] sm:$0xff]
      %v483 = vld [vmem:[#allocation2 + $0x8] sm:$0x3]
      %v484 = vld [vmem:[#allocation2 + $0x10] sm:$0xff]
      %v485 = vld [vmem:[#allocation2 + $0x18] sm:$0x3]
      %v486 = vld [vmem:[#allocation2 + $0x20] sm:$0xff]
      %v487 = vld [vmem:[#allocation2 + $0x28] sm:$0x3]
      %v488 = vld [vmem:[#allocation2 + $0x30] sm:$0xff]
      %v489 = vld [vmem:[#allocation2 + $0x38] sm:$0x3]
      %v490 = vld [vmem:[#allocation2 + $0x40] sm:$0xff]
      %v491 = vld [vmem:[#allocation2 + $0x48] sm:$0x3]
      %v492 = vld [vmem:[#allocation2 + $0x50] sm:$0xff]
      %v493 = vld [vmem:[#allocation2 + $0x58] sm:$0x3]
      %v494 = vld [vmem:[#allocation2 + $0x60] sm:$0xff]
      %v495 = vld [vmem:[#allocation2 + $0x68] sm:$0x3]
      %v496 = vld [vmem:[#allocation2 + $0x70] sm:$0xff]
      %v497 = vld [vmem:[#allocation2 + $0x78] sm:$0x3]
      %v498 = vld [vmem:[#allocation2 + $0x80] sm:$0xff]
      %v499 = vld [vmem:[#allocation2 + $0x88] sm:$0x3]
      %v500 = vld [vmem:[#allocation2 + $0x90] sm:$0xff]
      %v501 = vld [vmem:[#allocation2 + $0x98] sm:$0x3]
      %v502 = vld [vmem:[#allocation2 + $0xa0] sm:$0xff]
      %v503 = vld [vmem:[#allocation2 + $0xa8] sm:$0x3]
      %v504 = vld [vmem:[#allocation2 + $0xb0] sm:$0xff]
      %v505 = vld [vmem:[#allocation2 + $0xb8] sm:$0x3]
      %v506 = vld [vmem:[#allocation2 + $0xc0] sm:$0xff]
      %v507 = vld [vmem:[#allocation2 + $0xc8] sm:$0x3]
      %v508 = vld [vmem:[#allocation2 + $0xd0] sm:$0xff]
      %v509 = vld [vmem:[#allocation2 + $0xd8] sm:$0x3]
      %v510 = vld [vmem:[#allocation2 + $0xe0] sm:$0xff]
      %v511 = vld [vmem:[#allocation2 + $0xe8] sm:$0x3]
      %v512 = vld [vmem:[#allocation2 + $0xf0] sm:$0xff]
      %v513 = vld [vmem:[#allocation2 + $0xf8] sm:$0x3]
      %v514 = vld [vmem:[#allocation2 + $0x100] sm:$0xff]
      %v515 = vld [vmem:[#allocation2 + $0x108] sm:$0x3]
      %v516 = vld [vmem:[#allocation2 + $0x110] sm:$0xff]
      %v517 = vld [vmem:[#allocation2 + $0x118] sm:$0x3]
      %v518 = vld [vmem:[#allocation2 + $0x120] sm:$0xff]
      %v519 = vld [vmem:[#allocation2 + $0x128] sm:$0x3]
      %v520 = vld [vmem:[#allocation2 + $0x130] sm:$0xff]
      %v521 = vld [vmem:[#allocation2 + $0x138] sm:$0x3]
      %522 = vst [vmem:[#allocation7] sm:$0xff] %v482
      %523 = vst [vmem:[#allocation7 + $0x48] sm:$0xff] %v484
      %524 = vst [vmem:[#allocation7 + $0x90] sm:$0xff] %v486
      %525 = vst [vmem:[#allocation7 + $0xd8] sm:$0xff] %v488
      %526 = vst [vmem:[#allocation7 + $0x120] sm:$0xff] %v490
      %527 = vst [vmem:[#allocation7 + $0x168] sm:$0xff] %v492
      %528 = vst [vmem:[#allocation7 + $0x1b0] sm:$0xff] %v494
      %529 = vst [vmem:[#allocation7 + $0x1f8] sm:$0xff] %v496
      %530 = vst [vmem:[#allocation7 + $0x240] sm:$0xff] %v502
      %531 = vst [vmem:[#allocation7 + $0x288] sm:$0xff] %v504
      %532 = vst [vmem:[#allocation7 + $0x2d0] sm:$0xff] %v506
      %533 = vst [vmem:[#allocation7 + $0x318] sm:$0xff] %v508
      %534 = vst [vmem:[#allocation7 + $0x360] sm:$0xff] %v510
      %535 = vst [vmem:[#allocation7 + $0x3a8] sm:$0xff] %v512
      %536 = vst [vmem:[#allocation7 + $0x3f0] sm:$0xff] %v514
      %537 = vst [vmem:[#allocation7 + $0x438] sm:$0xff] %v516
      %vm570 = vcmask 1046528
      %v571 = vrot.slane %v482, 1
      %v572 = vrot.slane %v483, 1
      %v573 = vsel %vm570, %v571, %v572
      %v574 = vrot.slane %v484, 1
      %v575 = vrot.slane %v485, 1
      %v576 = vsel %vm570, %v574, %v575
      %v577 = vrot.slane %v486, 1
      %v578 = vrot.slane %v487, 1
      %v579 = vsel %vm570, %v577, %v578
      %v580 = vrot.slane %v488, 1
      %v581 = vrot.slane %v489, 1
      %v582 = vsel %vm570, %v580, %v581
      %v583 = vrot.slane %v490, 1
      %v584 = vrot.slane %v491, 1
      %v585 = vsel %vm570, %v583, %v584
      %v586 = vrot.slane %v492, 1
      %v587 = vrot.slane %v493, 1
      %v588 = vsel %vm570, %v586, %v587
      %v589 = vrot.slane %v494, 1
      %v590 = vrot.slane %v495, 1
      %v591 = vsel %vm570, %v589, %v590
      %v592 = vrot.slane %v496, 1
      %v593 = vrot.slane %v497, 1
      %v594 = vsel %vm570, %v592, %v593
      %v595 = vrot.slane %v502, 1
      %v596 = vrot.slane %v503, 1
      %v597 = vsel %vm570, %v595, %v596
      %v598 = vrot.slane %v504, 1
      %v599 = vrot.slane %v505, 1
      %v600 = vsel %vm570, %v598, %v599
      %v601 = vrot.slane %v506, 1
      %v602 = vrot.slane %v507, 1
      %v603 = vsel %vm570, %v601, %v602
      %v604 = vrot.slane %v508, 1
      %v605 = vrot.slane %v509, 1
      %v606 = vsel %vm570, %v604, %v605
      %v607 = vrot.slane %v510, 1
      %v608 = vrot.slane %v511, 1
      %v609 = vsel %vm570, %v607, %v608
      %v610 = vrot.slane %v512, 1
      %v611 = vrot.slane %v513, 1
      %v612 = vsel %vm570, %v610, %v611
      %v613 = vrot.slane %v514, 1
      %v614 = vrot.slane %v515, 1
      %v615 = vsel %vm570, %v613, %v614
      %v616 = vrot.slane %v516, 1
      %v617 = vrot.slane %v517, 1
      %v618 = vsel %vm570, %v616, %v617
      %635 = vst [vmem:[#allocation7 + $0x8] sm:$0xff] %v573
      %636 = vst [vmem:[#allocation7 + $0x50] sm:$0xff] %v576
      %637 = vst [vmem:[#allocation7 + $0x98] sm:$0xff] %v579
      %638 = vst [vmem:[#allocation7 + $0xe0] sm:$0xff] %v582
      %639 = vst [vmem:[#allocation7 + $0x128] sm:$0xff] %v585
      %640 = vst [vmem:[#allocation7 + $0x170] sm:$0xff] %v588
      %641 = vst [vmem:[#allocation7 + $0x1b8] sm:$0xff] %v591
      %642 = vst [vmem:[#allocation7 + $0x200] sm:$0xff] %v594
      %643 = vst [vmem:[#allocation7 + $0x248] sm:$0xff] %v597
      %644 = vst [vmem:[#allocation7 + $0x290] sm:$0xff] %v600
      %645 = vst [vmem:[#allocation7 + $0x2d8] sm:$0xff] %v603
      %646 = vst [vmem:[#allocation7 + $0x320] sm:$0xff] %v606
      %647 = vst [vmem:[#allocation7 + $0x368] sm:$0xff] %v609
      %648 = vst [vmem:[#allocation7 + $0x3b0] sm:$0xff] %v612
      %649 = vst [vmem:[#allocation7 + $0x3f8] sm:$0xff] %v615
      %650 = vst [vmem:[#allocation7 + $0x440] sm:$0xff] %v618
      %vm651 = vcmask 1045504
      %v652 = vrot.slane %v482, 2
      %v653 = vrot.slane %v483, 2
      %v654 = vsel %vm651, %v652, %v653
      %v655 = vrot.slane %v484, 2
      %v656 = vrot.slane %v485, 2
      %v657 = vsel %vm651, %v655, %v656
      %v658 = vrot.slane %v486, 2
      %v659 = vrot.slane %v487, 2
      %v660 = vsel %vm651, %v658, %v659
      %v661 = vrot.slane %v488, 2
      %v662 = vrot.slane %v489, 2
      %v663 = vsel %vm651, %v661, %v662
      %v664 = vrot.slane %v490, 2
      %v665 = vrot.slane %v491, 2
      %v666 = vsel %vm651, %v664, %v665
      %v667 = vrot.slane %v492, 2
      %v668 = vrot.slane %v493, 2
      %v669 = vsel %vm651, %v667, %v668
      %v670 = vrot.slane %v494, 2
      %v671 = vrot.slane %v495, 2
      %v672 = vsel %vm651, %v670, %v671
      %v673 = vrot.slane %v496, 2
      %v674 = vrot.slane %v497, 2
      %v675 = vsel %vm651, %v673, %v674
      %v676 = vrot.slane %v502, 2
      %v677 = vrot.slane %v503, 2
      %v678 = vsel %vm651, %v676, %v677
      %v679 = vrot.slane %v504, 2
      %v680 = vrot.slane %v505, 2
      %v681 = vsel %vm651, %v679, %v680
      %v682 = vrot.slane %v506, 2
      %v683 = vrot.slane %v507, 2
      %v684 = vsel %vm651, %v682, %v683
      %v685 = vrot.slane %v508, 2
      %v686 = vrot.slane %v509, 2
      %v687 = vsel %vm651, %v685, %v686
      %v688 = vrot.slane %v510, 2
      %v689 = vrot.slane %v511, 2
      %v690 = vsel %vm651, %v688, %v689
      %v691 = vrot.slane %v512, 2
      %v692 = vrot.slane %v513, 2
      %v693 = vsel %vm651, %v691, %v692
      %v694 = vrot.slane %v514, 2
      %v695 = vrot.slane %v515, 2
      %v696 = vsel %vm651, %v694, %v695
      %v697 = vrot.slane %v516, 2
      %v698 = vrot.slane %v517, 2
      %v699 = vsel %vm651, %v697, %v698
      %716 = vst [vmem:[#allocation7 + $0x10] sm:$0xff] %v654
      %717 = vst [vmem:[#allocation7 + $0x58] sm:$0xff] %v657
      %718 = vst [vmem:[#allocation7 + $0xa0] sm:$0xff] %v660
      %719 = vst [vmem:[#allocation7 + $0xe8] sm:$0xff] %v663
      %720 = vst [vmem:[#allocation7 + $0x130] sm:$0xff] %v666
      %721 = vst [vmem:[#allocation7 + $0x178] sm:$0xff] %v669
      %722 = vst [vmem:[#allocation7 + $0x1c0] sm:$0xff] %v672
      %723 = vst [vmem:[#allocation7 + $0x208] sm:$0xff] %v675
      %724 = vst [vmem:[#allocation7 + $0x250] sm:$0xff] %v678
      %725 = vst [vmem:[#allocation7 + $0x298] sm:$0xff] %v681
      %726 = vst [vmem:[#allocation7 + $0x2e0] sm:$0xff] %v684
      %727 = vst [vmem:[#allocation7 + $0x328] sm:$0xff] %v687
      %728 = vst [vmem:[#allocation7 + $0x370] sm:$0xff] %v690
      %729 = vst [vmem:[#allocation7 + $0x3b8] sm:$0xff] %v693
      %730 = vst [vmem:[#allocation7 + $0x400] sm:$0xff] %v696
      %731 = vst [vmem:[#allocation7 + $0x448] sm:$0xff] %v699
      %732 = vst [vmem:[#allocation7 + $0x18] sm:$0xff] %v484
      %733 = vst [vmem:[#allocation7 + $0x60] sm:$0xff] %v486
      %734 = vst [vmem:[#allocation7 + $0xa8] sm:$0xff] %v488
      %735 = vst [vmem:[#allocation7 + $0xf0] sm:$0xff] %v490
      %736 = vst [vmem:[#allocation7 + $0x138] sm:$0xff] %v492
      %737 = vst [vmem:[#allocation7 + $0x180] sm:$0xff] %v494
      %738 = vst [vmem:[#allocation7 + $0x1c8] sm:$0xff] %v496
      %739 = vst [vmem:[#allocation7 + $0x210] sm:$0xff] %v498
      %740 = vst [vmem:[#allocation7 + $0x258] sm:$0xff] %v504
      %741 = vst [vmem:[#allocation7 + $0x2a0] sm:$0xff] %v506
      %742 = vst [vmem:[#allocation7 + $0x2e8] sm:$0xff] %v508
      %743 = vst [vmem:[#allocation7 + $0x330] sm:$0xff] %v510
      %744 = vst [vmem:[#allocation7 + $0x378] sm:$0xff] %v512
      %745 = vst [vmem:[#allocation7 + $0x3c0] sm:$0xff] %v514
      %746 = vst [vmem:[#allocation7 + $0x408] sm:$0xff] %v516
      %747 = vst [vmem:[#allocation7 + $0x450] sm:$0xff] %v518
      %v752 = vrot.slane %v498, 1
      %v753 = vrot.slane %v499, 1
      %v754 = vsel %vm570, %v752, %v753
      %v755 = vrot.slane %v518, 1
      %v756 = vrot.slane %v519, 1
      %v757 = vsel %vm570, %v755, %v756
      %760 = vst [vmem:[#allocation7 + $0x20] sm:$0xff] %v576
      %761 = vst [vmem:[#allocation7 + $0x68] sm:$0xff] %v579
      %762 = vst [vmem:[#allocation7 + $0xb0] sm:$0xff] %v582
      %763 = vst [vmem:[#allocation7 + $0xf8] sm:$0xff] %v585
      %764 = vst [vmem:[#allocation7 + $0x140] sm:$0xff] %v588
      %765 = vst [vmem:[#allocation7 + $0x188] sm:$0xff] %v591
      %766 = vst [vmem:[#allocation7 + $0x1d0] sm:$0xff] %v594
      %767 = vst [vmem:[#allocation7 + $0x218] sm:$0xff] %v754
      %768 = vst [vmem:[#allocation7 + $0x260] sm:$0xff] %v600
      %769 = vst [vmem:[#allocation7 + $0x2a8] sm:$0xff] %v603
      %770 = vst [vmem:[#allocation7 + $0x2f0] sm:$0xff] %v606
      %771 = vst [vmem:[#allocation7 + $0x338] sm:$0xff] %v609
      %772 = vst [vmem:[#allocation7 + $0x380] sm:$0xff] %v612
      %773 = vst [vmem:[#allocation7 + $0x3c8] sm:$0xff] %v615
      %774 = vst [vmem:[#allocation7 + $0x410] sm:$0xff] %v618
      %775 = vst [vmem:[#allocation7 + $0x458] sm:$0xff] %v757
      %v776 = vrot.slane %v498, 2
      %v777 = vrot.slane %v499, 2
      %v778 = vsel %vm651, %v776, %v777
      %v779 = vrot.slane %v518, 2
      %v780 = vrot.slane %v519, 2
      %v781 = vsel %vm651, %v779, %v780
      %784 = vst [vmem:[#allocation7 + $0x28] sm:$0xff] %v657
      %785 = vst [vmem:[#allocation7 + $0x70] sm:$0xff] %v660
      %786 = vst [vmem:[#allocation7 + $0xb8] sm:$0xff] %v663
      %787 = vst [vmem:[#allocation7 + $0x100] sm:$0xff] %v666
      %788 = vst [vmem:[#allocation7 + $0x148] sm:$0xff] %v669
      %789 = vst [vmem:[#allocation7 + $0x190] sm:$0xff] %v672
      %790 = vst [vmem:[#allocation7 + $0x1d8] sm:$0xff] %v675
      %791 = vst [vmem:[#allocation7 + $0x220] sm:$0xff] %v778
      %792 = vst [vmem:[#allocation7 + $0x268] sm:$0xff] %v681
      %793 = vst [vmem:[#allocation7 + $0x2b0] sm:$0xff] %v684
      %794 = vst [vmem:[#allocation7 + $0x2f8] sm:$0xff] %v687
      %795 = vst [vmem:[#allocation7 + $0x340] sm:$0xff] %v690
      %796 = vst [vmem:[#allocation7 + $0x388] sm:$0xff] %v693
      %797 = vst [vmem:[#allocation7 + $0x3d0] sm:$0xff] %v696
      %798 = vst [vmem:[#allocation7 + $0x418] sm:$0xff] %v699
      %799 = vst [vmem:[#allocation7 + $0x460] sm:$0xff] %v781
      %800 = vst [vmem:[#allocation7 + $0x30] sm:$0xff] %v486
      %801 = vst [vmem:[#allocation7 + $0x78] sm:$0xff] %v488
      %802 = vst [vmem:[#allocation7 + $0xc0] sm:$0xff] %v490
      %803 = vst [vmem:[#allocation7 + $0x108] sm:$0xff] %v492
      %804 = vst [vmem:[#allocation7 + $0x150] sm:$0xff] %v494
      %805 = vst [vmem:[#allocation7 + $0x198] sm:$0xff] %v496
      %806 = vst [vmem:[#allocation7 + $0x1e0] sm:$0xff] %v498
      %807 = vst [vmem:[#allocation7 + $0x228] sm:$0xff] %v500
      %808 = vst [vmem:[#allocation7 + $0x270] sm:$0xff] %v506
      %809 = vst [vmem:[#allocation7 + $0x2b8] sm:$0xff] %v508
      %810 = vst [vmem:[#allocation7 + $0x300] sm:$0xff] %v510
      %811 = vst [vmem:[#allocation7 + $0x348] sm:$0xff] %v512
      %812 = vst [vmem:[#allocation7 + $0x390] sm:$0xff] %v514
      %813 = vst [vmem:[#allocation7 + $0x3d8] sm:$0xff] %v516
      %814 = vst [vmem:[#allocation7 + $0x420] sm:$0xff] %v518
      %815 = vst [vmem:[#allocation7 + $0x468] sm:$0xff] %v520
      %v820 = vrot.slane %v500, 1
      %v821 = vrot.slane %v501, 1
      %v822 = vsel %vm570, %v820, %v821
      %v823 = vrot.slane %v520, 1
      %v824 = vrot.slane %v521, 1
      %v825 = vsel %vm570, %v823, %v824
      %828 = vst [vmem:[#allocation7 + $0x38] sm:$0xff] %v579
      %829 = vst [vmem:[#allocation7 + $0x80] sm:$0xff] %v582
      %830 = vst [vmem:[#allocation7 + $0xc8] sm:$0xff] %v585
      %831 = vst [vmem:[#allocation7 + $0x110] sm:$0xff] %v588
      %832 = vst [vmem:[#allocation7 + $0x158] sm:$0xff] %v591
      %833 = vst [vmem:[#allocation7 + $0x1a0] sm:$0xff] %v594
      %834 = vst [vmem:[#allocation7 + $0x1e8] sm:$0xff] %v754
      %835 = vst [vmem:[#allocation7 + $0x230] sm:$0xff] %v822
      %836 = vst [vmem:[#allocation7 + $0x278] sm:$0xff] %v603
      %837 = vst [vmem:[#allocation7 + $0x2c0] sm:$0xff] %v606
      %838 = vst [vmem:[#allocation7 + $0x308] sm:$0xff] %v609
      %839 = vst [vmem:[#allocation7 + $0x350] sm:$0xff] %v612
      %840 = vst [vmem:[#allocation7 + $0x398] sm:$0xff] %v615
      %841 = vst [vmem:[#allocation7 + $0x3e0] sm:$0xff] %v618
      %842 = vst [vmem:[#allocation7 + $0x428] sm:$0xff] %v757
      %843 = vst [vmem:[#allocation7 + $0x470] sm:$0xff] %v825
      %v844 = vrot.slane %v500, 2
      %v845 = vrot.slane %v501, 2
      %v846 = vsel %vm651, %v844, %v845
      %v847 = vrot.slane %v520, 2
      %v848 = vrot.slane %v521, 2
      %v849 = vsel %vm651, %v847, %v848
      %852 = vst [vmem:[#allocation7 + $0x40] sm:$0xff] %v660
      %853 = vst [vmem:[#allocation7 + $0x88] sm:$0xff] %v663
      %854 = vst [vmem:[#allocation7 + $0xd0] sm:$0xff] %v666
      %855 = vst [vmem:[#allocation7 + $0x118] sm:$0xff] %v669
      %856 = vst [vmem:[#allocation7 + $0x160] sm:$0xff] %v672
      %857 = vst [vmem:[#allocation7 + $0x1a8] sm:$0xff] %v675
      %858 = vst [vmem:[#allocation7 + $0x1f0] sm:$0xff] %v778
      %859 = vst [vmem:[#allocation7 + $0x238] sm:$0xff] %v846
      %860 = vst [vmem:[#allocation7 + $0x280] sm:$0xff] %v684
      %861 = vst [vmem:[#allocation7 + $0x2c8] sm:$0xff] %v687
      %862 = vst [vmem:[#allocation7 + $0x310] sm:$0xff] %v690
      %863 = vst [vmem:[#allocation7 + $0x358] sm:$0xff] %v693
      %864 = vst [vmem:[#allocation7 + $0x3a0] sm:$0xff] %v696
      %865 = vst [vmem:[#allocation7 + $0x3e8] sm:$0xff] %v699
      %866 = vst [vmem:[#allocation7 + $0x430] sm:$0xff] %v781
      %867 = vst [vmem:[#allocation7 + $0x478] sm:$0xff] %v849
      %v868 = vld [vmem:[#allocation7] sm:$0xff]
      %v869 = vld [vmem:[#allocation7 + $0x8] sm:$0xff]
      %v870 = vld [vmem:[#allocation7 + $0x10] sm:$0xff]
      %v871 = vld [vmem:[#allocation7 + $0x18] sm:$0xff]
      %v872 = vld [vmem:[#allocation7 + $0x20] sm:$0xff]
      %v873 = vld [vmem:[#allocation7 + $0x28] sm:$0xff]
      %v874 = vld [vmem:[#allocation7 + $0x30] sm:$0xff]
      %v875 = vld [vmem:[#allocation7 + $0x38] sm:$0xff]
      %v876 = vld [vmem:[#allocation7 + $0x40] sm:$0xff]
      %v877 = vld [vmem:[#allocation7 + $0x48] sm:$0xff]
      %v878 = vld [vmem:[#allocation7 + $0x50] sm:$0xff]
      %v879 = vld [vmem:[#allocation7 + $0x58] sm:$0xff]
      %v880 = vld [vmem:[#allocation7 + $0x60] sm:$0xff]
      %v881 = vld [vmem:[#allocation7 + $0x68] sm:$0xff]
      %v882 = vld [vmem:[#allocation7 + $0x70] sm:$0xff]
      %v883 = vld [vmem:[#allocation7 + $0x78] sm:$0xff]
      %v884 = vld [vmem:[#allocation7 + $0x80] sm:$0xff]
      %v885 = vld [vmem:[#allocation7 + $0x88] sm:$0xff]
      %v886 = vld [vmem:[#allocation7 + $0x90] sm:$0xff]
      %v887 = vld [vmem:[#allocation7 + $0x98] sm:$0xff]
      %v888 = vld [vmem:[#allocation7 + $0xa0] sm:$0xff]
      %v889 = vld [vmem:[#allocation7 + $0xa8] sm:$0xff]
      %v890 = vld [vmem:[#allocation7 + $0xb0] sm:$0xff]
      %v891 = vld [vmem:[#allocation7 + $0xb8] sm:$0xff]
      %v892 = vld [vmem:[#allocation7 + $0xc0] sm:$0xff]
      %v893 = vld [vmem:[#allocation7 + $0xc8] sm:$0xff]
      %v894 = vld [vmem:[#allocation7 + $0xd0] sm:$0xff]
      %v895 = vld [vmem:[#allocation7 + $0xd8] sm:$0xff]
      %v896 = vld [vmem:[#allocation7 + $0xe0] sm:$0xff]
      %v897 = vld [vmem:[#allocation7 + $0xe8] sm:$0xff]
      %v898 = vld [vmem:[#allocation7 + $0xf0] sm:$0xff]
      %v899 = vld [vmem:[#allocation7 + $0xf8] sm:$0xff]
      %v900 = vld [vmem:[#allocation7 + $0x100] sm:$0xff]
      %v901 = vld [vmem:[#allocation7 + $0x108] sm:$0xff]
      %v902 = vld [vmem:[#allocation7 + $0x110] sm:$0xff]
      %v903 = vld [vmem:[#allocation7 + $0x118] sm:$0xff]
      %v904 = vld [vmem:[#allocation7 + $0x120] sm:$0xff]
      %v905 = vld [vmem:[#allocation7 + $0x128] sm:$0xff]
      %v906 = vld [vmem:[#allocation7 + $0x130] sm:$0xff]
      %v907 = vld [vmem:[#allocation7 + $0x138] sm:$0xff]
      %v908 = vld [vmem:[#allocation7 + $0x140] sm:$0xff]
      %v909 = vld [vmem:[#allocation7 + $0x148] sm:$0xff]
      %v910 = vld [vmem:[#allocation7 + $0x150] sm:$0xff]
      %v911 = vld [vmem:[#allocation7 + $0x158] sm:$0xff]
      %v912 = vld [vmem:[#allocation7 + $0x160] sm:$0xff]
      %v913 = vld [vmem:[#allocation7 + $0x168] sm:$0xff]
      %v914 = vld [vmem:[#allocation7 + $0x170] sm:$0xff]
      %v915 = vld [vmem:[#allocation7 + $0x178] sm:$0xff]
      %v916 = vld [vmem:[#allocation7 + $0x180] sm:$0xff]
      %v917 = vld [vmem:[#allocation7 + $0x188] sm:$0xff]
      %v918 = vld [vmem:[#allocation7 + $0x190] sm:$0xff]
      %v919 = vld [vmem:[#allocation7 + $0x198] sm:$0xff]
      %v920 = vld [vmem:[#allocation7 + $0x1a0] sm:$0xff]
      %v921 = vld [vmem:[#allocation7 + $0x1a8] sm:$0xff]
      %v922 = vld [vmem:[#allocation7 + $0x1b0] sm:$0xff]
      %v923 = vld [vmem:[#allocation7 + $0x1b8] sm:$0xff]
      %v924 = vld [vmem:[#allocation7 + $0x1c0] sm:$0xff]
      %v925 = vld [vmem:[#allocation7 + $0x1c8] sm:$0xff]
      %v926 = vld [vmem:[#allocation7 + $0x1d0] sm:$0xff]
      %v927 = vld [vmem:[#allocation7 + $0x1d8] sm:$0xff]
      %v928 = vld [vmem:[#allocation7 + $0x1e0] sm:$0xff]
      %v929 = vld [vmem:[#allocation7 + $0x1e8] sm:$0xff]
      %v930 = vld [vmem:[#allocation7 + $0x1f0] sm:$0xff]
      %v931 = vld [vmem:[#allocation7 + $0x1f8] sm:$0xff]
      %v932 = vld [vmem:[#allocation7 + $0x200] sm:$0xff]
      %v933 = vld [vmem:[#allocation7 + $0x208] sm:$0xff]
      %v934 = vld [vmem:[#allocation7 + $0x210] sm:$0xff]
      %v935 = vld [vmem:[#allocation7 + $0x218] sm:$0xff]
      %v936 = vld [vmem:[#allocation7 + $0x220] sm:$0xff]
      %v937 = vld [vmem:[#allocation7 + $0x228] sm:$0xff]
      %v938 = vld [vmem:[#allocation7 + $0x230] sm:$0xff]
      %v939 = vld [vmem:[#allocation7 + $0x238] sm:$0xff]
      %v940 = vld [vmem:[#allocation7 + $0x240] sm:$0xff]
      %v941 = vld [vmem:[#allocation7 + $0x248] sm:$0xff]
      %v942 = vld [vmem:[#allocation7 + $0x250] sm:$0xff]
      %v943 = vld [vmem:[#allocation7 + $0x258] sm:$0xff]
      %v944 = vld [vmem:[#allocation7 + $0x260] sm:$0xff]
      %v945 = vld [vmem:[#allocation7 + $0x268] sm:$0xff]
      %v946 = vld [vmem:[#allocation7 + $0x270] sm:$0xff]
      %v947 = vld [vmem:[#allocation7 + $0x278] sm:$0xff]
      %v948 = vld [vmem:[#allocation7 + $0x280] sm:$0xff]
      %v949 = vld [vmem:[#allocation7 + $0x288] sm:$0xff]
      %v950 = vld [vmem:[#allocation7 + $0x290] sm:$0xff]
      %v951 = vld [vmem:[#allocation7 + $0x298] sm:$0xff]
      %v952 = vld [vmem:[#allocation7 + $0x2a0] sm:$0xff]
      %v953 = vld [vmem:[#allocation7 + $0x2a8] sm:$0xff]
      %v954 = vld [vmem:[#allocation7 + $0x2b0] sm:$0xff]
      %v955 = vld [vmem:[#allocation7 + $0x2b8] sm:$0xff]
      %v956 = vld [vmem:[#allocation7 + $0x2c0] sm:$0xff]
      %v957 = vld [vmem:[#allocation7 + $0x2c8] sm:$0xff]
      %v958 = vld [vmem:[#allocation7 + $0x2d0] sm:$0xff]
      %v959 = vld [vmem:[#allocation7 + $0x2d8] sm:$0xff]
      %v960 = vld [vmem:[#allocation7 + $0x2e0] sm:$0xff]
      %v961 = vld [vmem:[#allocation7 + $0x2e8] sm:$0xff]
      %v962 = vld [vmem:[#allocation7 + $0x2f0] sm:$0xff]
      %v963 = vld [vmem:[#allocation7 + $0x2f8] sm:$0xff]
      %v964 = vld [vmem:[#allocation7 + $0x300] sm:$0xff]
      %v965 = vld [vmem:[#allocation7 + $0x308] sm:$0xff]
      %v966 = vld [vmem:[#allocation7 + $0x310] sm:$0xff]
      %v967 = vld [vmem:[#allocation7 + $0x318] sm:$0xff]
      %v968 = vld [vmem:[#allocation7 + $0x320] sm:$0xff]
      %v969 = vld [vmem:[#allocation7 + $0x328] sm:$0xff]
      %v970 = vld [vmem:[#allocation7 + $0x330] sm:$0xff]
      %v971 = vld [vmem:[#allocation7 + $0x338] sm:$0xff]
      %v972 = vld [vmem:[#allocation7 + $0x340] sm:$0xff]
      %v973 = vld [vmem:[#allocation7 + $0x348] sm:$0xff]
      %v974 = vld [vmem:[#allocation7 + $0x350] sm:$0xff]
      %v975 = vld [vmem:[#allocation7 + $0x358] sm:$0xff]
      %v976 = vld [vmem:[#allocation7 + $0x360] sm:$0xff]
      %v977 = vld [vmem:[#allocation7 + $0x368] sm:$0xff]
      %v978 = vld [vmem:[#allocation7 + $0x370] sm:$0xff]
      %v979 = vld [vmem:[#allocation7 + $0x378] sm:$0xff]
      %v980 = vld [vmem:[#allocation7 + $0x380] sm:$0xff]
      %v981 = vld [vmem:[#allocation7 + $0x388] sm:$0xff]
      %v982 = vld [vmem:[#allocation7 + $0x390] sm:$0xff]
      %v983 = vld [vmem:[#allocation7 + $0x398] sm:$0xff]
      %v984 = vld [vmem:[#allocation7 + $0x3a0] sm:$0xff]
      %v985 = vld [vmem:[#allocation7 + $0x3a8] sm:$0xff]
      %v986 = vld [vmem:[#allocation7 + $0x3b0] sm:$0xff]
      %v987 = vld [vmem:[#allocation7 + $0x3b8] sm:$0xff]
      %v988 = vld [vmem:[#allocation7 + $0x3c0] sm:$0xff]
      %v989 = vld [vmem:[#allocation7 + $0x3c8] sm:$0xff]
      %v990 = vld [vmem:[#allocation7 + $0x3d0] sm:$0xff]
      %v991 = vld [vmem:[#allocation7 + $0x3d8] sm:$0xff]
      %v992 = vld [vmem:[#allocation7 + $0x3e0] sm:$0xff]
      %v993 = vld [vmem:[#allocation7 + $0x3e8] sm:$0xff]
      %v994 = vld [vmem:[#allocation7 + $0x3f0] sm:$0xff]
      %v995 = vld [vmem:[#allocation7 + $0x3f8] sm:$0xff]
      %v996 = vld [vmem:[#allocation7 + $0x400] sm:$0xff]
      %v997 = vld [vmem:[#allocation7 + $0x408] sm:$0xff]
      %v998 = vld [vmem:[#allocation7 + $0x410] sm:$0xff]
      %v999 = vld [vmem:[#allocation7 + $0x418] sm:$0xff]
      %v1000 = vld [vmem:[#allocation7 + $0x420] sm:$0xff]
      %v1001 = vld [vmem:[#allocation7 + $0x428] sm:$0xff]
      %v1002 = vld [vmem:[#allocation7 + $0x430] sm:$0xff]
      %v1003 = vld [vmem:[#allocation7 + $0x438] sm:$0xff]
      %v1004 = vld [vmem:[#allocation7 + $0x440] sm:$0xff]
      %v1005 = vld [vmem:[#allocation7 + $0x448] sm:$0xff]
      %v1006 = vld [vmem:[#allocation7 + $0x450] sm:$0xff]
      %v1007 = vld [vmem:[#allocation7 + $0x458] sm:$0xff]
      %v1008 = vld [vmem:[#allocation7 + $0x460] sm:$0xff]
      %v1009 = vld [vmem:[#allocation7 + $0x468] sm:$0xff]
      %v1010 = vld [vmem:[#allocation7 + $0x470] sm:$0xff]
      %v1011 = vld [vmem:[#allocation7 + $0x478] sm:$0xff]
      %v1012 = vld [vmem:[%s2] sm:$0xff]
      %v1013 = vld [vmem:[%s2 + $0x8] sm:$0xff]
      %v1014 = vld [vmem:[%s2 + $0x10] sm:$0xff]
      %v1015 = vld [vmem:[%s2 + $0x18] sm:$0xff]
      %v1016 = vld [vmem:[%s2 + $0x20] sm:$0xff]
      %v1017 = vld [vmem:[%s2 + $0x28] sm:$0xff]
      %v1018 = vld [vmem:[%s2 + $0x30] sm:$0xff]
      %v1019 = vld [vmem:[%s2 + $0x38] sm:$0xff]
      %v1020 = vld [vmem:[%s2 + $0x40] sm:$0xff]
      %v1021 = vld [vmem:[%s2 + $0x48] sm:$0xff]
      %v1022 = vld [vmem:[%s2 + $0x50] sm:$0xff]
      %v1023 = vld [vmem:[%s2 + $0x58] sm:$0xff]
      %v1024 = vld [vmem:[%s2 + $0x60] sm:$0xff]
      %v1025 = vld [vmem:[%s2 + $0x68] sm:$0xff]
      %v1026 = vld [vmem:[%s2 + $0x70] sm:$0xff]
      %v1027 = vld [vmem:[%s2 + $0x78] sm:$0xff]
      %v1028 = vld [vmem:[%s2 + $0x80] sm:$0xff]
      %v1029 = vld [vmem:[%s2 + $0x88] sm:$0xff]
      %v1030 = vld [vmem:[%s2 + $0x90] sm:$0xff]
      %v1031 = vld [vmem:[%s2 + $0x98] sm:$0xff]
      %v1032 = vld [vmem:[%s2 + $0xa0] sm:$0xff]
      %v1033 = vld [vmem:[%s2 + $0xa8] sm:$0xff]
      %v1034 = vld [vmem:[%s2 + $0xb0] sm:$0xff]
      %v1035 = vld [vmem:[%s2 + $0xb8] sm:$0xff]
      %v1036 = vld [vmem:[%s2 + $0xc0] sm:$0xff]
      %v1037 = vld [vmem:[%s2 + $0xc8] sm:$0xff]
      %v1038 = vld [vmem:[%s2 + $0xd0] sm:$0xff]
      %v1039 = vld [vmem:[%s2 + $0xd8] sm:$0xff]
      %v1040 = vld [vmem:[%s2 + $0xe0] sm:$0xff]
      %v1041 = vld [vmem:[%s2 + $0xe8] sm:$0xff]
      %v1042 = vld [vmem:[%s2 + $0xf0] sm:$0xff]
      %v1043 = vld [vmem:[%s2 + $0xf8] sm:$0xff]
      %v1044 = vld [vmem:[%s2 + $0x100] sm:$0xff]
      %v1045 = vld [vmem:[%s2 + $0x108] sm:$0xff]
      %v1046 = vld [vmem:[%s2 + $0x110] sm:$0xff]
      %v1047 = vld [vmem:[%s2 + $0x118] sm:$0xff]
      %v1048 = vld [vmem:[%s2 + $0x120] sm:$0xff]
      %v1049 = vld [vmem:[%s2 + $0x128] sm:$0xff]
      %v1050 = vld [vmem:[%s2 + $0x130] sm:$0xff]
      %v1051 = vld [vmem:[%s2 + $0x138] sm:$0xff]
      %v1052 = vld [vmem:[%s2 + $0x140] sm:$0xff]
      %v1053 = vld [vmem:[%s2 + $0x148] sm:$0xff]
      %v1054 = vld [vmem:[%s2 + $0x150] sm:$0xff]
      %v1055 = vld [vmem:[%s2 + $0x158] sm:$0xff]
      %v1056 = vld [vmem:[%s2 + $0x160] sm:$0xff]
      %v1057 = vld [vmem:[%s2 + $0x168] sm:$0xff]
      %v1058 = vld [vmem:[%s2 + $0x170] sm:$0xff]
      %v1059 = vld [vmem:[%s2 + $0x178] sm:$0xff]
      %v1060 = vld [vmem:[%s2 + $0x180] sm:$0xff]
      %v1061 = vld [vmem:[%s2 + $0x188] sm:$0xff]
      %v1062 = vld [vmem:[%s2 + $0x190] sm:$0xff]
      %v1063 = vld [vmem:[%s2 + $0x198] sm:$0xff]
      %v1064 = vld [vmem:[%s2 + $0x1a0] sm:$0xff]
      %v1065 = vld [vmem:[%s2 + $0x1a8] sm:$0xff]
      %v1066 = vld [vmem:[%s2 + $0x1b0] sm:$0xff]
      %v1067 = vld [vmem:[%s2 + $0x1b8] sm:$0xff]
      %v1068 = vld [vmem:[%s2 + $0x1c0] sm:$0xff]
      %v1069 = vld [vmem:[%s2 + $0x1c8] sm:$0xff]
      %v1070 = vld [vmem:[%s2 + $0x1d0] sm:$0xff]
      %v1071 = vld [vmem:[%s2 + $0x1d8] sm:$0xff]
      %v1072 = vld [vmem:[%s2 + $0x1e0] sm:$0xff]
      %v1073 = vld [vmem:[%s2 + $0x1e8] sm:$0xff]
      %v1074 = vld [vmem:[%s2 + $0x1f0] sm:$0xff]
      %v1075 = vld [vmem:[%s2 + $0x1f8] sm:$0xff]
      %v1076 = vld [vmem:[%s2 + $0x200] sm:$0xff]
      %v1077 = vld [vmem:[%s2 + $0x208] sm:$0xff]
      %v1078 = vld [vmem:[%s2 + $0x210] sm:$0xff]
      %v1079 = vld [vmem:[%s2 + $0x218] sm:$0xff]
      %v1080 = vld [vmem:[%s2 + $0x220] sm:$0xff]
      %v1081 = vld [vmem:[%s2 + $0x228] sm:$0xff]
      %v1082 = vld [vmem:[%s2 + $0x230] sm:$0xff]
      %v1083 = vld [vmem:[%s2 + $0x238] sm:$0xff]
      %v1084 = vld [vmem:[%s2 + $0x240] sm:$0xff]
      %v1085 = vld [vmem:[%s2 + $0x248] sm:$0xff]
      %v1086 = vld [vmem:[%s2 + $0x250] sm:$0xff]
      %v1087 = vld [vmem:[%s2 + $0x258] sm:$0xff]
      %v1088 = vld [vmem:[%s2 + $0x260] sm:$0xff]
      %v1089 = vld [vmem:[%s2 + $0x268] sm:$0xff]
      %v1090 = vld [vmem:[%s2 + $0x270] sm:$0xff]
      %v1091 = vld [vmem:[%s2 + $0x278] sm:$0xff]
      %v1092 = vld [vmem:[%s2 + $0x280] sm:$0xff]
      %v1093 = vld [vmem:[%s2 + $0x288] sm:$0xff]
      %v1094 = vld [vmem:[%s2 + $0x290] sm:$0xff]
      %v1095 = vld [vmem:[%s2 + $0x298] sm:$0xff]
      %v1096 = vld [vmem:[%s2 + $0x2a0] sm:$0xff]
      %v1097 = vld [vmem:[%s2 + $0x2a8] sm:$0xff]
      %v1098 = vld [vmem:[%s2 + $0x2b0] sm:$0xff]
      %v1099 = vld [vmem:[%s2 + $0x2b8] sm:$0xff]
      %v1100 = vld [vmem:[%s2 + $0x2c0] sm:$0xff]
      %v1101 = vld [vmem:[%s2 + $0x2c8] sm:$0xff]
      %v1102 = vld [vmem:[%s2 + $0x2d0] sm:$0xff]
      %v1103 = vld [vmem:[%s2 + $0x2d8] sm:$0xff]
      %v1104 = vld [vmem:[%s2 + $0x2e0] sm:$0xff]
      %v1105 = vld [vmem:[%s2 + $0x2e8] sm:$0xff]
      %v1106 = vld [vmem:[%s2 + $0x2f0] sm:$0xff]
      %v1107 = vld [vmem:[%s2 + $0x2f8] sm:$0xff]
      %v1108 = vld [vmem:[%s2 + $0x300] sm:$0xff]
      %v1109 = vld [vmem:[%s2 + $0x308] sm:$0xff]
      %v1110 = vld [vmem:[%s2 + $0x310] sm:$0xff]
      %v1111 = vld [vmem:[%s2 + $0x318] sm:$0xff]
      %v1112 = vld [vmem:[%s2 + $0x320] sm:$0xff]
      %v1113 = vld [vmem:[%s2 + $0x328] sm:$0xff]
      %v1114 = vld [vmem:[%s2 + $0x330] sm:$0xff]
      %v1115 = vld [vmem:[%s2 + $0x338] sm:$0xff]
      %v1116 = vld [vmem:[%s2 + $0x340] sm:$0xff]
      %v1117 = vld [vmem:[%s2 + $0x348] sm:$0xff]
      %v1118 = vld [vmem:[%s2 + $0x350] sm:$0xff]
      %v1119 = vld [vmem:[%s2 + $0x358] sm:$0xff]
      %v1120 = vld [vmem:[%s2 + $0x360] sm:$0xff]
      %v1121 = vld [vmem:[%s2 + $0x368] sm:$0xff]
      %v1122 = vld [vmem:[%s2 + $0x370] sm:$0xff]
      %v1123 = vld [vmem:[%s2 + $0x378] sm:$0xff]
      %v1124 = vld [vmem:[%s2 + $0x380] sm:$0xff]
      %v1125 = vld [vmem:[%s2 + $0x388] sm:$0xff]
      %v1126 = vld [vmem:[%s2 + $0x390] sm:$0xff]
      %v1127 = vld [vmem:[%s2 + $0x398] sm:$0xff]
      %v1128 = vld [vmem:[%s2 + $0x3a0] sm:$0xff]
      %v1129 = vld [vmem:[%s2 + $0x3a8] sm:$0xff]
      %v1130 = vld [vmem:[%s2 + $0x3b0] sm:$0xff]
      %v1131 = vld [vmem:[%s2 + $0x3b8] sm:$0xff]
      %v1132 = vld [vmem:[%s2 + $0x3c0] sm:$0xff]
      %v1133 = vld [vmem:[%s2 + $0x3c8] sm:$0xff]
      %v1134 = vld [vmem:[%s2 + $0x3d0] sm:$0xff]
      %v1135 = vld [vmem:[%s2 + $0x3d8] sm:$0xff]
      %v1136 = vld [vmem:[%s2 + $0x3e0] sm:$0xff]
      %v1137 = vld [vmem:[%s2 + $0x3e8] sm:$0xff]
      %v1138 = vld [vmem:[%s2 + $0x3f0] sm:$0xff]
      %v1139 = vld [vmem:[%s2 + $0x3f8] sm:$0xff]
      %v1140 = vld [vmem:[%s2 + $0x400] sm:$0xff]
      %v1141 = vld [vmem:[%s2 + $0x408] sm:$0xff]
      %v1142 = vld [vmem:[%s2 + $0x410] sm:$0xff]
      %v1143 = vld [vmem:[%s2 + $0x418] sm:$0xff]
      %v1144 = vld [vmem:[%s2 + $0x420] sm:$0xff]
      %v1145 = vld [vmem:[%s2 + $0x428] sm:$0xff]
      %v1146 = vld [vmem:[%s2 + $0x430] sm:$0xff]
      %v1147 = vld [vmem:[%s2 + $0x438] sm:$0xff]
      %v1148 = vld [vmem:[%s2 + $0x440] sm:$0xff]
      %v1149 = vld [vmem:[%s2 + $0x448] sm:$0xff]
      %v1150 = vld [vmem:[%s2 + $0x450] sm:$0xff]
      %v1151 = vld [vmem:[%s2 + $0x458] sm:$0xff]
      %v1152 = vld [vmem:[%s2 + $0x460] sm:$0xff]
      %v1153 = vld [vmem:[%s2 + $0x468] sm:$0xff]
      %v1154 = vld [vmem:[%s2 + $0x470] sm:$0xff]
      %v1155 = vld [vmem:[%s2 + $0x478] sm:$0xff]
      %1156 = vmatprep.subr.mxu0 0.0
      %1157 = vmatpush1.msra.mxu0 %v1012
      %1158 = vmatprep.subr.mxu0 0.0
      %1159 = vmatpush1.msra.mxu0 %v1013
      %1160 = vmatprep.subr.mxu0 0.0
      %1161 = vmatpush1.msra.mxu0 %v1014
      %1162 = vmatprep.subr.mxu0 0.0
      %1163 = vmatpush1.msra.mxu0 %v1015
      %1164 = vmatprep.subr.mxu0 0.0
      %1165 = vmatpush1.msra.mxu0 %v1016
      %1166 = vmatprep.subr.mxu0 0.0
      %1167 = vmatpush1.msra.mxu0 %v1017
      %1168 = vmatprep.subr.mxu0 0.0
      %1169 = vmatpush1.msra.mxu0 %v1018
      %1170 = vmatprep.subr.mxu0 0.0
      %1171 = vmatpush1.msra.mxu0 %v1019
      %1172 = vmatprep.subr.mxu0 0.0
      %1173 = vmatpush1.msra.mxu0 %v1020
      %1174 = vmatprep.subr.mxu0 0.0
      %1175 = vmatpush1.msra.mxu0 %v1021
      %1176 = vmatprep.subr.mxu0 0.0
      %1177 = vmatpush1.msra.mxu0 %v1022
      %1178 = vmatprep.subr.mxu0 0.0
      %1179 = vmatpush1.msra.mxu0 %v1023
      %1180 = vmatprep.subr.mxu0 0.0
      %1181 = vmatpush1.msra.mxu0 %v1024
      %1182 = vmatprep.subr.mxu0 0.0
      %1183 = vmatpush1.msra.mxu0 %v1025
      %1184 = vmatprep.subr.mxu0 0.0
      %1185 = vmatpush1.msra.mxu0 %v1026
      %1186 = vmatprep.subr.mxu0 0.0
      %1187 = vmatpush1.msra.mxu0 %v1027
      %1188 = vmatprep.subr.mxu0 0.0
      %1189 = vmatpush1.msra.mxu0 %v1028
      %1190 = vmatprep.subr.mxu0 0.0
      %1191 = vmatpush1.msra.mxu0 %v1029
      %1192 = vmatprep.subr.mxu0 0.0
      %1193 = vmatpush1.msra.mxu0 %v1030
      %1194 = vmatprep.subr.mxu0 0.0
      %1195 = vmatpush1.msra.mxu0 %v1031
      %1196 = vmatprep.subr.mxu0 0.0
      %1197 = vmatpush1.msra.mxu0 %v1032
      %1198 = vmatprep.subr.mxu0 0.0
      %1199 = vmatpush1.msra.mxu0 %v1033
      %1200 = vmatprep.subr.mxu0 0.0
      %1201 = vmatpush1.msra.mxu0 %v1034
      %1202 = vmatprep.subr.mxu0 0.0
      %1203 = vmatpush1.msra.mxu0 %v1035
      %1204 = vmatprep.subr.mxu0 0.0
      %1205 = vmatpush1.msra.mxu0 %v1036
      %1206 = vmatprep.subr.mxu0 0.0
      %1207 = vmatpush1.msra.mxu0 %v1037
      %1208 = vmatprep.subr.mxu0 0.0
      %1209 = vmatpush1.msra.mxu0 %v1038
      %1210 = vmatprep.subr.mxu0 0.0
      %1211 = vmatpush1.msra.mxu0 %v1039
      %1212 = vmatprep.subr.mxu0 0.0
      %1213 = vmatpush1.msra.mxu0 %v1040
      %1214 = vmatprep.subr.mxu0 0.0
      %1215 = vmatpush1.msra.mxu0 %v1041
      %1216 = vmatprep.subr.mxu0 0.0
      %1217 = vmatpush1.msra.mxu0 %v1042
      %1218 = vmatprep.subr.mxu0 0.0
      %1219 = vmatpush1.msra.mxu0 %v1043
      %1220 = vmatprep.mubr.f32.mxu0 %v869
      %1221 = vmatmul.mubr.f32.gmra.mrb[0].mxu0 %v868
      %v1222 = vpop.f32.mrb[0].mxu0
      %v1223 = vadd.f32 0.0, %v1222
      %v1224 = vpop.f32.mrb[0].mxu0
      %1225 = vmatprep.mubr.f32.mxu0 %v878
      %1226 = vmatmul.mubr.f32.gmra.mrb[0].mxu0 %v877
      %v1227 = vpop.f32.mrb[0].mxu0
      %v1228 = vadd.f32 0.0, %v1227
      %v1229 = vpop.f32.mrb[0].mxu0
      %1230 = vmatprep.mubr.f32.mxu0 %v887
      %1231 = vmatmul.mubr.f32.gmra.mrb[0].mxu0 %v886
      %v1232 = vpop.f32.mrb[0].mxu0
      %v1233 = vadd.f32 0.0, %v1232
      %v1234 = vpop.f32.mrb[0].mxu0
      %1235 = vmatprep.mubr.f32.mxu0 %v896
      %1236 = vmatmul.mubr.f32.gmra.mrb[0].mxu0 %v895
      %v1237 = vpop.f32.mrb[0].mxu0
      %v1238 = vadd.f32 0.0, %v1237
      %v1239 = vpop.f32.mrb[0].mxu0
      %1240 = vmatprep.mubr.f32.mxu0 %v905
      %1241 = vmatmul.mubr.f32.gmra.mrb[0].mxu0 %v904
      %v1242 = vpop.f32.mrb[0].mxu0
      %v1243 = vadd.f32 0.0, %v1242
      %v1244 = vpop.f32.mrb[0].mxu0
      %1245 = vmatprep.mubr.f32.mxu0 %v914
      %1246 = vmatmul.mubr.f32.gmra.mrb[0].mxu0 %v913
      %v1247 = vpop.f32.mrb[0].mxu0
      %v1248 = vadd.f32 0.0, %v1247
      %v1249 = vpop.f32.mrb[0].mxu0
      %1250 = vmatprep.mubr.f32.mxu0 %v923
      %1251 = vmatmul.mubr.f32.gmra.mrb[0].mxu0 %v922
      %v1252 = vpop.f32.mrb[0].mxu0
      %v1253 = vadd.f32 0.0, %v1252
      %v1254 = vpop.f32.mrb[0].mxu0
      %1255 = vmatprep.mubr.f32.mxu0 %v932
      %1256 = vmatmul.mubr.f32.gmra.mrb[0].mxu0 %v931
      %v1257 = vpop.f32.mrb[0].mxu0
      %v1258 = vadd.f32 0.0, %v1257
      %v1259 = vpop.f32.mrb[0].mxu0
      %1260 = vmatprep.mubr.f32.mxu0 %v941
      %1261 = vmatmul.mubr.f32.gmra.mrb[0].mxu0 %v940
      %v1262 = vpop.f32.mrb[0].mxu0
      %v1263 = vadd.f32 0.0, %v1262
      %v1264 = vpop.f32.mrb[0].mxu0
      %1265 = vmatprep.mubr.f32.mxu0 %v950
      %1266 = vmatmul.mubr.f32.gmra.mrb[0].mxu0 %v949
      %v1267 = vpop.f32.mrb[0].mxu0
      %v1268 = vadd.f32 0.0, %v1267
      %v1269 = vpop.f32.mrb[0].mxu0
      %1270 = vmatprep.mubr.f32.mxu0 %v959
      %1271 = vmatmul.mubr.f32.gmra.mrb[0].mxu0 %v958
      %v1272 = vpop.f32.mrb[0].mxu0
      %v1273 = vadd.f32 0.0, %v1272
      %v1274 = vpop.f32.mrb[0].mxu0
      %1275 = vmatprep.mubr.f32.mxu0 %v968
      %1276 = vmatmul.mubr.f32.gmra.mrb[0].mxu0 %v967
      %v1277 = vpop.f32.mrb[0].mxu0
      %v1278 = vadd.f32 0.0, %v1277
      %v1279 = vpop.f32.mrb[0].mxu0
      %1280 = vmatprep.mubr.f32.mxu0 %v977
      %1281 = vmatmul.mubr.f32.gmra.mrb[0].mxu0 %v976
      %v1282 = vpop.f32.mrb[0].mxu0
      %v1283 = vadd.f32 0.0, %v1282
      %v1284 = vpop.f32.mrb[0].mxu0
      %1285 = vmatprep.mubr.f32.mxu0 %v986
      %1286 = vmatmul.mubr.f32.gmra.mrb[0].mxu0 %v985
      %v1287 = vpop.f32.mrb[0].mxu0
      %v1288 = vadd.f32 0.0, %v1287
      %v1289 = vpop.f32.mrb[0].mxu0
      %1290 = vmatprep.mubr.f32.mxu0 %v995
      %1291 = vmatmul.mubr.f32.gmra.mrb[0].mxu0 %v994
      %v1292 = vpop.f32.mrb[0].mxu0
      %v1293 = vadd.f32 0.0, %v1292
      %v1294 = vpop.f32.mrb[0].mxu0
      %1295 = vmatprep.mubr.f32.mxu0 %v1004
      %1296 = vmatmul.mubr.f32.gmra.mrb[0].mxu0 %v1003
      %v1297 = vpop.f32.mrb[0].mxu0
      %v1298 = vadd.f32 0.0, %v1297
      %v1299 = vpop.f32.mrb[0].mxu0
      %1300 = vdwg.mxu0
      %1301 = vmatprep.subr.mxu0 0.0
      %1302 = vmatpush1.msra.mxu0 %v1044
      %1303 = vmatprep.subr.mxu0 0.0
      %1304 = vmatpush1.msra.mxu0 %v1045
      %1305 = vmatprep.subr.mxu0 0.0
      %1306 = vmatpush1.msra.mxu0 %v1046
      %1307 = vmatprep.subr.mxu0 0.0
      %1308 = vmatpush1.msra.mxu0 %v1047
      %1309 = vmatprep.subr.mxu0 0.0
      %1310 = vmatpush1.msra.mxu0 %v1048
      %1311 = vmatprep.subr.mxu0 0.0
      %1312 = vmatpush1.msra.mxu0 %v1049
      %1313 = vmatprep.subr.mxu0 0.0
      %1314 = vmatpush1.msra.mxu0 %v1050
      %1315 = vmatprep.subr.mxu0 0.0
      %1316 = vmatpush1.msra.mxu0 %v1051
      %1317 = vmatprep.subr.mxu0 0.0
      %1318 = vmatpush1.msra.mxu0 %v1052
      %1319 = vmatprep.subr.mxu0 0.0
      %1320 = vmatpush1.msra.mxu0 %v1053
      %1321 = vmatprep.subr.mxu0 0.0
      %1322 = vmatpush1.msra.mxu0 %v1054
      %1323 = vmatprep.subr.mxu0 0.0
      %1324 = vmatpush1.msra.mxu0 %v1055
      %1325 = vmatprep.subr.mxu0 0.0
      %1326 = vmatpush1.msra.mxu0 %v1056
      %1327 = vmatprep.subr.mxu0 0.0
      %1328 = vmatpush1.msra.mxu0 %v1057
      %1329 = vmatprep.subr.mxu0 0.0
      %1330 = vmatpush1.msra.mxu0 %v1058
      %1331 = vmatprep.subr.mxu0 0.0
      %1332 = vmatpush1.msra.mxu0 %v1059
      %1333 = vmatprep.subr.mxu0 0.0
      %1334 = vmatpush1.msra.mxu0 %v1060
      %1335 = vmatprep.subr.mxu0 0.0
      %1336 = vmatpush1.msra.mxu0 %v1061
      %1337 = vmatprep.subr.mxu0 0.0
      %1338 = vmatpush1.msra.mxu0 %v1062
      %1339 = vmatprep.subr.mxu0 0.0
      %1340 = vmatpush1.msra.mxu0 %v1063
      %1341 = vmatprep.subr.mxu0 0.0
      %1342 = vmatpush1.msra.mxu0 %v1064
      %1343 = vmatprep.subr.mxu0 0.0
      %1344 = vmatpush1.msra.mxu0 %v1065
      %1345 = vmatprep.subr.mxu0 0.0
      %1346 = vmatpush1.msra.mxu0 %v1066
      %1347 = vmatprep.subr.mxu0 0.0
      %1348 = vmatpush1.msra.mxu0 %v1067
      %1349 = vmatprep.subr.mxu0 0.0
      %1350 = vmatpush1.msra.mxu0 %v1068
      %1351 = vmatprep.subr.mxu0 0.0
      %1352 = vmatpush1.msra.mxu0 %v1069
      %1353 = vmatprep.subr.mxu0 0.0
      %1354 = vmatpush1.msra.mxu0 %v1070
      %1355 = vmatprep.subr.mxu0 0.0
      %1356 = vmatpush1.msra.mxu0 %v1071
      %1357 = vmatprep.subr.mxu0 0.0
      %1358 = vmatpush1.msra.mxu0 %v1072
      %1359 = vmatprep.subr.mxu0 0.0
      %1360 = vmatpush1.msra.mxu0 %v1073
      %1361 = vmatprep.subr.mxu0 0.0
      %1362 = vmatpush1.msra.mxu0 %v1074
      %1363 = vmatprep.subr.mxu0 0.0
      %1364 = vmatpush1.msra.mxu0 %v1075
      %1365 = vmatprep.mubr.f32.mxu0 %v871
      %1366 = vmatmul.mubr.f32.gmra.mrb[0].mxu0 %v870
      %v1367 = vpop.f32.mrb[0].mxu0
      %v1368 = vadd.f32 %v1223, %v1367
      %v1369 = vpop.f32.mrb[0].mxu0
      %1370 = vmatprep.mubr.f32.mxu0 %v880
      %1371 = vmatmul.mubr.f32.gmra.mrb[0].mxu0 %v879
      %v1372 = vpop.f32.mrb[0].mxu0
      %v1373 = vadd.f32 %v1228, %v1372
      %v1374 = vpop.f32.mrb[0].mxu0
      %1375 = vmatprep.mubr.f32.mxu0 %v889
      %1376 = vmatmul.mubr.f32.gmra.mrb[0].mxu0 %v888
      %v1377 = vpop.f32.mrb[0].mxu0
      %v1378 = vadd.f32 %v1233, %v1377
      %v1379 = vpop.f32.mrb[0].mxu0
      %1380 = vmatprep.mubr.f32.mxu0 %v898
      %1381 = vmatmul.mubr.f32.gmra.mrb[0].mxu0 %v897
      %v1382 = vpop.f32.mrb[0].mxu0
      %v1383 = vadd.f32 %v1238, %v1382
      %v1384 = vpop.f32.mrb[0].mxu0
      %1385 = vmatprep.mubr.f32.mxu0 %v907
      %1386 = vmatmul.mubr.f32.gmra.mrb[0].mxu0 %v906
      %v1387 = vpop.f32.mrb[0].mxu0
      %v1388 = vadd.f32 %v1243, %v1387
      %v1389 = vpop.f32.mrb[0].mxu0
      %1390 = vmatprep.mubr.f32.mxu0 %v916
      %1391 = vmatmul.mubr.f32.gmra.mrb[0].mxu0 %v915
      %v1392 = vpop.f32.mrb[0].mxu0
      %v1393 = vadd.f32 %v1248, %v1392
      %v1394 = vpop.f32.mrb[0].mxu0
      %1395 = vmatprep.mubr.f32.mxu0 %v925
      %1396 = vmatmul.mubr.f32.gmra.mrb[0].mxu0 %v924
      %v1397 = vpop.f32.mrb[0].mxu0
      %v1398 = vadd.f32 %v1253, %v1397
      %v1399 = vpop.f32.mrb[0].mxu0
      %1400 = vmatprep.mubr.f32.mxu0 %v934
      %1401 = vmatmul.mubr.f32.gmra.mrb[0].mxu0 %v933
      %v1402 = vpop.f32.mrb[0].mxu0
      %v1403 = vadd.f32 %v1258, %v1402
      %v1404 = vpop.f32.mrb[0].mxu0
      %1405 = vmatprep.mubr.f32.mxu0 %v943
      %1406 = vmatmul.mubr.f32.gmra.mrb[0].mxu0 %v942
      %v1407 = vpop.f32.mrb[0].mxu0
      %v1408 = vadd.f32 %v1263, %v1407
      %v1409 = vpop.f32.mrb[0].mxu0
      %1410 = vmatprep.mubr.f32.mxu0 %v952
      %1411 = vmatmul.mubr.f32.gmra.mrb[0].mxu0 %v951
      %v1412 = vpop.f32.mrb[0].mxu0
      %v1413 = vadd.f32 %v1268, %v1412
      %v1414 = vpop.f32.mrb[0].mxu0
      %1415 = vmatprep.mubr.f32.mxu0 %v961
      %1416 = vmatmul.mubr.f32.gmra.mrb[0].mxu0 %v960
      %v1417 = vpop.f32.mrb[0].mxu0
      %v1418 = vadd.f32 %v1273, %v1417
      %v1419 = vpop.f32.mrb[0].mxu0
      %1420 = vmatprep.mubr.f32.mxu0 %v970
      %1421 = vmatmul.mubr.f32.gmra.mrb[0].mxu0 %v969
      %v1422 = vpop.f32.mrb[0].mxu0
      %v1423 = vadd.f32 %v1278, %v1422
      %v1424 = vpop.f32.mrb[0].mxu0
      %1425 = vmatprep.mubr.f32.mxu0 %v979
      %1426 = vmatmul.mubr.f32.gmra.mrb[0].mxu0 %v978
      %v1427 = vpop.f32.mrb[0].mxu0
      %v1428 = vadd.f32 %v1283, %v1427
      %v1429 = vpop.f32.mrb[0].mxu0
      %1430 = vmatprep.mubr.f32.mxu0 %v988
      %1431 = vmatmul.mubr.f32.gmra.mrb[0].mxu0 %v987
      %v1432 = vpop.f32.mrb[0].mxu0
      %v1433 = vadd.f32 %v1288, %v1432
      %v1434 = vpop.f32.mrb[0].mxu0
      %1435 = vmatprep.mubr.f32.mxu0 %v997
      %1436 = vmatmul.mubr.f32.gmra.mrb[0].mxu0 %v996
      %v1437 = vpop.f32.mrb[0].mxu0
      %v1438 = vadd.f32 %v1293, %v1437
      %v1439 = vpop.f32.mrb[0].mxu0
      %1440 = vmatprep.mubr.f32.mxu0 %v1006
      %1441 = vmatmul.mubr.f32.gmra.mrb[0].mxu0 %v1005
      %v1442 = vpop.f32.mrb[0].mxu0
      %v1443 = vadd.f32 %v1298, %v1442
      %v1444 = vpop.f32.mrb[0].mxu0
      %1445 = vdwg.mxu0
      %1446 = vmatprep.subr.mxu0 0.0
      %1447 = vmatpush1.msra.mxu0 %v1076
      %1448 = vmatprep.subr.mxu0 0.0
      %1449 = vmatpush1.msra.mxu0 %v1077
      %1450 = vmatprep.subr.mxu0 0.0
      %1451 = vmatpush1.msra.mxu0 %v1078
      %1452 = vmatprep.subr.mxu0 0.0
      %1453 = vmatpush1.msra.mxu0 %v1079
      %1454 = vmatprep.subr.mxu0 0.0
      %1455 = vmatpush1.msra.mxu0 %v1080
      %1456 = vmatprep.subr.mxu0 0.0
      %1457 = vmatpush1.msra.mxu0 %v1081
      %1458 = vmatprep.subr.mxu0 0.0
      %1459 = vmatpush1.msra.mxu0 %v1082
      %1460 = vmatprep.subr.mxu0 0.0
      %1461 = vmatpush1.msra.mxu0 %v1083
      %1462 = vmatprep.subr.mxu0 0.0
      %1463 = vmatpush1.msra.mxu0 %v1084
      %1464 = vmatprep.subr.mxu0 0.0
      %1465 = vmatpush1.msra.mxu0 %v1085
      %1466 = vmatprep.subr.mxu0 0.0
      %1467 = vmatpush1.msra.mxu0 %v1086
      %1468 = vmatprep.subr.mxu0 0.0
      %1469 = vmatpush1.msra.mxu0 %v1087
      %1470 = vmatprep.subr.mxu0 0.0
      %1471 = vmatpush1.msra.mxu0 %v1088
      %1472 = vmatprep.subr.mxu0 0.0
      %1473 = vmatpush1.msra.mxu0 %v1089
      %1474 = vmatprep.subr.mxu0 0.0
      %1475 = vmatpush1.msra.mxu0 %v1090
      %1476 = vmatprep.subr.mxu0 0.0
      %1477 = vmatpush1.msra.mxu0 %v1091
      %1478 = vmatprep.subr.mxu0 0.0
      %1479 = vmatpush1.msra.mxu0 %v1092
      %1480 = vmatprep.subr.mxu0 0.0
      %1481 = vmatpush1.msra.mxu0 %v1093
      %1482 = vmatprep.subr.mxu0 0.0
      %1483 = vmatpush1.msra.mxu0 %v1094
      %1484 = vmatprep.subr.mxu0 0.0
      %1485 = vmatpush1.msra.mxu0 %v1095
      %1486 = vmatprep.subr.mxu0 0.0
      %1487 = vmatpush1.msra.mxu0 %v1096
      %1488 = vmatprep.subr.mxu0 0.0
      %1489 = vmatpush1.msra.mxu0 %v1097
      %1490 = vmatprep.subr.mxu0 0.0
      %1491 = vmatpush1.msra.mxu0 %v1098
      %1492 = vmatprep.subr.mxu0 0.0
      %1493 = vmatpush1.msra.mxu0 %v1099
      %1494 = vmatprep.subr.mxu0 0.0
      %1495 = vmatpush1.msra.mxu0 %v1100
      %1496 = vmatprep.subr.mxu0 0.0
      %1497 = vmatpush1.msra.mxu0 %v1101
      %1498 = vmatprep.subr.mxu0 0.0
      %1499 = vmatpush1.msra.mxu0 %v1102
      %1500 = vmatprep.subr.mxu0 0.0
      %1501 = vmatpush1.msra.mxu0 %v1103
      %1502 = vmatprep.subr.mxu0 0.0
      %1503 = vmatpush1.msra.mxu0 %v1104
      %1504 = vmatprep.subr.mxu0 0.0
      %1505 = vmatpush1.msra.mxu0 %v1105
      %1506 = vmatprep.subr.mxu0 0.0
      %1507 = vmatpush1.msra.mxu0 %v1106
      %1508 = vmatprep.subr.mxu0 0.0
      %1509 = vmatpush1.msra.mxu0 %v1107
      %1510 = vmatprep.mubr.f32.mxu0 %v873
      %1511 = vmatmul.mubr.f32.gmra.mrb[0].mxu0 %v872
      %v1512 = vpop.f32.mrb[0].mxu0
      %v1513 = vadd.f32 %v1368, %v1512
      %v1514 = vpop.f32.mrb[0].mxu0
      %1515 = vmatprep.mubr.f32.mxu0 %v882
      %1516 = vmatmul.mubr.f32.gmra.mrb[0].mxu0 %v881
      %v1517 = vpop.f32.mrb[0].mxu0
      %v1518 = vadd.f32 %v1373, %v1517
      %v1519 = vpop.f32.mrb[0].mxu0
      %1520 = vmatprep.mubr.f32.mxu0 %v891
      %1521 = vmatmul.mubr.f32.gmra.mrb[0].mxu0 %v890
      %v1522 = vpop.f32.mrb[0].mxu0
      %v1523 = vadd.f32 %v1378, %v1522
      %v1524 = vpop.f32.mrb[0].mxu0
      %1525 = vmatprep.mubr.f32.mxu0 %v900
      %1526 = vmatmul.mubr.f32.gmra.mrb[0].mxu0 %v899
      %v1527 = vpop.f32.mrb[0].mxu0
      %v1528 = vadd.f32 %v1383, %v1527
      %v1529 = vpop.f32.mrb[0].mxu0
      %1530 = vmatprep.mubr.f32.mxu0 %v909
      %1531 = vmatmul.mubr.f32.gmra.mrb[0].mxu0 %v908
      %v1532 = vpop.f32.mrb[0].mxu0
      %v1533 = vadd.f32 %v1388, %v1532
      %v1534 = vpop.f32.mrb[0].mxu0
      %1535 = vmatprep.mubr.f32.mxu0 %v918
      %1536 = vmatmul.mubr.f32.gmra.mrb[0].mxu0 %v917
      %v1537 = vpop.f32.mrb[0].mxu0
      %v1538 = vadd.f32 %v1393, %v1537
      %v1539 = vpop.f32.mrb[0].mxu0
      %1540 = vmatprep.mubr.f32.mxu0 %v927
      %1541 = vmatmul.mubr.f32.gmra.mrb[0].mxu0 %v926
      %v1542 = vpop.f32.mrb[0].mxu0
      %v1543 = vadd.f32 %v1398, %v1542
      %v1544 = vpop.f32.mrb[0].mxu0
      %1545 = vmatprep.mubr.f32.mxu0 %v936
      %1546 = vmatmul.mubr.f32.gmra.mrb[0].mxu0 %v935
      %v1547 = vpop.f32.mrb[0].mxu0
      %v1548 = vadd.f32 %v1403, %v1547
      %v1549 = vpop.f32.mrb[0].mxu0
      %1550 = vmatprep.mubr.f32.mxu0 %v945
      %1551 = vmatmul.mubr.f32.gmra.mrb[0].mxu0 %v944
      %v1552 = vpop.f32.mrb[0].mxu0
      %v1553 = vadd.f32 %v1408, %v1552
      %v1554 = vpop.f32.mrb[0].mxu0
      %1555 = vmatprep.mubr.f32.mxu0 %v954
      %1556 = vmatmul.mubr.f32.gmra.mrb[0].mxu0 %v953
      %v1557 = vpop.f32.mrb[0].mxu0
      %v1558 = vadd.f32 %v1413, %v1557
      %v1559 = vpop.f32.mrb[0].mxu0
      %1560 = vmatprep.mubr.f32.mxu0 %v963
      %1561 = vmatmul.mubr.f32.gmra.mrb[0].mxu0 %v962
      %v1562 = vpop.f32.mrb[0].mxu0
      %v1563 = vadd.f32 %v1418, %v1562
      %v1564 = vpop.f32.mrb[0].mxu0
      %1565 = vmatprep.mubr.f32.mxu0 %v972
      %1566 = vmatmul.mubr.f32.gmra.mrb[0].mxu0 %v971
      %v1567 = vpop.f32.mrb[0].mxu0
      %v1568 = vadd.f32 %v1423, %v1567
      %v1569 = vpop.f32.mrb[0].mxu0
      %1570 = vmatprep.mubr.f32.mxu0 %v981
      %1571 = vmatmul.mubr.f32.gmra.mrb[0].mxu0 %v980
      %v1572 = vpop.f32.mrb[0].mxu0
      %v1573 = vadd.f32 %v1428, %v1572
      %v1574 = vpop.f32.mrb[0].mxu0
      %1575 = vmatprep.mubr.f32.mxu0 %v990
      %1576 = vmatmul.mubr.f32.gmra.mrb[0].mxu0 %v989
      %v1577 = vpop.f32.mrb[0].mxu0
      %v1578 = vadd.f32 %v1433, %v1577
      %v1579 = vpop.f32.mrb[0].mxu0
      %1580 = vmatprep.mubr.f32.mxu0 %v999
      %1581 = vmatmul.mubr.f32.gmra.mrb[0].mxu0 %v998
      %v1582 = vpop.f32.mrb[0].mxu0
      %v1583 = vadd.f32 %v1438, %v1582
      %v1584 = vpop.f32.mrb[0].mxu0
      %1585 = vmatprep.mubr.f32.mxu0 %v1008
      %1586 = vmatmul.mubr.f32.gmra.mrb[0].mxu0 %v1007
      %v1587 = vpop.f32.mrb[0].mxu0
      %v1588 = vadd.f32 %v1443, %v1587
      %v1589 = vpop.f32.mrb[0].mxu0
      %1590 = vdwg.mxu0
      %1591 = vmatprep.subr.mxu0 0.0
      %1592 = vmatpush1.msra.mxu0 %v1108
      %1593 = vmatprep.subr.mxu0 0.0
      %1594 = vmatpush1.msra.mxu0 %v1109
      %1595 = vmatprep.subr.mxu0 0.0
      %1596 = vmatpush1.msra.mxu0 %v1110
      %1597 = vmatprep.subr.mxu0 0.0
      %1598 = vmatpush1.msra.mxu0 %v1111
      %1599 = vmatprep.subr.mxu0 0.0
      %1600 = vmatpush1.msra.mxu0 %v1112
      %1601 = vmatprep.subr.mxu0 0.0
      %1602 = vmatpush1.msra.mxu0 %v1113
      %1603 = vmatprep.subr.mxu0 0.0
      %1604 = vmatpush1.msra.mxu0 %v1114
      %1605 = vmatprep.subr.mxu0 0.0
      %1606 = vmatpush1.msra.mxu0 %v1115
      %1607 = vmatprep.subr.mxu0 0.0
      %1608 = vmatpush1.msra.mxu0 %v1116
      %1609 = vmatprep.subr.mxu0 0.0
      %1610 = vmatpush1.msra.mxu0 %v1117
      %1611 = vmatprep.subr.mxu0 0.0
      %1612 = vmatpush1.msra.mxu0 %v1118
      %1613 = vmatprep.subr.mxu0 0.0
      %1614 = vmatpush1.msra.mxu0 %v1119
      %1615 = vmatprep.subr.mxu0 0.0
      %1616 = vmatpush1.msra.mxu0 %v1120
      %1617 = vmatprep.subr.mxu0 0.0
      %1618 = vmatpush1.msra.mxu0 %v1121
      %1619 = vmatprep.subr.mxu0 0.0
      %1620 = vmatpush1.msra.mxu0 %v1122
      %1621 = vmatprep.subr.mxu0 0.0
      %1622 = vmatpush1.msra.mxu0 %v1123
      %1623 = vmatprep.subr.mxu0 0.0
      %1624 = vmatpush1.msra.mxu0 %v1124
      %1625 = vmatprep.subr.mxu0 0.0
      %1626 = vmatpush1.msra.mxu0 %v1125
      %1627 = vmatprep.subr.mxu0 0.0
      %1628 = vmatpush1.msra.mxu0 %v1126
      %1629 = vmatprep.subr.mxu0 0.0
      %1630 = vmatpush1.msra.mxu0 %v1127
      %1631 = vmatprep.subr.mxu0 0.0
      %1632 = vmatpush1.msra.mxu0 %v1128
      %1633 = vmatprep.subr.mxu0 0.0
      %1634 = vmatpush1.msra.mxu0 %v1129
      %1635 = vmatprep.subr.mxu0 0.0
      %1636 = vmatpush1.msra.mxu0 %v1130
      %1637 = vmatprep.subr.mxu0 0.0
      %1638 = vmatpush1.msra.mxu0 %v1131
      %1639 = vmatprep.subr.mxu0 0.0
      %1640 = vmatpush1.msra.mxu0 %v1132
      %1641 = vmatprep.subr.mxu0 0.0
      %1642 = vmatpush1.msra.mxu0 %v1133
      %1643 = vmatprep.subr.mxu0 0.0
      %1644 = vmatpush1.msra.mxu0 %v1134
      %1645 = vmatprep.subr.mxu0 0.0
      %1646 = vmatpush1.msra.mxu0 %v1135
      %1647 = vmatprep.subr.mxu0 0.0
      %1648 = vmatpush1.msra.mxu0 %v1136
      %1649 = vmatprep.subr.mxu0 0.0
      %1650 = vmatpush1.msra.mxu0 %v1137
      %1651 = vmatprep.subr.mxu0 0.0
      %1652 = vmatpush1.msra.mxu0 %v1138
      %1653 = vmatprep.subr.mxu0 0.0
      %1654 = vmatpush1.msra.mxu0 %v1139
      %1655 = vmatprep.mubr.f32.mxu0 %v875
      %1656 = vmatmul.mubr.f32.gmra.mrb[0].mxu0 %v874
      %v1657 = vpop.f32.mrb[0].mxu0
      %v1658 = vadd.f32 %v1513, %v1657
      %v1659 = vpop.f32.mrb[0].mxu0
      %1660 = vmatprep.mubr.f32.mxu0 %v884
      %1661 = vmatmul.mubr.f32.gmra.mrb[0].mxu0 %v883
      %v1662 = vpop.f32.mrb[0].mxu0
      %v1663 = vadd.f32 %v1518, %v1662
      %v1664 = vpop.f32.mrb[0].mxu0
      %1665 = vmatprep.mubr.f32.mxu0 %v893
      %1666 = vmatmul.mubr.f32.gmra.mrb[0].mxu0 %v892
      %v1667 = vpop.f32.mrb[0].mxu0
      %v1668 = vadd.f32 %v1523, %v1667
      %v1669 = vpop.f32.mrb[0].mxu0
      %1670 = vmatprep.mubr.f32.mxu0 %v902
      %1671 = vmatmul.mubr.f32.gmra.mrb[0].mxu0 %v901
      %v1672 = vpop.f32.mrb[0].mxu0
      %v1673 = vadd.f32 %v1528, %v1672
      %v1674 = vpop.f32.mrb[0].mxu0
      %1675 = vmatprep.mubr.f32.mxu0 %v911
      %1676 = vmatmul.mubr.f32.gmra.mrb[0].mxu0 %v910
      %v1677 = vpop.f32.mrb[0].mxu0
      %v1678 = vadd.f32 %v1533, %v1677
      %v1679 = vpop.f32.mrb[0].mxu0
      %1680 = vmatprep.mubr.f32.mxu0 %v920
      %1681 = vmatmul.mubr.f32.gmra.mrb[0].mxu0 %v919
      %v1682 = vpop.f32.mrb[0].mxu0
      %v1683 = vadd.f32 %v1538, %v1682
      %v1684 = vpop.f32.mrb[0].mxu0
      %1685 = vmatprep.mubr.f32.mxu0 %v929
      %1686 = vmatmul.mubr.f32.gmra.mrb[0].mxu0 %v928
      %v1687 = vpop.f32.mrb[0].mxu0
      %v1688 = vadd.f32 %v1543, %v1687
      %v1689 = vpop.f32.mrb[0].mxu0
      %1690 = vmatprep.mubr.f32.mxu0 %v938
      %1691 = vmatmul.mubr.f32.gmra.mrb[0].mxu0 %v937
      %v1692 = vpop.f32.mrb[0].mxu0
      %v1693 = vadd.f32 %v1548, %v1692
      %v1694 = vpop.f32.mrb[0].mxu0
      %1695 = vmatprep.mubr.f32.mxu0 %v947
      %1696 = vmatmul.mubr.f32.gmra.mrb[0].mxu0 %v946
      %v1697 = vpop.f32.mrb[0].mxu0
      %v1698 = vadd.f32 %v1553, %v1697
      %v1699 = vpop.f32.mrb[0].mxu0
      %1700 = vmatprep.mubr.f32.mxu0 %v956
      %1701 = vmatmul.mubr.f32.gmra.mrb[0].mxu0 %v955
      %v1702 = vpop.f32.mrb[0].mxu0
      %v1703 = vadd.f32 %v1558, %v1702
      %v1704 = vpop.f32.mrb[0].mxu0
      %1705 = vmatprep.mubr.f32.mxu0 %v965
      %1706 = vmatmul.mubr.f32.gmra.mrb[0].mxu0 %v964
      %v1707 = vpop.f32.mrb[0].mxu0
      %v1708 = vadd.f32 %v1563, %v1707
      %v1709 = vpop.f32.mrb[0].mxu0
      %1710 = vmatprep.mubr.f32.mxu0 %v974
      %1711 = vmatmul.mubr.f32.gmra.mrb[0].mxu0 %v973
      %v1712 = vpop.f32.mrb[0].mxu0
      %v1713 = vadd.f32 %v1568, %v1712
      %v1714 = vpop.f32.mrb[0].mxu0
      %1715 = vmatprep.mubr.f32.mxu0 %v983
      %1716 = vmatmul.mubr.f32.gmra.mrb[0].mxu0 %v982
      %v1717 = vpop.f32.mrb[0].mxu0
      %v1718 = vadd.f32 %v1573, %v1717
      %v1719 = vpop.f32.mrb[0].mxu0
      %1720 = vmatprep.mubr.f32.mxu0 %v992
      %1721 = vmatmul.mubr.f32.gmra.mrb[0].mxu0 %v991
      %v1722 = vpop.f32.mrb[0].mxu0
      %v1723 = vadd.f32 %v1578, %v1722
      %v1724 = vpop.f32.mrb[0].mxu0
      %1725 = vmatprep.mubr.f32.mxu0 %v1001
      %1726 = vmatmul.mubr.f32.gmra.mrb[0].mxu0 %v1000
      %v1727 = vpop.f32.mrb[0].mxu0
      %v1728 = vadd.f32 %v1583, %v1727
      %v1729 = vpop.f32.mrb[0].mxu0
      %1730 = vmatprep.mubr.f32.mxu0 %v1010
      %1731 = vmatmul.mubr.f32.gmra.mrb[0].mxu0 %v1009
      %v1732 = vpop.f32.mrb[0].mxu0
      %v1733 = vadd.f32 %v1588, %v1732
      %v1734 = vpop.f32.mrb[0].mxu0
      %1735 = vdwg.mxu0
      %1736 = vmatprep.subr.mxu0 0.0
      %1737 = vmatpush1.msra.mxu0 %v1140
      %1738 = vmatprep.subr.mxu0 0.0
      %1739 = vmatpush1.msra.mxu0 %v1141
      %1740 = vmatprep.subr.mxu0 0.0
      %1741 = vmatpush1.msra.mxu0 %v1142
      %1742 = vmatprep.subr.mxu0 0.0
      %1743 = vmatpush1.msra.mxu0 %v1143
      %1744 = vmatprep.subr.mxu0 0.0
      %1745 = vmatpush1.msra.mxu0 %v1144
      %1746 = vmatprep.subr.mxu0 0.0
      %1747 = vmatpush1.msra.mxu0 %v1145
      %1748 = vmatprep.subr.mxu0 0.0
      %1749 = vmatpush1.msra.mxu0 %v1146
      %1750 = vmatprep.subr.mxu0 0.0
      %1751 = vmatpush1.msra.mxu0 %v1147
      %1752 = vmatprep.subr.mxu0 0.0
      %1753 = vmatpush1.msra.mxu0 %v1148
      %1754 = vmatprep.subr.mxu0 0.0
      %1755 = vmatpush1.msra.mxu0 %v1149
      %1756 = vmatprep.subr.mxu0 0.0
      %1757 = vmatpush1.msra.mxu0 %v1150
      %1758 = vmatprep.subr.mxu0 0.0
      %1759 = vmatpush1.msra.mxu0 %v1151
      %1760 = vmatprep.subr.mxu0 0.0
      %1761 = vmatpush1.msra.mxu0 %v1152
      %1762 = vmatprep.subr.mxu0 0.0
      %1763 = vmatpush1.msra.mxu0 %v1153
      %1764 = vmatprep.subr.mxu0 0.0
      %1765 = vmatpush1.msra.mxu0 %v1154
      %1766 = vmatprep.subr.mxu0 0.0
      %1767 = vmatpush1.msra.mxu0 %v1155
      %1768 = vmatprep.subr.mxu0 0.0
      %1769 = vmatpush1.msra.mxu0 0.0
      %1770 = vmatprep.subr.mxu0 0.0
      %1771 = vmatpush1.msra.mxu0 0.0
      %1772 = vmatprep.subr.mxu0 0.0
      %1773 = vmatpush1.msra.mxu0 0.0
      %1774 = vmatprep.subr.mxu0 0.0
      %1775 = vmatpush1.msra.mxu0 0.0
      %1776 = vmatprep.subr.mxu0 0.0
      %1777 = vmatpush1.msra.mxu0 0.0
      %1778 = vmatprep.subr.mxu0 0.0
      %1779 = vmatpush1.msra.mxu0 0.0
      %1780 = vmatprep.subr.mxu0 0.0
      %1781 = vmatpush1.msra.mxu0 0.0
      %1782 = vmatprep.subr.mxu0 0.0
      %1783 = vmatpush1.msra.mxu0 0.0
      %1784 = vmatprep.subr.mxu0 0.0
      %1785 = vmatpush1.msra.mxu0 0.0
      %1786 = vmatprep.subr.mxu0 0.0
      %1787 = vmatpush1.msra.mxu0 0.0
      %1788 = vmatprep.subr.mxu0 0.0
      %1789 = vmatpush1.msra.mxu0 0.0
      %1790 = vmatprep.subr.mxu0 0.0
      %1791 = vmatpush1.msra.mxu0 0.0
      %1792 = vmatprep.subr.mxu0 0.0
      %1793 = vmatpush1.msra.mxu0 0.0
      %1794 = vmatprep.subr.mxu0 0.0
      %1795 = vmatpush1.msra.mxu0 0.0
      %1796 = vmatprep.subr.mxu0 0.0
      %1797 = vmatpush1.msra.mxu0 0.0
      %1798 = vmatprep.subr.mxu0 0.0
      %1799 = vmatpush1.msra.mxu0 0.0
      %1800 = vmatprep.mubr.f32.mxu0 0.0
      %1801 = vmatmul.mubr.f32.gmra.mrb[0].mxu0 %v876
      %v1802 = vpop.f32.mrb[0].mxu0
      %v1803 = vadd.f32 %v1658, %v1802
      %v1804 = vpop.f32.mrb[0].mxu0
      %1805 = vmatprep.mubr.f32.mxu0 0.0
      %1806 = vmatmul.mubr.f32.gmra.mrb[0].mxu0 %v885
      %v1807 = vpop.f32.mrb[0].mxu0
      %v1808 = vadd.f32 %v1663, %v1807
      %v1809 = vpop.f32.mrb[0].mxu0
      %1810 = vmatprep.mubr.f32.mxu0 0.0
      %1811 = vmatmul.mubr.f32.gmra.mrb[0].mxu0 %v894
      %v1812 = vpop.f32.mrb[0].mxu0
      %v1813 = vadd.f32 %v1668, %v1812
      %v1814 = vpop.f32.mrb[0].mxu0
      %1815 = vmatprep.mubr.f32.mxu0 0.0
      %1816 = vmatmul.mubr.f32.gmra.mrb[0].mxu0 %v903
      %v1817 = vpop.f32.mrb[0].mxu0
      %v1818 = vadd.f32 %v1673, %v1817
      %v1819 = vpop.f32.mrb[0].mxu0
      %1820 = vmatprep.mubr.f32.mxu0 0.0
      %1821 = vmatmul.mubr.f32.gmra.mrb[0].mxu0 %v912
      %v1822 = vpop.f32.mrb[0].mxu0
      %v1823 = vadd.f32 %v1678, %v1822
      %v1824 = vpop.f32.mrb[0].mxu0
      %1825 = vmatprep.mubr.f32.mxu0 0.0
      %1826 = vmatmul.mubr.f32.gmra.mrb[0].mxu0 %v921
      %v1827 = vpop.f32.mrb[0].mxu0
      %v1828 = vadd.f32 %v1683, %v1827
      %v1829 = vpop.f32.mrb[0].mxu0
      %1830 = vmatprep.mubr.f32.mxu0 0.0
      %1831 = vmatmul.mubr.f32.gmra.mrb[0].mxu0 %v930
      %v1832 = vpop.f32.mrb[0].mxu0
      %v1833 = vadd.f32 %v1688, %v1832
      %v1834 = vpop.f32.mrb[0].mxu0
      %1835 = vmatprep.mubr.f32.mxu0 0.0
      %1836 = vmatmul.mubr.f32.gmra.mrb[0].mxu0 %v939
      %v1837 = vpop.f32.mrb[0].mxu0
      %v1838 = vadd.f32 %v1693, %v1837
      %v1839 = vpop.f32.mrb[0].mxu0
      %1840 = vmatprep.mubr.f32.mxu0 0.0
      %1841 = vmatmul.mubr.f32.gmra.mrb[0].mxu0 %v948
      %v1842 = vpop.f32.mrb[0].mxu0
      %v1843 = vadd.f32 %v1698, %v1842
      %v1844 = vpop.f32.mrb[0].mxu0
      %1845 = vmatprep.mubr.f32.mxu0 0.0
      %1846 = vmatmul.mubr.f32.gmra.mrb[0].mxu0 %v957
      %v1847 = vpop.f32.mrb[0].mxu0
      %v1848 = vadd.f32 %v1703, %v1847
      %v1849 = vpop.f32.mrb[0].mxu0
      %1850 = vmatprep.mubr.f32.mxu0 0.0
      %1851 = vmatmul.mubr.f32.gmra.mrb[0].mxu0 %v966
      %v1852 = vpop.f32.mrb[0].mxu0
      %v1853 = vadd.f32 %v1708, %v1852
      %v1854 = vpop.f32.mrb[0].mxu0
      %1855 = vmatprep.mubr.f32.mxu0 0.0
      %1856 = vmatmul.mubr.f32.gmra.mrb[0].mxu0 %v975
      %v1857 = vpop.f32.mrb[0].mxu0
      %v1858 = vadd.f32 %v1713, %v1857
      %v1859 = vpop.f32.mrb[0].mxu0
      %1860 = vmatprep.mubr.f32.mxu0 0.0
      %1861 = vmatmul.mubr.f32.gmra.mrb[0].mxu0 %v984
      %v1862 = vpop.f32.mrb[0].mxu0
      %v1863 = vadd.f32 %v1718, %v1862
      %v1864 = vpop.f32.mrb[0].mxu0
      %1865 = vmatprep.mubr.f32.mxu0 0.0
      %1866 = vmatmul.mubr.f32.gmra.mrb[0].mxu0 %v993
      %v1867 = vpop.f32.mrb[0].mxu0
      %v1868 = vadd.f32 %v1723, %v1867
      %v1869 = vpop.f32.mrb[0].mxu0
      %1870 = vmatprep.mubr.f32.mxu0 0.0
      %1871 = vmatmul.mubr.f32.gmra.mrb[0].mxu0 %v1002
      %v1872 = vpop.f32.mrb[0].mxu0
      %v1873 = vadd.f32 %v1728, %v1872
      %v1874 = vpop.f32.mrb[0].mxu0
      %1875 = vmatprep.mubr.f32.mxu0 0.0
      %1876 = vmatmul.mubr.f32.gmra.mrb[0].mxu0 %v1011
      %v1877 = vpop.f32.mrb[0].mxu0
      %v1878 = vadd.f32 %v1733, %v1877
      %v1879 = vpop.f32.mrb[0].mxu0
      %1880 = vdwg.mxu0
      %v1881 = vlaneseq
      %v1882 = vand.u32 %v1881, 127
      %vm1883 = vcmp.ge.s32.totalorder %v1882, 32
      %vm1884 = vcmp.lt.s32.totalorder %v1882, 64
      %vm1885 = vmand %vm1883, %vm1884
      %vm1886 = vcmp.ge.s32.totalorder %v1882, 64
      %vm1887 = vcmp.lt.s32.totalorder %v1882, 96
      %vm1888 = vmand %vm1886, %vm1887
      %v1889 = vsel %vm1885, 1.0, 0.0
      %v1890 = vadd.f32 %v1803, %v1889
      %v1891 = vadd.f32 %v1808, %v1889
      %v1892 = vadd.f32 %v1813, %v1889
      %v1893 = vadd.f32 %v1818, %v1889
      %v1894 = vadd.f32 %v1823, %v1889
      %v1895 = vadd.f32 %v1828, %v1889
      %v1896 = vadd.f32 %v1833, %v1889
      %v1897 = vadd.f32 %v1838, %v1889
      %v1898 = vadd.f32 %v1843, %v1889
      %v1899 = vadd.f32 %v1848, %v1889
      %v1900 = vadd.f32 %v1853, %v1889
      %v1901 = vadd.f32 %v1858, %v1889
      %v1902 = vadd.f32 %v1863, %v1889
      %v1903 = vadd.f32 %v1868, %v1889
      %v1904 = vadd.f32 %v1873, %v1889
      %v1905 = vadd.f32 %v1878, %v1889
      %v1906 = vxor.u32 %v1890, 2147483648
      %v1907 = vxor.u32 %v1891, 2147483648
      %v1908 = vxor.u32 %v1892, 2147483648
      %v1909 = vxor.u32 %v1893, 2147483648
      %v1910 = vxor.u32 %v1894, 2147483648
      %v1911 = vxor.u32 %v1895, 2147483648
      %v1912 = vxor.u32 %v1896, 2147483648
      %v1913 = vxor.u32 %v1897, 2147483648
      %v1914 = vxor.u32 %v1898, 2147483648
      %v1915 = vxor.u32 %v1899, 2147483648
      %v1916 = vxor.u32 %v1900, 2147483648
      %v1917 = vxor.u32 %v1901, 2147483648
      %v1918 = vxor.u32 %v1902, 2147483648
      %v1919 = vxor.u32 %v1903, 2147483648
      %v1920 = vxor.u32 %v1904, 2147483648
      %v1921 = vxor.u32 %v1905, 2147483648
      %v1922 = vmul.f32 %v1906, 1.442695
      %v1923 = vpow.pop %v1922
      %v1924 = vmul.f32 %v1907, 1.442695
      %v1925 = vpow.pop %v1924
      %v1926 = vmul.f32 %v1908, 1.442695
      %v1927 = vpow.pop %v1926
      %v1928 = vmul.f32 %v1909, 1.442695
      %v1929 = vpow.pop %v1928
      %v1930 = vmul.f32 %v1910, 1.442695
      %v1931 = vpow.pop %v1930
      %v1932 = vmul.f32 %v1911, 1.442695
      %v1933 = vpow.pop %v1932
      %v1934 = vmul.f32 %v1912, 1.442695
      %v1935 = vpow.pop %v1934
      %v1936 = vmul.f32 %v1913, 1.442695
      %v1937 = vpow.pop %v1936
      %v1938 = vmul.f32 %v1914, 1.442695
      %v1939 = vpow.pop %v1938
      %v1940 = vmul.f32 %v1915, 1.442695
      %v1941 = vpow.pop %v1940
      %v1942 = vmul.f32 %v1916, 1.442695
      %v1943 = vpow.pop %v1942
      %v1944 = vmul.f32 %v1917, 1.442695
      %v1945 = vpow.pop %v1944
      %v1946 = vmul.f32 %v1918, 1.442695
      %v1947 = vpow.pop %v1946
      %v1948 = vmul.f32 %v1919, 1.442695
      %v1949 = vpow.pop %v1948
      %v1950 = vmul.f32 %v1920, 1.442695
      %v1951 = vpow.pop %v1950
      %v1952 = vmul.f32 %v1921, 1.442695
      %v1953 = vpow.pop %v1952
      %v1954 = vadd.f32 %v1923, 1.0
      %v1955 = vadd.f32 %v1925, 1.0
      %v1956 = vadd.f32 %v1927, 1.0
      %v1957 = vadd.f32 %v1929, 1.0
      %v1958 = vadd.f32 %v1931, 1.0
      %v1959 = vadd.f32 %v1933, 1.0
      %v1960 = vadd.f32 %v1935, 1.0
      %v1961 = vadd.f32 %v1937, 1.0
      %v1962 = vadd.f32 %v1939, 1.0
      %v1963 = vadd.f32 %v1941, 1.0
      %v1964 = vadd.f32 %v1943, 1.0
      %v1965 = vadd.f32 %v1945, 1.0
      %v1966 = vadd.f32 %v1947, 1.0
      %v1967 = vadd.f32 %v1949, 1.0
      %v1968 = vadd.f32 %v1951, 1.0
      %v1969 = vadd.f32 %v1953, 1.0
      %v1970 = vrcp.pop %v1954
      %v1971 = vmul.f32 1.0, %v1970
      %v1972 = vrcp.pop %v1955
      %v1973 = vmul.f32 1.0, %v1972
      %v1974 = vrcp.pop %v1956
      %v1975 = vmul.f32 1.0, %v1974
      %v1976 = vrcp.pop %v1957
      %v1977 = vmul.f32 1.0, %v1976
      %v1978 = vrcp.pop %v1958
      %v1979 = vmul.f32 1.0, %v1978
      %v1980 = vrcp.pop %v1959
      %v1981 = vmul.f32 1.0, %v1980
      %v1982 = vrcp.pop %v1960
      %v1983 = vmul.f32 1.0, %v1982
      %v1984 = vrcp.pop %v1961
      %v1985 = vmul.f32 1.0, %v1984
      %v1986 = vrcp.pop %v1962
      %v1987 = vmul.f32 1.0, %v1986
      %v1988 = vrcp.pop %v1963
      %v1989 = vmul.f32 1.0, %v1988
      %v1990 = vrcp.pop %v1964
      %v1991 = vmul.f32 1.0, %v1990
      %v1992 = vrcp.pop %v1965
      %v1993 = vmul.f32 1.0, %v1992
      %v1994 = vrcp.pop %v1966
      %v1995 = vmul.f32 1.0, %v1994
      %v1996 = vrcp.pop %v1967
      %v1997 = vmul.f32 1.0, %v1996
      %v1998 = vrcp.pop %v1968
      %v1999 = vmul.f32 1.0, %v1998
      %v2000 = vrcp.pop %v1969
      %v2001 = vmul.f32 1.0, %v2000
      %v2002 = vtanh.pop %v1803
      %v2003 = vtanh.pop %v1808
      %v2004 = vtanh.pop %v1813
      %v2005 = vtanh.pop %v1818
      %v2006 = vtanh.pop %v1823
      %v2007 = vtanh.pop %v1828
      %v2008 = vtanh.pop %v1833
      %v2009 = vtanh.pop %v1838
      %v2010 = vtanh.pop %v1843
      %v2011 = vtanh.pop %v1848
      %v2012 = vtanh.pop %v1853
      %v2013 = vtanh.pop %v1858
      %v2014 = vtanh.pop %v1863
      %v2015 = vtanh.pop %v1868
      %v2016 = vtanh.pop %v1873
      %v2017 = vtanh.pop %v1878
      %v2018 = vsel %vm1888, %v2002, %v1971
      %v2019 = vsel %vm1888, %v2003, %v1973
      %v2020 = vsel %vm1888, %v2004, %v1975
      %v2021 = vsel %vm1888, %v2005, %v1977
      %v2022 = vsel %vm1888, %v2006, %v1979
      %v2023 = vsel %vm1888, %v2007, %v1981
      %v2024 = vsel %vm1888, %v2008, %v1983
      %v2025 = vsel %vm1888, %v2009, %v1985
      %v2026 = vsel %vm1888, %v2010, %v1987
      %v2027 = vsel %vm1888, %v2011, %v1989
      %v2028 = vsel %vm1888, %v2012, %v1991
      %v2029 = vsel %vm1888, %v2013, %v1993
      %v2030 = vsel %vm1888, %v2014, %v1995
      %v2031 = vsel %vm1888, %v2015, %v1997
      %v2032 = vsel %vm1888, %v2016, %v1999
      %v2033 = vsel %vm1888, %v2017, %v2001
      %v2034 = vld [vmem:[#allocation4] sm:$0xff]
      %v2035 = vld [vmem:[#allocation4 + $0x8] sm:$0xff]
      %v2036 = vld [vmem:[#allocation4 + $0x10] sm:$0xff]
      %v2037 = vld [vmem:[#allocation4 + $0x18] sm:$0xff]
      %v2038 = vld [vmem:[#allocation4 + $0x20] sm:$0xff]
      %v2039 = vld [vmem:[#allocation4 + $0x28] sm:$0xff]
      %v2040 = vld [vmem:[#allocation4 + $0x30] sm:$0xff]
      %v2041 = vld [vmem:[#allocation4 + $0x38] sm:$0xff]
      %v2042 = vld [vmem:[#allocation4 + $0x40] sm:$0xff]
      %v2043 = vld [vmem:[#allocation4 + $0x48] sm:$0xff]
      %v2044 = vld [vmem:[#allocation4 + $0x50] sm:$0xff]
      %v2045 = vld [vmem:[#allocation4 + $0x58] sm:$0xff]
      %v2046 = vld [vmem:[#allocation4 + $0x60] sm:$0xff]
      %v2047 = vld [vmem:[#allocation4 + $0x68] sm:$0xff]
      %v2048 = vld [vmem:[#allocation4 + $0x70] sm:$0xff]
      %v2049 = vld [vmem:[#allocation4 + $0x78] sm:$0xff]
      %2066 = vrot.lane.b32.xlu0 %v2034, 32
      %v2067 = vpop.permute.xlu0 %2066
      %2068 = vrot.lane.b32.xlu0 %v2035, 32
      %v2069 = vpop.permute.xlu0 %2068
      %2070 = vrot.lane.b32.xlu0 %v2036, 32
      %v2071 = vpop.permute.xlu0 %2070
      %2072 = vrot.lane.b32.xlu0 %v2037, 32
      %v2073 = vpop.permute.xlu0 %2072
      %2074 = vrot.lane.b32.xlu0 %v2038, 32
      %v2075 = vpop.permute.xlu0 %2074
      %2076 = vrot.lane.b32.xlu0 %v2039, 32
      %v2077 = vpop.permute.xlu0 %2076
      %2078 = vrot.lane.b32.xlu0 %v2040, 32
      %v2079 = vpop.permute.xlu0 %2078
      %2080 = vrot.lane.b32.xlu0 %v2041, 32
      %v2081 = vpop.permute.xlu0 %2080
      %2082 = vrot.lane.b32.xlu0 %v2042, 32
      %v2083 = vpop.permute.xlu0 %2082
      %2084 = vrot.lane.b32.xlu0 %v2043, 32
      %v2085 = vpop.permute.xlu0 %2084
      %2086 = vrot.lane.b32.xlu0 %v2044, 32
      %v2087 = vpop.permute.xlu0 %2086
      %2088 = vrot.lane.b32.xlu0 %v2045, 32
      %v2089 = vpop.permute.xlu0 %2088
      %2090 = vrot.lane.b32.xlu0 %v2046, 32
      %v2091 = vpop.permute.xlu0 %2090
      %2092 = vrot.lane.b32.xlu0 %v2047, 32
      %v2093 = vpop.permute.xlu0 %2092
      %2094 = vrot.lane.b32.xlu0 %v2048, 32
      %v2095 = vpop.permute.xlu0 %2094
      %2096 = vrot.lane.b32.xlu0 %v2049, 32
      %v2097 = vpop.permute.xlu0 %2096
      %v2114 = vmul.f32 %v2018, %v2067
      %v2115 = vmul.f32 %v2019, %v2069
      %v2116 = vmul.f32 %v2020, %v2071
      %v2117 = vmul.f32 %v2021, %v2073
      %v2118 = vmul.f32 %v2022, %v2075
      %v2119 = vmul.f32 %v2023, %v2077
      %v2120 = vmul.f32 %v2024, %v2079
      %v2121 = vmul.f32 %v2025, %v2081
      %v2122 = vmul.f32 %v2026, %v2083
      %v2123 = vmul.f32 %v2027, %v2085
      %v2124 = vmul.f32 %v2028, %v2087
      %v2125 = vmul.f32 %v2029, %v2089
      %v2126 = vmul.f32 %v2030, %v2091
      %v2127 = vmul.f32 %v2031, %v2093
      %v2128 = vmul.f32 %v2032, %v2095
      %v2129 = vmul.f32 %v2033, %v2097
      %2146 = vrot.lane.b32.xlu0 %v2018, 64
      %v2147 = vpop.permute.xlu0 %2146
      %2148 = vrot.lane.b32.xlu0 %v2019, 64
      %v2149 = vpop.permute.xlu0 %2148
      %2150 = vrot.lane.b32.xlu0 %v2020, 64
      %v2151 = vpop.permute.xlu0 %2150
      %2152 = vrot.lane.b32.xlu0 %v2021, 64
      %v2153 = vpop.permute.xlu0 %2152
      %2154 = vrot.lane.b32.xlu0 %v2022, 64
      %v2155 = vpop.permute.xlu0 %2154
      %2156 = vrot.lane.b32.xlu0 %v2023, 64
      %v2157 = vpop.permute.xlu0 %2156
      %2158 = vrot.lane.b32.xlu0 %v2024, 64
      %v2159 = vpop.permute.xlu0 %2158
      %2160 = vrot.lane.b32.xlu0 %v2025, 64
      %v2161 = vpop.permute.xlu0 %2160
      %2162 = vrot.lane.b32.xlu0 %v2026, 64
      %v2163 = vpop.permute.xlu0 %2162
      %2164 = vrot.lane.b32.xlu0 %v2027, 64
      %v2165 = vpop.permute.xlu0 %2164
      %2166 = vrot.lane.b32.xlu0 %v2028, 64
      %v2167 = vpop.permute.xlu0 %2166
      %2168 = vrot.lane.b32.xlu0 %v2029, 64
      %v2169 = vpop.permute.xlu0 %2168
      %2170 = vrot.lane.b32.xlu0 %v2030, 64
      %v2171 = vpop.permute.xlu0 %2170
      %2172 = vrot.lane.b32.xlu0 %v2031, 64
      %v2173 = vpop.permute.xlu0 %2172
      %2174 = vrot.lane.b32.xlu0 %v2032, 64
      %v2175 = vpop.permute.xlu0 %2174
      %2176 = vrot.lane.b32.xlu0 %v2033, 64
      %v2177 = vpop.permute.xlu0 %2176
      %v2194 = vmul.f32 %v2018, %v2147
      %v2195 = vmul.f32 %v2019, %v2149
      %v2196 = vmul.f32 %v2020, %v2151
      %v2197 = vmul.f32 %v2021, %v2153
      %v2198 = vmul.f32 %v2022, %v2155
      %v2199 = vmul.f32 %v2023, %v2157
      %v2200 = vmul.f32 %v2024, %v2159
      %v2201 = vmul.f32 %v2025, %v2161
      %v2202 = vmul.f32 %v2026, %v2163
      %v2203 = vmul.f32 %v2027, %v2165
      %v2204 = vmul.f32 %v2028, %v2167
      %v2205 = vmul.f32 %v2029, %v2169
      %v2206 = vmul.f32 %v2030, %v2171
      %v2207 = vmul.f32 %v2031, %v2173
      %v2208 = vmul.f32 %v2032, %v2175
      %v2209 = vmul.f32 %v2033, %v2177
      %2226 = vrot.lane.b32.xlu0 %v2194, 32
      %v2227 = vpop.permute.xlu0 %2226
      %2228 = vrot.lane.b32.xlu0 %v2195, 32
      %v2229 = vpop.permute.xlu0 %2228
      %2230 = vrot.lane.b32.xlu0 %v2196, 32
      %v2231 = vpop.permute.xlu0 %2230
      %2232 = vrot.lane.b32.xlu0 %v2197, 32
      %v2233 = vpop.permute.xlu0 %2232
      %2234 = vrot.lane.b32.xlu0 %v2198, 32
      %v2235 = vpop.permute.xlu0 %2234
      %2236 = vrot.lane.b32.xlu0 %v2199, 32
      %v2237 = vpop.permute.xlu0 %2236
      %2238 = vrot.lane.b32.xlu0 %v2200, 32
      %v2239 = vpop.permute.xlu0 %2238
      %2240 = vrot.lane.b32.xlu0 %v2201, 32
      %v2241 = vpop.permute.xlu0 %2240
      %2242 = vrot.lane.b32.xlu0 %v2202, 32
      %v2243 = vpop.permute.xlu0 %2242
      %2244 = vrot.lane.b32.xlu0 %v2203, 32
      %v2245 = vpop.permute.xlu0 %2244
      %2246 = vrot.lane.b32.xlu0 %v2204, 32
      %v2247 = vpop.permute.xlu0 %2246
      %2248 = vrot.lane.b32.xlu0 %v2205, 32
      %v2249 = vpop.permute.xlu0 %2248
      %2250 = vrot.lane.b32.xlu0 %v2206, 32
      %v2251 = vpop.permute.xlu0 %2250
      %2252 = vrot.lane.b32.xlu0 %v2207, 32
      %v2253 = vpop.permute.xlu0 %2252
      %2254 = vrot.lane.b32.xlu0 %v2208, 32
      %v2255 = vpop.permute.xlu0 %2254
      %2256 = vrot.lane.b32.xlu0 %v2209, 32
      %v2257 = vpop.permute.xlu0 %2256
      %v2274 = vadd.f32 %v2114, %v2227
      %v2275 = vadd.f32 %v2115, %v2229
      %v2276 = vadd.f32 %v2116, %v2231
      %v2277 = vadd.f32 %v2117, %v2233
      %v2278 = vadd.f32 %v2118, %v2235
      %v2279 = vadd.f32 %v2119, %v2237
      %v2280 = vadd.f32 %v2120, %v2239
      %v2281 = vadd.f32 %v2121, %v2241
      %v2282 = vadd.f32 %v2122, %v2243
      %v2283 = vadd.f32 %v2123, %v2245
      %v2284 = vadd.f32 %v2124, %v2247
      %v2285 = vadd.f32 %v2125, %v2249
      %v2286 = vadd.f32 %v2126, %v2251
      %v2287 = vadd.f32 %v2127, %v2253
      %v2288 = vadd.f32 %v2128, %v2255
      %v2289 = vadd.f32 %v2129, %v2257
      %v2290 = vtanh.pop %v2274
      %v2291 = vtanh.pop %v2275
      %v2292 = vtanh.pop %v2276
      %v2293 = vtanh.pop %v2277
      %v2294 = vtanh.pop %v2278
      %v2295 = vtanh.pop %v2279
      %v2296 = vtanh.pop %v2280
      %v2297 = vtanh.pop %v2281
      %v2298 = vtanh.pop %v2282
      %v2299 = vtanh.pop %v2283
      %v2300 = vtanh.pop %v2284
      %v2301 = vtanh.pop %v2285
      %v2302 = vtanh.pop %v2286
      %v2303 = vtanh.pop %v2287
      %v2304 = vtanh.pop %v2288
      %v2305 = vtanh.pop %v2289
      %2322 = vrot.lane.b32.xlu0 %v2290, 64
      %v2323 = vpop.permute.xlu0 %2322
      %2324 = vrot.lane.b32.xlu0 %v2291, 64
      %v2325 = vpop.permute.xlu0 %2324
      %2326 = vrot.lane.b32.xlu0 %v2292, 64
      %v2327 = vpop.permute.xlu0 %2326
      %2328 = vrot.lane.b32.xlu0 %v2293, 64
      %v2329 = vpop.permute.xlu0 %2328
      %2330 = vrot.lane.b32.xlu0 %v2294, 64
      %v2331 = vpop.permute.xlu0 %2330
      %2332 = vrot.lane.b32.xlu0 %v2295, 64
      %v2333 = vpop.permute.xlu0 %2332
      %2334 = vrot.lane.b32.xlu0 %v2296, 64
      %v2335 = vpop.permute.xlu0 %2334
      %2336 = vrot.lane.b32.xlu0 %v2297, 64
      %v2337 = vpop.permute.xlu0 %2336
      %2338 = vrot.lane.b32.xlu0 %v2298, 64
      %v2339 = vpop.permute.xlu0 %2338
      %2340 = vrot.lane.b32.xlu0 %v2299, 64
      %v2341 = vpop.permute.xlu0 %2340
      %2342 = vrot.lane.b32.xlu0 %v2300, 64
      %v2343 = vpop.permute.xlu0 %2342
      %2344 = vrot.lane.b32.xlu0 %v2301, 64
      %v2345 = vpop.permute.xlu0 %2344
      %2346 = vrot.lane.b32.xlu0 %v2302, 64
      %v2347 = vpop.permute.xlu0 %2346
      %2348 = vrot.lane.b32.xlu0 %v2303, 64
      %v2349 = vpop.permute.xlu0 %2348
      %2350 = vrot.lane.b32.xlu0 %v2304, 64
      %v2351 = vpop.permute.xlu0 %2350
      %2352 = vrot.lane.b32.xlu0 %v2305, 64
      %v2353 = vpop.permute.xlu0 %2352
      %v2370 = vmul.f32 %v2018, %v2323
      %v2371 = vmul.f32 %v2019, %v2325
      %v2372 = vmul.f32 %v2020, %v2327
      %v2373 = vmul.f32 %v2021, %v2329
      %v2374 = vmul.f32 %v2022, %v2331
      %v2375 = vmul.f32 %v2023, %v2333
      %v2376 = vmul.f32 %v2024, %v2335
      %v2377 = vmul.f32 %v2025, %v2337
      %v2378 = vmul.f32 %v2026, %v2339
      %v2379 = vmul.f32 %v2027, %v2341
      %v2380 = vmul.f32 %v2028, %v2343
      %v2381 = vmul.f32 %v2029, %v2345
      %v2382 = vmul.f32 %v2030, %v2347
      %v2383 = vmul.f32 %v2031, %v2349
      %v2384 = vmul.f32 %v2032, %v2351
      %v2385 = vmul.f32 %v2033, %v2353
      %2402 = vrot.lane.b32.xlu0 %v2274, 96
      %v2403 = vpop.permute.xlu0 %2402
      %2404 = vrot.lane.b32.xlu0 %v2275, 96
      %v2405 = vpop.permute.xlu0 %2404
      %2406 = vrot.lane.b32.xlu0 %v2276, 96
      %v2407 = vpop.permute.xlu0 %2406
      %2408 = vrot.lane.b32.xlu0 %v2277, 96
      %v2409 = vpop.permute.xlu0 %2408
      %2410 = vrot.lane.b32.xlu0 %v2278, 96
      %v2411 = vpop.permute.xlu0 %2410
      %2412 = vrot.lane.b32.xlu0 %v2279, 96
      %v2413 = vpop.permute.xlu0 %2412
      %2414 = vrot.lane.b32.xlu0 %v2280, 96
      %v2415 = vpop.permute.xlu0 %2414
      %2416 = vrot.lane.b32.xlu0 %v2281, 96
      %v2417 = vpop.permute.xlu0 %2416
      %2418 = vrot.lane.b32.xlu0 %v2282, 96
      %v2419 = vpop.permute.xlu0 %2418
      %2420 = vrot.lane.b32.xlu0 %v2283, 96
      %v2421 = vpop.permute.xlu0 %2420
      %2422 = vrot.lane.b32.xlu0 %v2284, 96
      %v2423 = vpop.permute.xlu0 %2422
      %2424 = vrot.lane.b32.xlu0 %v2285, 96
      %v2425 = vpop.permute.xlu0 %2424
      %2426 = vrot.lane.b32.xlu0 %v2286, 96
      %v2427 = vpop.permute.xlu0 %2426
      %2428 = vrot.lane.b32.xlu0 %v2287, 96
      %v2429 = vpop.permute.xlu0 %2428
      %2430 = vrot.lane.b32.xlu0 %v2288, 96
      %v2431 = vpop.permute.xlu0 %2430
      %2432 = vrot.lane.b32.xlu0 %v2289, 96
      %v2433 = vpop.permute.xlu0 %2432
      %vm2450 = vcmask 261120
      %2451 = vst.msk [vmem:[#allocation4] sm:$0xff] %vm2450, %v2403
      %2452 = vst.msk [vmem:[#allocation4 + $0x8] sm:$0xff] %vm2450, %v2405
      %2453 = vst.msk [vmem:[#allocation4 + $0x10] sm:$0xff] %vm2450, %v2407
      %2454 = vst.msk [vmem:[#allocation4 + $0x18] sm:$0xff] %vm2450, %v2409
      %2455 = vst.msk [vmem:[#allocation4 + $0x20] sm:$0xff] %vm2450, %v2411
      %2456 = vst.msk [vmem:[#allocation4 + $0x28] sm:$0xff] %vm2450, %v2413
      %2457 = vst.msk [vmem:[#allocation4 + $0x30] sm:$0xff] %vm2450, %v2415
      %2458 = vst.msk [vmem:[#allocation4 + $0x38] sm:$0xff] %vm2450, %v2417
      %2459 = vst.msk [vmem:[#allocation4 + $0x40] sm:$0xff] %vm2450, %v2419
      %2460 = vst.msk [vmem:[#allocation4 + $0x48] sm:$0xff] %vm2450, %v2421
      %2461 = vst.msk [vmem:[#allocation4 + $0x50] sm:$0xff] %vm2450, %v2423
      %2462 = vst.msk [vmem:[#allocation4 + $0x58] sm:$0xff] %vm2450, %v2425
      %2463 = vst.msk [vmem:[#allocation4 + $0x60] sm:$0xff] %vm2450, %v2427
      %2464 = vst.msk [vmem:[#allocation4 + $0x68] sm:$0xff] %vm2450, %v2429
      %2465 = vst.msk [vmem:[#allocation4 + $0x70] sm:$0xff] %vm2450, %v2431
      %2466 = vst.msk [vmem:[#allocation4 + $0x78] sm:$0xff] %vm2450, %v2433
      %2483 = vrot.lane.b32.xlu0 %v2370, 36
      %v2484 = vpop.permute.xlu0 %2483
      %2485 = vrot.lane.b32.xlu0 %v2371, 36
      %v2486 = vpop.permute.xlu0 %2485
      %2487 = vrot.lane.b32.xlu0 %v2372, 36
      %v2488 = vpop.permute.xlu0 %2487
      %2489 = vrot.lane.b32.xlu0 %v2373, 36
      %v2490 = vpop.permute.xlu0 %2489
      %2491 = vrot.lane.b32.xlu0 %v2374, 36
      %v2492 = vpop.permute.xlu0 %2491
      %2493 = vrot.lane.b32.xlu0 %v2375, 36
      %v2494 = vpop.permute.xlu0 %2493
      %2495 = vrot.lane.b32.xlu0 %v2376, 36
      %v2496 = vpop.permute.xlu0 %2495
      %2497 = vrot.lane.b32.xlu0 %v2377, 36
      %v2498 = vpop.permute.xlu0 %2497
      %2499 = vrot.lane.b32.xlu0 %v2378, 36
      %v2500 = vpop.permute.xlu0 %2499
      %2501 = vrot.lane.b32.xlu0 %v2379, 36
      %v2502 = vpop.permute.xlu0 %2501
      %2503 = vrot.lane.b32.xlu0 %v2380, 36
      %v2504 = vpop.permute.xlu0 %2503
      %2505 = vrot.lane.b32.xlu0 %v2381, 36
      %v2506 = vpop.permute.xlu0 %2505
      %2507 = vrot.lane.b32.xlu0 %v2382, 36
      %v2508 = vpop.permute.xlu0 %2507
      %2509 = vrot.lane.b32.xlu0 %v2383, 36
      %v2510 = vpop.permute.xlu0 %2509
      %2511 = vrot.lane.b32.xlu0 %v2384, 36
      %v2512 = vpop.permute.xlu0 %2511
      %2513 = vrot.lane.b32.xlu0 %v2385, 36
      %v2514 = vpop.permute.xlu0 %2513
      %vm2531 = vcmask 293920
      %2532 = vst.msk [vmem:[%s464 + $0x1] sm:$0xff] %vm2531, %v2484
      %2533 = vst.msk [vmem:[%s464 + $0x11] sm:$0xff] %vm2531, %v2486
      %2534 = vst.msk [vmem:[%s464 + $0x21] sm:$0xff] %vm2531, %v2488
      %2535 = vst.msk [vmem:[%s464 + $0x31] sm:$0xff] %vm2531, %v2490
      %2536 = vst.msk [vmem:[%s464 + $0x41] sm:$0xff] %vm2531, %v2492
      %2537 = vst.msk [vmem:[%s464 + $0x51] sm:$0xff] %vm2531, %v2494
      %2538 = vst.msk [vmem:[%s464 + $0x61] sm:$0xff] %vm2531, %v2496
      %2539 = vst.msk [vmem:[%s464 + $0x71] sm:$0xff] %vm2531, %v2498
      %2540 = vst.msk [vmem:[%s464 + $0xa1] sm:$0xff] %vm2531, %v2500
      %2541 = vst.msk [vmem:[%s464 + $0xb1] sm:$0xff] %vm2531, %v2502
      %2542 = vst.msk [vmem:[%s464 + $0xc1] sm:$0xff] %vm2531, %v2504
      %2543 = vst.msk [vmem:[%s464 + $0xd1] sm:$0xff] %vm2531, %v2506
      %2544 = vst.msk [vmem:[%s464 + $0xe1] sm:$0xff] %vm2531, %v2508
      %2545 = vst.msk [vmem:[%s464 + $0xf1] sm:$0xff] %vm2531, %v2510
      %2546 = vst.msk [vmem:[%s464 + $0x101] sm:$0xff] %vm2531, %v2512
      %2547 = vst.msk [vmem:[%s464 + $0x111] sm:$0xff] %vm2531, %v2514
      %2548 = vrot.lane.b32.xlu0 %v2370, 32
      %v2549 = vpop.permute.xlu0 %2548
      %2550 = vrot.lane.b32.xlu0 %v2371, 32
      %v2551 = vpop.permute.xlu0 %2550
      %2552 = vrot.lane.b32.xlu0 %v2372, 32
      %v2553 = vpop.permute.xlu0 %2552
      %2554 = vrot.lane.b32.xlu0 %v2373, 32
      %v2555 = vpop.permute.xlu0 %2554
      %2556 = vrot.lane.b32.xlu0 %v2374, 32
      %v2557 = vpop.permute.xlu0 %2556
      %2558 = vrot.lane.b32.xlu0 %v2375, 32
      %v2559 = vpop.permute.xlu0 %2558
      %2560 = vrot.lane.b32.xlu0 %v2376, 32
      %v2561 = vpop.permute.xlu0 %2560
      %2562 = vrot.lane.b32.xlu0 %v2377, 32
      %v2563 = vpop.permute.xlu0 %2562
      %2564 = vrot.lane.b32.xlu0 %v2378, 32
      %v2565 = vpop.permute.xlu0 %2564
      %2566 = vrot.lane.b32.xlu0 %v2379, 32
      %v2567 = vpop.permute.xlu0 %2566
      %2568 = vrot.lane.b32.xlu0 %v2380, 32
      %v2569 = vpop.permute.xlu0 %2568
      %2570 = vrot.lane.b32.xlu0 %v2381, 32
      %v2571 = vpop.permute.xlu0 %2570
      %2572 = vrot.lane.b32.xlu0 %v2382, 32
      %v2573 = vpop.permute.xlu0 %2572
      %2574 = vrot.lane.b32.xlu0 %v2383, 32
      %v2575 = vpop.permute.xlu0 %2574
      %2576 = vrot.lane.b32.xlu0 %v2384, 32
      %v2577 = vpop.permute.xlu0 %2576
      %2578 = vrot.lane.b32.xlu0 %v2385, 32
      %v2579 = vpop.permute.xlu0 %2578
      %s2596 = scalar_lea.vmem [#allocation3], 16
      %2597 = vst.msk [vmem:[%s2596 + $0x1] sm:$0xff] %vm2450, %v2549
      %2598 = vst.msk [vmem:[%s2596 + $0x11] sm:$0xff] %vm2450, %v2551
      %2599 = vst.msk [vmem:[%s2596 + $0x21] sm:$0xff] %vm2450, %v2553
      %2600 = vst.msk [vmem:[%s2596 + $0x31] sm:$0xff] %vm2450, %v2555
      %2601 = vst.msk [vmem:[%s2596 + $0x41] sm:$0xff] %vm2450, %v2557
      %2602 = vst.msk [vmem:[%s2596 + $0x51] sm:$0xff] %vm2450, %v2559
      %2603 = vst.msk [vmem:[%s2596 + $0x61] sm:$0xff] %vm2450, %v2561
      %2604 = vst.msk [vmem:[%s2596 + $0x71] sm:$0xff] %vm2450, %v2563
      %2605 = vst.msk [vmem:[%s2596 + $0xa1] sm:$0xff] %vm2450, %v2565
      %2606 = vst.msk [vmem:[%s2596 + $0xb1] sm:$0xff] %vm2450, %v2567
      %2607 = vst.msk [vmem:[%s2596 + $0xc1] sm:$0xff] %vm2450, %v2569
      %2608 = vst.msk [vmem:[%s2596 + $0xd1] sm:$0xff] %vm2450, %v2571
      %2609 = vst.msk [vmem:[%s2596 + $0xe1] sm:$0xff] %vm2450, %v2573
      %2610 = vst.msk [vmem:[%s2596 + $0xf1] sm:$0xff] %vm2450, %v2575
      %2611 = vst.msk [vmem:[%s2596 + $0x101] sm:$0xff] %vm2450, %v2577
      %2612 = vst.msk [vmem:[%s2596 + $0x111] sm:$0xff] %vm2450, %v2579
      %v2613 = vld [vmem:[#allocation3] sm:$0xff]
      %v2614 = vld [vmem:[#allocation3 + $0x8] sm:$0x3]
      %v2615 = vld [vmem:[#allocation3 + $0x10] sm:$0xff]
      %v2616 = vld [vmem:[#allocation3 + $0x18] sm:$0x3]
      %v2617 = vld [vmem:[#allocation3 + $0x20] sm:$0xff]
      %v2618 = vld [vmem:[#allocation3 + $0x28] sm:$0x3]
      %v2619 = vld [vmem:[#allocation3 + $0x30] sm:$0xff]
      %v2620 = vld [vmem:[#allocation3 + $0x38] sm:$0x3]
      %v2621 = vld [vmem:[#allocation3 + $0x40] sm:$0xff]
      %v2622 = vld [vmem:[#allocation3 + $0x48] sm:$0x3]
      %v2623 = vld [vmem:[#allocation3 + $0x50] sm:$0xff]
      %v2624 = vld [vmem:[#allocation3 + $0x58] sm:$0x3]
      %v2625 = vld [vmem:[#allocation3 + $0x60] sm:$0xff]
      %v2626 = vld [vmem:[#allocation3 + $0x68] sm:$0x3]
      %v2627 = vld [vmem:[#allocation3 + $0x70] sm:$0xff]
      %v2628 = vld [vmem:[#allocation3 + $0x78] sm:$0x3]
      %v2629 = vld [vmem:[#allocation3 + $0x80] sm:$0xff]
      %v2630 = vld [vmem:[#allocation3 + $0x88] sm:$0x3]
      %v2631 = vld [vmem:[#allocation3 + $0x90] sm:$0xff]
      %v2632 = vld [vmem:[#allocation3 + $0x98] sm:$0x3]
      %v2633 = vld [vmem:[#allocation3 + $0xa0] sm:$0xff]
      %v2634 = vld [vmem:[#allocation3 + $0xa8] sm:$0x3]
      %v2635 = vld [vmem:[#allocation3 + $0xb0] sm:$0xff]
      %v2636 = vld [vmem:[#allocation3 + $0xb8] sm:$0x3]
      %v2637 = vld [vmem:[#allocation3 + $0xc0] sm:$0xff]
      %v2638 = vld [vmem:[#allocation3 + $0xc8] sm:$0x3]
      %v2639 = vld [vmem:[#allocation3 + $0xd0] sm:$0xff]
      %v2640 = vld [vmem:[#allocation3 + $0xd8] sm:$0x3]
      %v2641 = vld [vmem:[#allocation3 + $0xe0] sm:$0xff]
      %v2642 = vld [vmem:[#allocation3 + $0xe8] sm:$0x3]
      %v2643 = vld [vmem:[#allocation3 + $0xf0] sm:$0xff]
      %v2644 = vld [vmem:[#allocation3 + $0xf8] sm:$0x3]
      %v2645 = vld [vmem:[#allocation3 + $0x100] sm:$0xff]
      %v2646 = vld [vmem:[#allocation3 + $0x108] sm:$0x3]
      %v2647 = vld [vmem:[#allocation3 + $0x110] sm:$0xff]
      %v2648 = vld [vmem:[#allocation3 + $0x118] sm:$0x3]
      %v2649 = vld [vmem:[#allocation3 + $0x120] sm:$0xff]
      %v2650 = vld [vmem:[#allocation3 + $0x128] sm:$0x3]
      %v2651 = vld [vmem:[#allocation3 + $0x130] sm:$0xff]
      %v2652 = vld [vmem:[#allocation3 + $0x138] sm:$0x3]
      %2653 = vst [vmem:[#allocation7] sm:$0xff] %v2613
      %2654 = vst [vmem:[#allocation7 + $0x48] sm:$0xff] %v2615
      %2655 = vst [vmem:[#allocation7 + $0x90] sm:$0xff] %v2617
      %2656 = vst [vmem:[#allocation7 + $0xd8] sm:$0xff] %v2619
      %2657 = vst [vmem:[#allocation7 + $0x120] sm:$0xff] %v2621
      %2658 = vst [vmem:[#allocation7 + $0x168] sm:$0xff] %v2623
      %2659 = vst [vmem:[#allocation7 + $0x1b0] sm:$0xff] %v2625
      %2660 = vst [vmem:[#allocation7 + $0x1f8] sm:$0xff] %v2627
      %2661 = vst [vmem:[#allocation7 + $0x240] sm:$0xff] %v2633
      %2662 = vst [vmem:[#allocation7 + $0x288] sm:$0xff] %v2635
      %2663 = vst [vmem:[#allocation7 + $0x2d0] sm:$0xff] %v2637
      %2664 = vst [vmem:[#allocation7 + $0x318] sm:$0xff] %v2639
      %2665 = vst [vmem:[#allocation7 + $0x360] sm:$0xff] %v2641
      %2666 = vst [vmem:[#allocation7 + $0x3a8] sm:$0xff] %v2643
      %2667 = vst [vmem:[#allocation7 + $0x3f0] sm:$0xff] %v2645
      %2668 = vst [vmem:[#allocation7 + $0x438] sm:$0xff] %v2647
      %v2701 = vrot.slane %v2613, 1
      %v2702 = vrot.slane %v2614, 1
      %v2703 = vsel %vm570, %v2701, %v2702
      %v2704 = vrot.slane %v2615, 1
      %v2705 = vrot.slane %v2616, 1
      %v2706 = vsel %vm570, %v2704, %v2705
      %v2707 = vrot.slane %v2617, 1
      %v2708 = vrot.slane %v2618, 1
      %v2709 = vsel %vm570, %v2707, %v2708
      %v2710 = vrot.slane %v2619, 1
      %v2711 = vrot.slane %v2620, 1
      %v2712 = vsel %vm570, %v2710, %v2711
      %v2713 = vrot.slane %v2621, 1
      %v2714 = vrot.slane %v2622, 1
      %v2715 = vsel %vm570, %v2713, %v2714
      %v2716 = vrot.slane %v2623, 1
      %v2717 = vrot.slane %v2624, 1
      %v2718 = vsel %vm570, %v2716, %v2717
      %v2719 = vrot.slane %v2625, 1
      %v2720 = vrot.slane %v2626, 1
      %v2721 = vsel %vm570, %v2719, %v2720
      %v2722 = vrot.slane %v2627, 1
      %v2723 = vrot.slane %v2628, 1
      %v2724 = vsel %vm570, %v2722, %v2723
      %v2725 = vrot.slane %v2633, 1
      %v2726 = vrot.slane %v2634, 1
      %v2727 = vsel %vm570, %v2725, %v2726
      %v2728 = vrot.slane %v2635, 1
      %v2729 = vrot.slane %v2636, 1
      %v2730 = vsel %vm570, %v2728, %v2729
      %v2731 = vrot.slane %v2637, 1
      %v2732 = vrot.slane %v2638, 1
      %v2733 = vsel %vm570, %v2731, %v2732
      %v2734 = vrot.slane %v2639, 1
      %v2735 = vrot.slane %v2640, 1
      %v2736 = vsel %vm570, %v2734, %v2735
      %v2737 = vrot.slane %v2641, 1
      %v2738 = vrot.slane %v2642, 1
      %v2739 = vsel %vm570, %v2737, %v2738
      %v2740 = vrot.slane %v2643, 1
      %v2741 = vrot.slane %v2644, 1
      %v2742 = vsel %vm570, %v2740, %v2741
      %v2743 = vrot.slane %v2645, 1
      %v2744 = vrot.slane %v2646, 1
      %v2745 = vsel %vm570, %v2743, %v2744
      %v2746 = vrot.slane %v2647, 1
      %v2747 = vrot.slane %v2648, 1
      %v2748 = vsel %vm570, %v2746, %v2747
      %2765 = vst [vmem:[#allocation7 + $0x8] sm:$0xff] %v2703
      %2766 = vst [vmem:[#allocation7 + $0x50] sm:$0xff] %v2706
      %2767 = vst [vmem:[#allocation7 + $0x98] sm:$0xff] %v2709
      %2768 = vst [vmem:[#allocation7 + $0xe0] sm:$0xff] %v2712
      %2769 = vst [vmem:[#allocation7 + $0x128] sm:$0xff] %v2715
      %2770 = vst [vmem:[#allocation7 + $0x170] sm:$0xff] %v2718
      %2771 = vst [vmem:[#allocation7 + $0x1b8] sm:$0xff] %v2721
      %2772 = vst [vmem:[#allocation7 + $0x200] sm:$0xff] %v2724
      %2773 = vst [vmem:[#allocation7 + $0x248] sm:$0xff] %v2727
      %2774 = vst [vmem:[#allocation7 + $0x290] sm:$0xff] %v2730
      %2775 = vst [vmem:[#allocation7 + $0x2d8] sm:$0xff] %v2733
      %2776 = vst [vmem:[#allocation7 + $0x320] sm:$0xff] %v2736
      %2777 = vst [vmem:[#allocation7 + $0x368] sm:$0xff] %v2739
      %2778 = vst [vmem:[#allocation7 + $0x3b0] sm:$0xff] %v2742
      %2779 = vst [vmem:[#allocation7 + $0x3f8] sm:$0xff] %v2745
      %2780 = vst [vmem:[#allocation7 + $0x440] sm:$0xff] %v2748
      %v2781 = vrot.slane %v2613, 2
      %v2782 = vrot.slane %v2614, 2
      %v2783 = vsel %vm651, %v2781, %v2782
      %v2784 = vrot.slane %v2615, 2
      %v2785 = vrot.slane %v2616, 2
      %v2786 = vsel %vm651, %v2784, %v2785
      %v2787 = vrot.slane %v2617, 2
      %v2788 = vrot.slane %v2618, 2
      %v2789 = vsel %vm651, %v2787, %v2788
      %v2790 = vrot.slane %v2619, 2
      %v2791 = vrot.slane %v2620, 2
      %v2792 = vsel %vm651, %v2790, %v2791
      %v2793 = vrot.slane %v2621, 2
      %v2794 = vrot.slane %v2622, 2
      %v2795 = vsel %vm651, %v2793, %v2794
      %v2796 = vrot.slane %v2623, 2
      %v2797 = vrot.slane %v2624, 2
      %v2798 = vsel %vm651, %v2796, %v2797
      %v2799 = vrot.slane %v2625, 2
      %v2800 = vrot.slane %v2626, 2
      %v2801 = vsel %vm651, %v2799, %v2800
      %v2802 = vrot.slane %v2627, 2
      %v2803 = vrot.slane %v2628, 2
      %v2804 = vsel %vm651, %v2802, %v2803
      %v2805 = vrot.slane %v2633, 2
      %v2806 = vrot.slane %v2634, 2
      %v2807 = vsel %vm651, %v2805, %v2806
      %v2808 = vrot.slane %v2635, 2
      %v2809 = vrot.slane %v2636, 2
      %v2810 = vsel %vm651, %v2808, %v2809
      %v2811 = vrot.slane %v2637, 2
      %v2812 = vrot.slane %v2638, 2
      %v2813 = vsel %vm651, %v2811, %v2812
      %v2814 = vrot.slane %v2639, 2
      %v2815 = vrot.slane %v2640, 2
      %v2816 = vsel %vm651, %v2814, %v2815
      %v2817 = vrot.slane %v2641, 2
      %v2818 = vrot.slane %v2642, 2
      %v2819 = vsel %vm651, %v2817, %v2818
      %v2820 = vrot.slane %v2643, 2
      %v2821 = vrot.slane %v2644, 2
      %v2822 = vsel %vm651, %v2820, %v2821
      %v2823 = vrot.slane %v2645, 2
      %v2824 = vrot.slane %v2646, 2
      %v2825 = vsel %vm651, %v2823, %v2824
      %v2826 = vrot.slane %v2647, 2
      %v2827 = vrot.slane %v2648, 2
      %v2828 = vsel %vm651, %v2826, %v2827
      %2845 = vst [vmem:[#allocation7 + $0x10] sm:$0xff] %v2783
      %2846 = vst [vmem:[#allocation7 + $0x58] sm:$0xff] %v2786
      %2847 = vst [vmem:[#allocation7 + $0xa0] sm:$0xff] %v2789
      %2848 = vst [vmem:[#allocation7 + $0xe8] sm:$0xff] %v2792
      %2849 = vst [vmem:[#allocation7 + $0x130] sm:$0xff] %v2795
      %2850 = vst [vmem:[#allocation7 + $0x178] sm:$0xff] %v2798
      %2851 = vst [vmem:[#allocation7 + $0x1c0] sm:$0xff] %v2801
      %2852 = vst [vmem:[#allocation7 + $0x208] sm:$0xff] %v2804
      %2853 = vst [vmem:[#allocation7 + $0x250] sm:$0xff] %v2807
      %2854 = vst [vmem:[#allocation7 + $0x298] sm:$0xff] %v2810
      %2855 = vst [vmem:[#allocation7 + $0x2e0] sm:$0xff] %v2813
      %2856 = vst [vmem:[#allocation7 + $0x328] sm:$0xff] %v2816
      %2857 = vst [vmem:[#allocation7 + $0x370] sm:$0xff] %v2819
      %2858 = vst [vmem:[#allocation7 + $0x3b8] sm:$0xff] %v2822
      %2859 = vst [vmem:[#allocation7 + $0x400] sm:$0xff] %v2825
      %2860 = vst [vmem:[#allocation7 + $0x448] sm:$0xff] %v2828
      %2861 = vst [vmem:[#allocation7 + $0x18] sm:$0xff] %v2615
      %2862 = vst [vmem:[#allocation7 + $0x60] sm:$0xff] %v2617
      %2863 = vst [vmem:[#allocation7 + $0xa8] sm:$0xff] %v2619
      %2864 = vst [vmem:[#allocation7 + $0xf0] sm:$0xff] %v2621
      %2865 = vst [vmem:[#allocation7 + $0x138] sm:$0xff] %v2623
      %2866 = vst [vmem:[#allocation7 + $0x180] sm:$0xff] %v2625
      %2867 = vst [vmem:[#allocation7 + $0x1c8] sm:$0xff] %v2627
      %2868 = vst [vmem:[#allocation7 + $0x210] sm:$0xff] %v2629
      %2869 = vst [vmem:[#allocation7 + $0x258] sm:$0xff] %v2635
      %2870 = vst [vmem:[#allocation7 + $0x2a0] sm:$0xff] %v2637
      %2871 = vst [vmem:[#allocation7 + $0x2e8] sm:$0xff] %v2639
      %2872 = vst [vmem:[#allocation7 + $0x330] sm:$0xff] %v2641
      %2873 = vst [vmem:[#allocation7 + $0x378] sm:$0xff] %v2643
      %2874 = vst [vmem:[#allocation7 + $0x3c0] sm:$0xff] %v2645
      %2875 = vst [vmem:[#allocation7 + $0x408] sm:$0xff] %v2647
      %2876 = vst [vmem:[#allocation7 + $0x450] sm:$0xff] %v2649
      %v2881 = vrot.slane %v2629, 1
      %v2882 = vrot.slane %v2630, 1
      %v2883 = vsel %vm570, %v2881, %v2882
      %v2884 = vrot.slane %v2649, 1
      %v2885 = vrot.slane %v2650, 1
      %v2886 = vsel %vm570, %v2884, %v2885
      %2889 = vst [vmem:[#allocation7 + $0x20] sm:$0xff] %v2706
      %2890 = vst [vmem:[#allocation7 + $0x68] sm:$0xff] %v2709
      %2891 = vst [vmem:[#allocation7 + $0xb0] sm:$0xff] %v2712
      %2892 = vst [vmem:[#allocation7 + $0xf8] sm:$0xff] %v2715
      %2893 = vst [vmem:[#allocation7 + $0x140] sm:$0xff] %v2718
      %2894 = vst [vmem:[#allocation7 + $0x188] sm:$0xff] %v2721
      %2895 = vst [vmem:[#allocation7 + $0x1d0] sm:$0xff] %v2724
      %2896 = vst [vmem:[#allocation7 + $0x218] sm:$0xff] %v2883
      %2897 = vst [vmem:[#allocation7 + $0x260] sm:$0xff] %v2730
      %2898 = vst [vmem:[#allocation7 + $0x2a8] sm:$0xff] %v2733
      %2899 = vst [vmem:[#allocation7 + $0x2f0] sm:$0xff] %v2736
      %2900 = vst [vmem:[#allocation7 + $0x338] sm:$0xff] %v2739
      %2901 = vst [vmem:[#allocation7 + $0x380] sm:$0xff] %v2742
      %2902 = vst [vmem:[#allocation7 + $0x3c8] sm:$0xff] %v2745
      %2903 = vst [vmem:[#allocation7 + $0x410] sm:$0xff] %v2748
      %2904 = vst [vmem:[#allocation7 + $0x458] sm:$0xff] %v2886
      %v2905 = vrot.slane %v2629, 2
      %v2906 = vrot.slane %v2630, 2
      %v2907 = vsel %vm651, %v2905, %v2906
      %v2908 = vrot.slane %v2649, 2
      %v2909 = vrot.slane %v2650, 2
      %v2910 = vsel %vm651, %v2908, %v2909
      %2913 = vst [vmem:[#allocation7 + $0x28] sm:$0xff] %v2786
      %2914 = vst [vmem:[#allocation7 + $0x70] sm:$0xff] %v2789
      %2915 = vst [vmem:[#allocation7 + $0xb8] sm:$0xff] %v2792
      %2916 = vst [vmem:[#allocation7 + $0x100] sm:$0xff] %v2795
      %2917 = vst [vmem:[#allocation7 + $0x148] sm:$0xff] %v2798
      %2918 = vst [vmem:[#allocation7 + $0x190] sm:$0xff] %v2801
      %2919 = vst [vmem:[#allocation7 + $0x1d8] sm:$0xff] %v2804
      %2920 = vst [vmem:[#allocation7 + $0x220] sm:$0xff] %v2907
      %2921 = vst [vmem:[#allocation7 + $0x268] sm:$0xff] %v2810
      %2922 = vst [vmem:[#allocation7 + $0x2b0] sm:$0xff] %v2813
      %2923 = vst [vmem:[#allocation7 + $0x2f8] sm:$0xff] %v2816
      %2924 = vst [vmem:[#allocation7 + $0x340] sm:$0xff] %v2819
      %2925 = vst [vmem:[#allocation7 + $0x388] sm:$0xff] %v2822
      %2926 = vst [vmem:[#allocation7 + $0x3d0] sm:$0xff] %v2825
      %2927 = vst [vmem:[#allocation7 + $0x418] sm:$0xff] %v2828
      %2928 = vst [vmem:[#allocation7 + $0x460] sm:$0xff] %v2910
      %2929 = vst [vmem:[#allocation7 + $0x30] sm:$0xff] %v2617
      %2930 = vst [vmem:[#allocation7 + $0x78] sm:$0xff] %v2619
      %2931 = vst [vmem:[#allocation7 + $0xc0] sm:$0xff] %v2621
      %2932 = vst [vmem:[#allocation7 + $0x108] sm:$0xff] %v2623
      %2933 = vst [vmem:[#allocation7 + $0x150] sm:$0xff] %v2625
      %2934 = vst [vmem:[#allocation7 + $0x198] sm:$0xff] %v2627
      %2935 = vst [vmem:[#allocation7 + $0x1e0] sm:$0xff] %v2629
      %2936 = vst [vmem:[#allocation7 + $0x228] sm:$0xff] %v2631
      %2937 = vst [vmem:[#allocation7 + $0x270] sm:$0xff] %v2637
      %2938 = vst [vmem:[#allocation7 + $0x2b8] sm:$0xff] %v2639
      %2939 = vst [vmem:[#allocation7 + $0x300] sm:$0xff] %v2641
      %2940 = vst [vmem:[#allocation7 + $0x348] sm:$0xff] %v2643
      %2941 = vst [vmem:[#allocation7 + $0x390] sm:$0xff] %v2645
      %2942 = vst [vmem:[#allocation7 + $0x3d8] sm:$0xff] %v2647
      %2943 = vst [vmem:[#allocation7 + $0x420] sm:$0xff] %v2649
      %2944 = vst [vmem:[#allocation7 + $0x468] sm:$0xff] %v2651
      %v2949 = vrot.slane %v2631, 1
      %v2950 = vrot.slane %v2632, 1
      %v2951 = vsel %vm570, %v2949, %v2950
      %v2952 = vrot.slane %v2651, 1
      %v2953 = vrot.slane %v2652, 1
      %v2954 = vsel %vm570, %v2952, %v2953
      %2957 = vst [vmem:[#allocation7 + $0x38] sm:$0xff] %v2709
      %2958 = vst [vmem:[#allocation7 + $0x80] sm:$0xff] %v2712
      %2959 = vst [vmem:[#allocation7 + $0xc8] sm:$0xff] %v2715
      %2960 = vst [vmem:[#allocation7 + $0x110] sm:$0xff] %v2718
      %2961 = vst [vmem:[#allocation7 + $0x158] sm:$0xff] %v2721
      %2962 = vst [vmem:[#allocation7 + $0x1a0] sm:$0xff] %v2724
      %2963 = vst [vmem:[#allocation7 + $0x1e8] sm:$0xff] %v2883
      %2964 = vst [vmem:[#allocation7 + $0x230] sm:$0xff] %v2951
      %2965 = vst [vmem:[#allocation7 + $0x278] sm:$0xff] %v2733
      %2966 = vst [vmem:[#allocation7 + $0x2c0] sm:$0xff] %v2736
      %2967 = vst [vmem:[#allocation7 + $0x308] sm:$0xff] %v2739
      %2968 = vst [vmem:[#allocation7 + $0x350] sm:$0xff] %v2742
      %2969 = vst [vmem:[#allocation7 + $0x398] sm:$0xff] %v2745
      %2970 = vst [vmem:[#allocation7 + $0x3e0] sm:$0xff] %v2748
      %2971 = vst [vmem:[#allocation7 + $0x428] sm:$0xff] %v2886
      %2972 = vst [vmem:[#allocation7 + $0x470] sm:$0xff] %v2954
      %v2973 = vrot.slane %v2631, 2
      %v2974 = vrot.slane %v2632, 2
      %v2975 = vsel %vm651, %v2973, %v2974
      %v2976 = vrot.slane %v2651, 2
      %v2977 = vrot.slane %v2652, 2
      %v2978 = vsel %vm651, %v2976, %v2977
      %2981 = vst [vmem:[#allocation7 + $0x40] sm:$0xff] %v2789
      %2982 = vst [vmem:[#allocation7 + $0x88] sm:$0xff] %v2792
      %2983 = vst [vmem:[#allocation7 + $0xd0] sm:$0xff] %v2795
      %2984 = vst [vmem:[#allocation7 + $0x118] sm:$0xff] %v2798
      %2985 = vst [vmem:[#allocation7 + $0x160] sm:$0xff] %v2801
      %2986 = vst [vmem:[#allocation7 + $0x1a8] sm:$0xff] %v2804
      %2987 = vst [vmem:[#allocation7 + $0x1f0] sm:$0xff] %v2907
      %2988 = vst [vmem:[#allocation7 + $0x238] sm:$0xff] %v2975
      %2989 = vst [vmem:[#allocation7 + $0x280] sm:$0xff] %v2813
      %2990 = vst [vmem:[#allocation7 + $0x2c8] sm:$0xff] %v2816
      %2991 = vst [vmem:[#allocation7 + $0x310] sm:$0xff] %v2819
      %2992 = vst [vmem:[#allocation7 + $0x358] sm:$0xff] %v2822
      %2993 = vst [vmem:[#allocation7 + $0x3a0] sm:$0xff] %v2825
      %2994 = vst [vmem:[#allocation7 + $0x3e8] sm:$0xff] %v2828
      %2995 = vst [vmem:[#allocation7 + $0x430] sm:$0xff] %v2910
      %2996 = vst [vmem:[#allocation7 + $0x478] sm:$0xff] %v2978
      %v2997 = vld [vmem:[#allocation7] sm:$0xff]
      %v2998 = vld [vmem:[#allocation7 + $0x8] sm:$0xff]
      %v2999 = vld [vmem:[#allocation7 + $0x10] sm:$0xff]
      %v3000 = vld [vmem:[#allocation7 + $0x18] sm:$0xff]
      %v3001 = vld [vmem:[#allocation7 + $0x20] sm:$0xff]
      %v3002 = vld [vmem:[#allocation7 + $0x28] sm:$0xff]
      %v3003 = vld [vmem:[#allocation7 + $0x30] sm:$0xff]
      %v3004 = vld [vmem:[#allocation7 + $0x38] sm:$0xff]
      %v3005 = vld [vmem:[#allocation7 + $0x40] sm:$0xff]
      %v3006 = vld [vmem:[#allocation7 + $0x48] sm:$0xff]
      %v3007 = vld [vmem:[#allocation7 + $0x50] sm:$0xff]
      %v3008 = vld [vmem:[#allocation7 + $0x58] sm:$0xff]
      %v3009 = vld [vmem:[#allocation7 + $0x60] sm:$0xff]
      %v3010 = vld [vmem:[#allocation7 + $0x68] sm:$0xff]
      %v3011 = vld [vmem:[#allocation7 + $0x70] sm:$0xff]
      %v3012 = vld [vmem:[#allocation7 + $0x78] sm:$0xff]
      %v3013 = vld [vmem:[#allocation7 + $0x80] sm:$0xff]
      %v3014 = vld [vmem:[#allocation7 + $0x88] sm:$0xff]
      %v3015 = vld [vmem:[#allocation7 + $0x90] sm:$0xff]
      %v3016 = vld [vmem:[#allocation7 + $0x98] sm:$0xff]
      %v3017 = vld [vmem:[#allocation7 + $0xa0] sm:$0xff]
      %v3018 = vld [vmem:[#allocation7 + $0xa8] sm:$0xff]
      %v3019 = vld [vmem:[#allocation7 + $0xb0] sm:$0xff]
      %v3020 = vld [vmem:[#allocation7 + $0xb8] sm:$0xff]
      %v3021 = vld [vmem:[#allocation7 + $0xc0] sm:$0xff]
      %v3022 = vld [vmem:[#allocation7 + $0xc8] sm:$0xff]
      %v3023 = vld [vmem:[#allocation7 + $0xd0] sm:$0xff]
      %v3024 = vld [vmem:[#allocation7 + $0xd8] sm:$0xff]
      %v3025 = vld [vmem:[#allocation7 + $0xe0] sm:$0xff]
      %v3026 = vld [vmem:[#allocation7 + $0xe8] sm:$0xff]
      %v3027 = vld [vmem:[#allocation7 + $0xf0] sm:$0xff]
      %v3028 = vld [vmem:[#allocation7 + $0xf8] sm:$0xff]
      %v3029 = vld [vmem:[#allocation7 + $0x100] sm:$0xff]
      %v3030 = vld [vmem:[#allocation7 + $0x108] sm:$0xff]
      %v3031 = vld [vmem:[#allocation7 + $0x110] sm:$0xff]
      %v3032 = vld [vmem:[#allocation7 + $0x118] sm:$0xff]
      %v3033 = vld [vmem:[#allocation7 + $0x120] sm:$0xff]
      %v3034 = vld [vmem:[#allocation7 + $0x128] sm:$0xff]
      %v3035 = vld [vmem:[#allocation7 + $0x130] sm:$0xff]
      %v3036 = vld [vmem:[#allocation7 + $0x138] sm:$0xff]
      %v3037 = vld [vmem:[#allocation7 + $0x140] sm:$0xff]
      %v3038 = vld [vmem:[#allocation7 + $0x148] sm:$0xff]
      %v3039 = vld [vmem:[#allocation7 + $0x150] sm:$0xff]
      %v3040 = vld [vmem:[#allocation7 + $0x158] sm:$0xff]
      %v3041 = vld [vmem:[#allocation7 + $0x160] sm:$0xff]
      %v3042 = vld [vmem:[#allocation7 + $0x168] sm:$0xff]
      %v3043 = vld [vmem:[#allocation7 + $0x170] sm:$0xff]
      %v3044 = vld [vmem:[#allocation7 + $0x178] sm:$0xff]
      %v3045 = vld [vmem:[#allocation7 + $0x180] sm:$0xff]
      %v3046 = vld [vmem:[#allocation7 + $0x188] sm:$0xff]
      %v3047 = vld [vmem:[#allocation7 + $0x190] sm:$0xff]
      %v3048 = vld [vmem:[#allocation7 + $0x198] sm:$0xff]
      %v3049 = vld [vmem:[#allocation7 + $0x1a0] sm:$0xff]
      %v3050 = vld [vmem:[#allocation7 + $0x1a8] sm:$0xff]
      %v3051 = vld [vmem:[#allocation7 + $0x1b0] sm:$0xff]
      %v3052 = vld [vmem:[#allocation7 + $0x1b8] sm:$0xff]
      %v3053 = vld [vmem:[#allocation7 + $0x1c0] sm:$0xff]
      %v3054 = vld [vmem:[#allocation7 + $0x1c8] sm:$0xff]
      %v3055 = vld [vmem:[#allocation7 + $0x1d0] sm:$0xff]
      %v3056 = vld [vmem:[#allocation7 + $0x1d8] sm:$0xff]
      %v3057 = vld [vmem:[#allocation7 + $0x1e0] sm:$0xff]
      %v3058 = vld [vmem:[#allocation7 + $0x1e8] sm:$0xff]
      %v3059 = vld [vmem:[#allocation7 + $0x1f0] sm:$0xff]
      %v3060 = vld [vmem:[#allocation7 + $0x1f8] sm:$0xff]
      %v3061 = vld [vmem:[#allocation7 + $0x200] sm:$0xff]
      %v3062 = vld [vmem:[#allocation7 + $0x208] sm:$0xff]
      %v3063 = vld [vmem:[#allocation7 + $0x210] sm:$0xff]
      %v3064 = vld [vmem:[#allocation7 + $0x218] sm:$0xff]
      %v3065 = vld [vmem:[#allocation7 + $0x220] sm:$0xff]
      %v3066 = vld [vmem:[#allocation7 + $0x228] sm:$0xff]
      %v3067 = vld [vmem:[#allocation7 + $0x230] sm:$0xff]
      %v3068 = vld [vmem:[#allocation7 + $0x238] sm:$0xff]
      %v3069 = vld [vmem:[#allocation7 + $0x240] sm:$0xff]
      %v3070 = vld [vmem:[#allocation7 + $0x248] sm:$0xff]
      %v3071 = vld [vmem:[#allocation7 + $0x250] sm:$0xff]
      %v3072 = vld [vmem:[#allocation7 + $0x258] sm:$0xff]
      %v3073 = vld [vmem:[#allocation7 + $0x260] sm:$0xff]
      %v3074 = vld [vmem:[#allocation7 + $0x268] sm:$0xff]
      %v3075 = vld [vmem:[#allocation7 + $0x270] sm:$0xff]
      %v3076 = vld [vmem:[#allocation7 + $0x278] sm:$0xff]
      %v3077 = vld [vmem:[#allocation7 + $0x280] sm:$0xff]
      %v3078 = vld [vmem:[#allocation7 + $0x288] sm:$0xff]
      %v3079 = vld [vmem:[#allocation7 + $0x290] sm:$0xff]
      %v3080 = vld [vmem:[#allocation7 + $0x298] sm:$0xff]
      %v3081 = vld [vmem:[#allocation7 + $0x2a0] sm:$0xff]
      %v3082 = vld [vmem:[#allocation7 + $0x2a8] sm:$0xff]
      %v3083 = vld [vmem:[#allocation7 + $0x2b0] sm:$0xff]
      %v3084 = vld [vmem:[#allocation7 + $0x2b8] sm:$0xff]
      %v3085 = vld [vmem:[#allocation7 + $0x2c0] sm:$0xff]
      %v3086 = vld [vmem:[#allocation7 + $0x2c8] sm:$0xff]
      %v3087 = vld [vmem:[#allocation7 + $0x2d0] sm:$0xff]
      %v3088 = vld [vmem:[#allocation7 + $0x2d8] sm:$0xff]
      %v3089 = vld [vmem:[#allocation7 + $0x2e0] sm:$0xff]
      %v3090 = vld [vmem:[#allocation7 + $0x2e8] sm:$0xff]
      %v3091 = vld [vmem:[#allocation7 + $0x2f0] sm:$0xff]
      %v3092 = vld [vmem:[#allocation7 + $0x2f8] sm:$0xff]
      %v3093 = vld [vmem:[#allocation7 + $0x300] sm:$0xff]
      %v3094 = vld [vmem:[#allocation7 + $0x308] sm:$0xff]
      %v3095 = vld [vmem:[#allocation7 + $0x310] sm:$0xff]
      %v3096 = vld [vmem:[#allocation7 + $0x318] sm:$0xff]
      %v3097 = vld [vmem:[#allocation7 + $0x320] sm:$0xff]
      %v3098 = vld [vmem:[#allocation7 + $0x328] sm:$0xff]
      %v3099 = vld [vmem:[#allocation7 + $0x330] sm:$0xff]
      %v3100 = vld [vmem:[#allocation7 + $0x338] sm:$0xff]
      %v3101 = vld [vmem:[#allocation7 + $0x340] sm:$0xff]
      %v3102 = vld [vmem:[#allocation7 + $0x348] sm:$0xff]
      %v3103 = vld [vmem:[#allocation7 + $0x350] sm:$0xff]
      %v3104 = vld [vmem:[#allocation7 + $0x358] sm:$0xff]
      %v3105 = vld [vmem:[#allocation7 + $0x360] sm:$0xff]
      %v3106 = vld [vmem:[#allocation7 + $0x368] sm:$0xff]
      %v3107 = vld [vmem:[#allocation7 + $0x370] sm:$0xff]
      %v3108 = vld [vmem:[#allocation7 + $0x378] sm:$0xff]
      %v3109 = vld [vmem:[#allocation7 + $0x380] sm:$0xff]
      %v3110 = vld [vmem:[#allocation7 + $0x388] sm:$0xff]
      %v3111 = vld [vmem:[#allocation7 + $0x390] sm:$0xff]
      %v3112 = vld [vmem:[#allocation7 + $0x398] sm:$0xff]
      %v3113 = vld [vmem:[#allocation7 + $0x3a0] sm:$0xff]
      %v3114 = vld [vmem:[#allocation7 + $0x3a8] sm:$0xff]
      %v3115 = vld [vmem:[#allocation7 + $0x3b0] sm:$0xff]
      %v3116 = vld [vmem:[#allocation7 + $0x3b8] sm:$0xff]
      %v3117 = vld [vmem:[#allocation7 + $0x3c0] sm:$0xff]
      %v3118 = vld [vmem:[#allocation7 + $0x3c8] sm:$0xff]
      %v3119 = vld [vmem:[#allocation7 + $0x3d0] sm:$0xff]
      %v3120 = vld [vmem:[#allocation7 + $0x3d8] sm:$0xff]
      %v3121 = vld [vmem:[#allocation7 + $0x3e0] sm:$0xff]
      %v3122 = vld [vmem:[#allocation7 + $0x3e8] sm:$0xff]
      %v3123 = vld [vmem:[#allocation7 + $0x3f0] sm:$0xff]
      %v3124 = vld [vmem:[#allocation7 + $0x3f8] sm:$0xff]
      %v3125 = vld [vmem:[#allocation7 + $0x400] sm:$0xff]
      %v3126 = vld [vmem:[#allocation7 + $0x408] sm:$0xff]
      %v3127 = vld [vmem:[#allocation7 + $0x410] sm:$0xff]
      %v3128 = vld [vmem:[#allocation7 + $0x418] sm:$0xff]
      %v3129 = vld [vmem:[#allocation7 + $0x420] sm:$0xff]
      %v3130 = vld [vmem:[#allocation7 + $0x428] sm:$0xff]
      %v3131 = vld [vmem:[#allocation7 + $0x430] sm:$0xff]
      %v3132 = vld [vmem:[#allocation7 + $0x438] sm:$0xff]
      %v3133 = vld [vmem:[#allocation7 + $0x440] sm:$0xff]
      %v3134 = vld [vmem:[#allocation7 + $0x448] sm:$0xff]
      %v3135 = vld [vmem:[#allocation7 + $0x450] sm:$0xff]
      %v3136 = vld [vmem:[#allocation7 + $0x458] sm:$0xff]
      %v3137 = vld [vmem:[#allocation7 + $0x460] sm:$0xff]
      %v3138 = vld [vmem:[#allocation7 + $0x468] sm:$0xff]
      %v3139 = vld [vmem:[#allocation7 + $0x470] sm:$0xff]
      %v3140 = vld [vmem:[#allocation7 + $0x478] sm:$0xff]
      %s3141 = scalar_lea.vmem %s2, 1152
      %v3142 = vld [vmem:[%s3141] sm:$0xff]
      %v3143 = vld [vmem:[%s3141 + $0x8] sm:$0xff]
      %v3144 = vld [vmem:[%s3141 + $0x10] sm:$0xff]
      %v3145 = vld [vmem:[%s3141 + $0x18] sm:$0xff]
      %v3146 = vld [vmem:[%s3141 + $0x20] sm:$0xff]
      %v3147 = vld [vmem:[%s3141 + $0x28] sm:$0xff]
      %v3148 = vld [vmem:[%s3141 + $0x30] sm:$0xff]
      %v3149 = vld [vmem:[%s3141 + $0x38] sm:$0xff]
      %v3150 = vld [vmem:[%s3141 + $0x40] sm:$0xff]
      %v3151 = vld [vmem:[%s3141 + $0x48] sm:$0xff]
      %v3152 = vld [vmem:[%s3141 + $0x50] sm:$0xff]
      %v3153 = vld [vmem:[%s3141 + $0x58] sm:$0xff]
      %v3154 = vld [vmem:[%s3141 + $0x60] sm:$0xff]
      %v3155 = vld [vmem:[%s3141 + $0x68] sm:$0xff]
      %v3156 = vld [vmem:[%s3141 + $0x70] sm:$0xff]
      %v3157 = vld [vmem:[%s3141 + $0x78] sm:$0xff]
      %v3158 = vld [vmem:[%s3141 + $0x80] sm:$0xff]
      %v3159 = vld [vmem:[%s3141 + $0x88] sm:$0xff]
      %v3160 = vld [vmem:[%s3141 + $0x90] sm:$0xff]
      %v3161 = vld [vmem:[%s3141 + $0x98] sm:$0xff]
      %v3162 = vld [vmem:[%s3141 + $0xa0] sm:$0xff]
      %v3163 = vld [vmem:[%s3141 + $0xa8] sm:$0xff]
      %v3164 = vld [vmem:[%s3141 + $0xb0] sm:$0xff]
      %v3165 = vld [vmem:[%s3141 + $0xb8] sm:$0xff]
      %v3166 = vld [vmem:[%s3141 + $0xc0] sm:$0xff]
      %v3167 = vld [vmem:[%s3141 + $0xc8] sm:$0xff]
      %v3168 = vld [vmem:[%s3141 + $0xd0] sm:$0xff]
      %v3169 = vld [vmem:[%s3141 + $0xd8] sm:$0xff]
      %v3170 = vld [vmem:[%s3141 + $0xe0] sm:$0xff]
      %v3171 = vld [vmem:[%s3141 + $0xe8] sm:$0xff]
      %v3172 = vld [vmem:[%s3141 + $0xf0] sm:$0xff]
      %v3173 = vld [vmem:[%s3141 + $0xf8] sm:$0xff]
      %v3174 = vld [vmem:[%s3141 + $0x100] sm:$0xff]
      %v3175 = vld [vmem:[%s3141 + $0x108] sm:$0xff]
      %v3176 = vld [vmem:[%s3141 + $0x110] sm:$0xff]
      %v3177 = vld [vmem:[%s3141 + $0x118] sm:$0xff]
      %v3178 = vld [vmem:[%s3141 + $0x120] sm:$0xff]
      %v3179 = vld [vmem:[%s3141 + $0x128] sm:$0xff]
      %v3180 = vld [vmem:[%s3141 + $0x130] sm:$0xff]
      %v3181 = vld [vmem:[%s3141 + $0x138] sm:$0xff]
      %v3182 = vld [vmem:[%s3141 + $0x140] sm:$0xff]
      %v3183 = vld [vmem:[%s3141 + $0x148] sm:$0xff]
      %v3184 = vld [vmem:[%s3141 + $0x150] sm:$0xff]
      %v3185 = vld [vmem:[%s3141 + $0x158] sm:$0xff]
      %v3186 = vld [vmem:[%s3141 + $0x160] sm:$0xff]
      %v3187 = vld [vmem:[%s3141 + $0x168] sm:$0xff]
      %v3188 = vld [vmem:[%s3141 + $0x170] sm:$0xff]
      %v3189 = vld [vmem:[%s3141 + $0x178] sm:$0xff]
      %v3190 = vld [vmem:[%s3141 + $0x180] sm:$0xff]
      %v3191 = vld [vmem:[%s3141 + $0x188] sm:$0xff]
      %v3192 = vld [vmem:[%s3141 + $0x190] sm:$0xff]
      %v3193 = vld [vmem:[%s3141 + $0x198] sm:$0xff]
      %v3194 = vld [vmem:[%s3141 + $0x1a0] sm:$0xff]
      %v3195 = vld [vmem:[%s3141 + $0x1a8] sm:$0xff]
      %v3196 = vld [vmem:[%s3141 + $0x1b0] sm:$0xff]
      %v3197 = vld [vmem:[%s3141 + $0x1b8] sm:$0xff]
      %v3198 = vld [vmem:[%s3141 + $0x1c0] sm:$0xff]
      %v3199 = vld [vmem:[%s3141 + $0x1c8] sm:$0xff]
      %v3200 = vld [vmem:[%s3141 + $0x1d0] sm:$0xff]
      %v3201 = vld [vmem:[%s3141 + $0x1d8] sm:$0xff]
      %v3202 = vld [vmem:[%s3141 + $0x1e0] sm:$0xff]
      %v3203 = vld [vmem:[%s3141 + $0x1e8] sm:$0xff]
      %v3204 = vld [vmem:[%s3141 + $0x1f0] sm:$0xff]
      %v3205 = vld [vmem:[%s3141 + $0x1f8] sm:$0xff]
      %v3206 = vld [vmem:[%s3141 + $0x200] sm:$0xff]
      %v3207 = vld [vmem:[%s3141 + $0x208] sm:$0xff]
      %v3208 = vld [vmem:[%s3141 + $0x210] sm:$0xff]
      %v3209 = vld [vmem:[%s3141 + $0x218] sm:$0xff]
      %v3210 = vld [vmem:[%s3141 + $0x220] sm:$0xff]
      %v3211 = vld [vmem:[%s3141 + $0x228] sm:$0xff]
      %v3212 = vld [vmem:[%s3141 + $0x230] sm:$0xff]
      %v3213 = vld [vmem:[%s3141 + $0x238] sm:$0xff]
      %v3214 = vld [vmem:[%s3141 + $0x240] sm:$0xff]
      %v3215 = vld [vmem:[%s3141 + $0x248] sm:$0xff]
      %v3216 = vld [vmem:[%s3141 + $0x250] sm:$0xff]
      %v3217 = vld [vmem:[%s3141 + $0x258] sm:$0xff]
      %v3218 = vld [vmem:[%s3141 + $0x260] sm:$0xff]
      %v3219 = vld [vmem:[%s3141 + $0x268] sm:$0xff]
      %v3220 = vld [vmem:[%s3141 + $0x270] sm:$0xff]
      %v3221 = vld [vmem:[%s3141 + $0x278] sm:$0xff]
      %v3222 = vld [vmem:[%s3141 + $0x280] sm:$0xff]
      %v3223 = vld [vmem:[%s3141 + $0x288] sm:$0xff]
      %v3224 = vld [vmem:[%s3141 + $0x290] sm:$0xff]
      %v3225 = vld [vmem:[%s3141 + $0x298] sm:$0xff]
      %v3226 = vld [vmem:[%s3141 + $0x2a0] sm:$0xff]
      %v3227 = vld [vmem:[%s3141 + $0x2a8] sm:$0xff]
      %v3228 = vld [vmem:[%s3141 + $0x2b0] sm:$0xff]
      %v3229 = vld [vmem:[%s3141 + $0x2b8] sm:$0xff]
      %v3230 = vld [vmem:[%s3141 + $0x2c0] sm:$0xff]
      %v3231 = vld [vmem:[%s3141 + $0x2c8] sm:$0xff]
      %v3232 = vld [vmem:[%s3141 + $0x2d0] sm:$0xff]
      %v3233 = vld [vmem:[%s3141 + $0x2d8] sm:$0xff]
      %v3234 = vld [vmem:[%s3141 + $0x2e0] sm:$0xff]
      %v3235 = vld [vmem:[%s3141 + $0x2e8] sm:$0xff]
      %v3236 = vld [vmem:[%s3141 + $0x2f0] sm:$0xff]
      %v3237 = vld [vmem:[%s3141 + $0x2f8] sm:$0xff]
      %v3238 = vld [vmem:[%s3141 + $0x300] sm:$0xff]
      %v3239 = vld [vmem:[%s3141 + $0x308] sm:$0xff]
      %v3240 = vld [vmem:[%s3141 + $0x310] sm:$0xff]
      %v3241 = vld [vmem:[%s3141 + $0x318] sm:$0xff]
      %v3242 = vld [vmem:[%s3141 + $0x320] sm:$0xff]
      %v3243 = vld [vmem:[%s3141 + $0x328] sm:$0xff]
      %v3244 = vld [vmem:[%s3141 + $0x330] sm:$0xff]
      %v3245 = vld [vmem:[%s3141 + $0x338] sm:$0xff]
      %v3246 = vld [vmem:[%s3141 + $0x340] sm:$0xff]
      %v3247 = vld [vmem:[%s3141 + $0x348] sm:$0xff]
      %v3248 = vld [vmem:[%s3141 + $0x350] sm:$0xff]
      %v3249 = vld [vmem:[%s3141 + $0x358] sm:$0xff]
      %v3250 = vld [vmem:[%s3141 + $0x360] sm:$0xff]
      %v3251 = vld [vmem:[%s3141 + $0x368] sm:$0xff]
      %v3252 = vld [vmem:[%s3141 + $0x370] sm:$0xff]
      %v3253 = vld [vmem:[%s3141 + $0x378] sm:$0xff]
      %v3254 = vld [vmem:[%s3141 + $0x380] sm:$0xff]
      %v3255 = vld [vmem:[%s3141 + $0x388] sm:$0xff]
      %v3256 = vld [vmem:[%s3141 + $0x390] sm:$0xff]
      %v3257 = vld [vmem:[%s3141 + $0x398] sm:$0xff]
      %v3258 = vld [vmem:[%s3141 + $0x3a0] sm:$0xff]
      %v3259 = vld [vmem:[%s3141 + $0x3a8] sm:$0xff]
      %v3260 = vld [vmem:[%s3141 + $0x3b0] sm:$0xff]
      %v3261 = vld [vmem:[%s3141 + $0x3b8] sm:$0xff]
      %v3262 = vld [vmem:[%s3141 + $0x3c0] sm:$0xff]
      %v3263 = vld [vmem:[%s3141 + $0x3c8] sm:$0xff]
      %v3264 = vld [vmem:[%s3141 + $0x3d0] sm:$0xff]
      %v3265 = vld [vmem:[%s3141 + $0x3d8] sm:$0xff]
      %v3266 = vld [vmem:[%s3141 + $0x3e0] sm:$0xff]
      %v3267 = vld [vmem:[%s3141 + $0x3e8] sm:$0xff]
      %v3268 = vld [vmem:[%s3141 + $0x3f0] sm:$0xff]
      %v3269 = vld [vmem:[%s3141 + $0x3f8] sm:$0xff]
      %v3270 = vld [vmem:[%s3141 + $0x400] sm:$0xff]
      %v3271 = vld [vmem:[%s3141 + $0x408] sm:$0xff]
      %v3272 = vld [vmem:[%s3141 + $0x410] sm:$0xff]
      %v3273 = vld [vmem:[%s3141 + $0x418] sm:$0xff]
      %v3274 = vld [vmem:[%s3141 + $0x420] sm:$0xff]
      %v3275 = vld [vmem:[%s3141 + $0x428] sm:$0xff]
      %v3276 = vld [vmem:[%s3141 + $0x430] sm:$0xff]
      %v3277 = vld [vmem:[%s3141 + $0x438] sm:$0xff]
      %v3278 = vld [vmem:[%s3141 + $0x440] sm:$0xff]
      %v3279 = vld [vmem:[%s3141 + $0x448] sm:$0xff]
      %v3280 = vld [vmem:[%s3141 + $0x450] sm:$0xff]
      %v3281 = vld [vmem:[%s3141 + $0x458] sm:$0xff]
      %v3282 = vld [vmem:[%s3141 + $0x460] sm:$0xff]
      %v3283 = vld [vmem:[%s3141 + $0x468] sm:$0xff]
      %v3284 = vld [vmem:[%s3141 + $0x470] sm:$0xff]
      %v3285 = vld [vmem:[%s3141 + $0x478] sm:$0xff]
      %3286 = vmatprep.subr.mxu0 0.0
      %3287 = vmatpush1.msra.mxu0 %v3142
      %3288 = vmatprep.subr.mxu0 0.0
      %3289 = vmatpush1.msra.mxu0 %v3143
      %3290 = vmatprep.subr.mxu0 0.0
      %3291 = vmatpush1.msra.mxu0 %v3144
      %3292 = vmatprep.subr.mxu0 0.0
      %3293 = vmatpush1.msra.mxu0 %v3145
      %3294 = vmatprep.subr.mxu0 0.0
      %3295 = vmatpush1.msra.mxu0 %v3146
      %3296 = vmatprep.subr.mxu0 0.0
      %3297 = vmatpush1.msra.mxu0 %v3147
      %3298 = vmatprep.subr.mxu0 0.0
      %3299 = vmatpush1.msra.mxu0 %v3148
      %3300 = vmatprep.subr.mxu0 0.0
      %3301 = vmatpush1.msra.mxu0 %v3149
      %3302 = vmatprep.subr.mxu0 0.0
      %3303 = vmatpush1.msra.mxu0 %v3150
      %3304 = vmatprep.subr.mxu0 0.0
      %3305 = vmatpush1.msra.mxu0 %v3151
      %3306 = vmatprep.subr.mxu0 0.0
      %3307 = vmatpush1.msra.mxu0 %v3152
      %3308 = vmatprep.subr.mxu0 0.0
      %3309 = vmatpush1.msra.mxu0 %v3153
      %3310 = vmatprep.subr.mxu0 0.0
      %3311 = vmatpush1.msra.mxu0 %v3154
      %3312 = vmatprep.subr.mxu0 0.0
      %3313 = vmatpush1.msra.mxu0 %v3155
      %3314 = vmatprep.subr.mxu0 0.0
      %3315 = vmatpush1.msra.mxu0 %v3156
      %3316 = vmatprep.subr.mxu0 0.0
      %3317 = vmatpush1.msra.mxu0 %v3157
      %3318 = vmatprep.subr.mxu0 0.0
      %3319 = vmatpush1.msra.mxu0 %v3158
      %3320 = vmatprep.subr.mxu0 0.0
      %3321 = vmatpush1.msra.mxu0 %v3159
      %3322 = vmatprep.subr.mxu0 0.0
      %3323 = vmatpush1.msra.mxu0 %v3160
      %3324 = vmatprep.subr.mxu0 0.0
      %3325 = vmatpush1.msra.mxu0 %v3161
      %3326 = vmatprep.subr.mxu0 0.0
      %3327 = vmatpush1.msra.mxu0 %v3162
      %3328 = vmatprep.subr.mxu0 0.0
      %3329 = vmatpush1.msra.mxu0 %v3163
      %3330 = vmatprep.subr.mxu0 0.0
      %3331 = vmatpush1.msra.mxu0 %v3164
      %3332 = vmatprep.subr.mxu0 0.0
      %3333 = vmatpush1.msra.mxu0 %v3165
      %3334 = vmatprep.subr.mxu0 0.0
      %3335 = vmatpush1.msra.mxu0 %v3166
      %3336 = vmatprep.subr.mxu0 0.0
      %3337 = vmatpush1.msra.mxu0 %v3167
      %3338 = vmatprep.subr.mxu0 0.0
      %3339 = vmatpush1.msra.mxu0 %v3168
      %3340 = vmatprep.subr.mxu0 0.0
      %3341 = vmatpush1.msra.mxu0 %v3169
      %3342 = vmatprep.subr.mxu0 0.0
      %3343 = vmatpush1.msra.mxu0 %v3170
      %3344 = vmatprep.subr.mxu0 0.0
      %3345 = vmatpush1.msra.mxu0 %v3171
      %3346 = vmatprep.subr.mxu0 0.0
      %3347 = vmatpush1.msra.mxu0 %v3172
      %3348 = vmatprep.subr.mxu0 0.0
      %3349 = vmatpush1.msra.mxu0 %v3173
      %3350 = vmatprep.mubr.f32.mxu0 %v2998
      %3351 = vmatmul.mubr.f32.gmra.mrb[0].mxu0 %v2997
      %v3352 = vpop.f32.mrb[0].mxu0
      %v3353 = vadd.f32 0.0, %v3352
      %v3354 = vpop.f32.mrb[0].mxu0
      %3355 = vmatprep.mubr.f32.mxu0 %v3007
      %3356 = vmatmul.mubr.f32.gmra.mrb[0].mxu0 %v3006
      %v3357 = vpop.f32.mrb[0].mxu0
      %v3358 = vadd.f32 0.0, %v3357
      %v3359 = vpop.f32.mrb[0].mxu0
      %3360 = vmatprep.mubr.f32.mxu0 %v3016
      %3361 = vmatmul.mubr.f32.gmra.mrb[0].mxu0 %v3015
      %v3362 = vpop.f32.mrb[0].mxu0
      %v3363 = vadd.f32 0.0, %v3362
      %v3364 = vpop.f32.mrb[0].mxu0
      %3365 = vmatprep.mubr.f32.mxu0 %v3025
      %3366 = vmatmul.mubr.f32.gmra.mrb[0].mxu0 %v3024
      %v3367 = vpop.f32.mrb[0].mxu0
      %v3368 = vadd.f32 0.0, %v3367
      %v3369 = vpop.f32.mrb[0].mxu0
      %3370 = vmatprep.mubr.f32.mxu0 %v3034
      %3371 = vmatmul.mubr.f32.gmra.mrb[0].mxu0 %v3033
      %v3372 = vpop.f32.mrb[0].mxu0
      %v3373 = vadd.f32 0.0, %v3372
      %v3374 = vpop.f32.mrb[0].mxu0
      %3375 = vmatprep.mubr.f32.mxu0 %v3043
      %3376 = vmatmul.mubr.f32.gmra.mrb[0].mxu0 %v3042
      %v3377 = vpop.f32.mrb[0].mxu0
      %v3378 = vadd.f32 0.0, %v3377
      %v3379 = vpop.f32.mrb[0].mxu0
      %3380 = vmatprep.mubr.f32.mxu0 %v3052
      %3381 = vmatmul.mubr.f32.gmra.mrb[0].mxu0 %v3051
      %v3382 = vpop.f32.mrb[0].mxu0
      %v3383 = vadd.f32 0.0, %v3382
      %v3384 = vpop.f32.mrb[0].mxu0
      %3385 = vmatprep.mubr.f32.mxu0 %v3061
      %3386 = vmatmul.mubr.f32.gmra.mrb[0].mxu0 %v3060
      %v3387 = vpop.f32.mrb[0].mxu0
      %v3388 = vadd.f32 0.0, %v3387
      %v3389 = vpop.f32.mrb[0].mxu0
      %3390 = vmatprep.mubr.f32.mxu0 %v3070
      %3391 = vmatmul.mubr.f32.gmra.mrb[0].mxu0 %v3069
      %v3392 = vpop.f32.mrb[0].mxu0
      %v3393 = vadd.f32 0.0, %v3392
      %v3394 = vpop.f32.mrb[0].mxu0
      %3395 = vmatprep.mubr.f32.mxu0 %v3079
      %3396 = vmatmul.mubr.f32.gmra.mrb[0].mxu0 %v3078
      %v3397 = vpop.f32.mrb[0].mxu0
      %v3398 = vadd.f32 0.0, %v3397
      %v3399 = vpop.f32.mrb[0].mxu0
      %3400 = vmatprep.mubr.f32.mxu0 %v3088
      %3401 = vmatmul.mubr.f32.gmra.mrb[0].mxu0 %v3087
      %v3402 = vpop.f32.mrb[0].mxu0
      %v3403 = vadd.f32 0.0, %v3402
      %v3404 = vpop.f32.mrb[0].mxu0
      %3405 = vmatprep.mubr.f32.mxu0 %v3097
      %3406 = vmatmul.mubr.f32.gmra.mrb[0].mxu0 %v3096
      %v3407 = vpop.f32.mrb[0].mxu0
      %v3408 = vadd.f32 0.0, %v3407
      %v3409 = vpop.f32.mrb[0].mxu0
      %3410 = vmatprep.mubr.f32.mxu0 %v3106
      %3411 = vmatmul.mubr.f32.gmra.mrb[0].mxu0 %v3105
      %v3412 = vpop.f32.mrb[0].mxu0
      %v3413 = vadd.f32 0.0, %v3412
      %v3414 = vpop.f32.mrb[0].mxu0
      %3415 = vmatprep.mubr.f32.mxu0 %v3115
      %3416 = vmatmul.mubr.f32.gmra.mrb[0].mxu0 %v3114
      %v3417 = vpop.f32.mrb[0].mxu0
      %v3418 = vadd.f32 0.0, %v3417
      %v3419 = vpop.f32.mrb[0].mxu0
      %3420 = vmatprep.mubr.f32.mxu0 %v3124
      %3421 = vmatmul.mubr.f32.gmra.mrb[0].mxu0 %v3123
      %v3422 = vpop.f32.mrb[0].mxu0
      %v3423 = vadd.f32 0.0, %v3422
      %v3424 = vpop.f32.mrb[0].mxu0
      %3425 = vmatprep.mubr.f32.mxu0 %v3133
      %3426 = vmatmul.mubr.f32.gmra.mrb[0].mxu0 %v3132
      %v3427 = vpop.f32.mrb[0].mxu0
      %v3428 = vadd.f32 0.0, %v3427
      %v3429 = vpop.f32.mrb[0].mxu0
      %3430 = vdwg.mxu0
      %3431 = vmatprep.subr.mxu0 0.0
      %3432 = vmatpush1.msra.mxu0 %v3174
      %3433 = vmatprep.subr.mxu0 0.0
      %3434 = vmatpush1.msra.mxu0 %v3175
      %3435 = vmatprep.subr.mxu0 0.0
      %3436 = vmatpush1.msra.mxu0 %v3176
      %3437 = vmatprep.subr.mxu0 0.0
      %3438 = vmatpush1.msra.mxu0 %v3177
      %3439 = vmatprep.subr.mxu0 0.0
      %3440 = vmatpush1.msra.mxu0 %v3178
      %3441 = vmatprep.subr.mxu0 0.0
      %3442 = vmatpush1.msra.mxu0 %v3179
      %3443 = vmatprep.subr.mxu0 0.0
      %3444 = vmatpush1.msra.mxu0 %v3180
      %3445 = vmatprep.subr.mxu0 0.0
      %3446 = vmatpush1.msra.mxu0 %v3181
      %3447 = vmatprep.subr.mxu0 0.0
      %3448 = vmatpush1.msra.mxu0 %v3182
      %3449 = vmatprep.subr.mxu0 0.0
      %3450 = vmatpush1.msra.mxu0 %v3183
      %3451 = vmatprep.subr.mxu0 0.0
      %3452 = vmatpush1.msra.mxu0 %v3184
      %3453 = vmatprep.subr.mxu0 0.0
      %3454 = vmatpush1.msra.mxu0 %v3185
      %3455 = vmatprep.subr.mxu0 0.0
      %3456 = vmatpush1.msra.mxu0 %v3186
      %3457 = vmatprep.subr.mxu0 0.0
      %3458 = vmatpush1.msra.mxu0 %v3187
      %3459 = vmatprep.subr.mxu0 0.0
      %3460 = vmatpush1.msra.mxu0 %v3188
      %3461 = vmatprep.subr.mxu0 0.0
      %3462 = vmatpush1.msra.mxu0 %v3189
      %3463 = vmatprep.subr.mxu0 0.0
      %3464 = vmatpush1.msra.mxu0 %v3190
      %3465 = vmatprep.subr.mxu0 0.0
      %3466 = vmatpush1.msra.mxu0 %v3191
      %3467 = vmatprep.subr.mxu0 0.0
      %3468 = vmatpush1.msra.mxu0 %v3192
      %3469 = vmatprep.subr.mxu0 0.0
      %3470 = vmatpush1.msra.mxu0 %v3193
      %3471 = vmatprep.subr.mxu0 0.0
      %3472 = vmatpush1.msra.mxu0 %v3194
      %3473 = vmatprep.subr.mxu0 0.0
      %3474 = vmatpush1.msra.mxu0 %v3195
      %3475 = vmatprep.subr.mxu0 0.0
      %3476 = vmatpush1.msra.mxu0 %v3196
      %3477 = vmatprep.subr.mxu0 0.0
      %3478 = vmatpush1.msra.mxu0 %v3197
      %3479 = vmatprep.subr.mxu0 0.0
      %3480 = vmatpush1.msra.mxu0 %v3198
      %3481 = vmatprep.subr.mxu0 0.0
      %3482 = vmatpush1.msra.mxu0 %v3199
      %3483 = vmatprep.subr.mxu0 0.0
      %3484 = vmatpush1.msra.mxu0 %v3200
      %3485 = vmatprep.subr.mxu0 0.0
      %3486 = vmatpush1.msra.mxu0 %v3201
      %3487 = vmatprep.subr.mxu0 0.0
      %3488 = vmatpush1.msra.mxu0 %v3202
      %3489 = vmatprep.subr.mxu0 0.0
      %3490 = vmatpush1.msra.mxu0 %v3203
      %3491 = vmatprep.subr.mxu0 0.0
      %3492 = vmatpush1.msra.mxu0 %v3204
      %3493 = vmatprep.subr.mxu0 0.0
      %3494 = vmatpush1.msra.mxu0 %v3205
      %3495 = vmatprep.mubr.f32.mxu0 %v3000
      %3496 = vmatmul.mubr.f32.gmra.mrb[0].mxu0 %v2999
      %v3497 = vpop.f32.mrb[0].mxu0
      %v3498 = vadd.f32 %v3353, %v3497
      %v3499 = vpop.f32.mrb[0].mxu0
      %3500 = vmatprep.mubr.f32.mxu0 %v3009
      %3501 = vmatmul.mubr.f32.gmra.mrb[0].mxu0 %v3008
      %v3502 = vpop.f32.mrb[0].mxu0
      %v3503 = vadd.f32 %v3358, %v3502
      %v3504 = vpop.f32.mrb[0].mxu0
      %3505 = vmatprep.mubr.f32.mxu0 %v3018
      %3506 = vmatmul.mubr.f32.gmra.mrb[0].mxu0 %v3017
      %v3507 = vpop.f32.mrb[0].mxu0
      %v3508 = vadd.f32 %v3363, %v3507
      %v3509 = vpop.f32.mrb[0].mxu0
      %3510 = vmatprep.mubr.f32.mxu0 %v3027
      %3511 = vmatmul.mubr.f32.gmra.mrb[0].mxu0 %v3026
      %v3512 = vpop.f32.mrb[0].mxu0
      %v3513 = vadd.f32 %v3368, %v3512
      %v3514 = vpop.f32.mrb[0].mxu0
      %3515 = vmatprep.mubr.f32.mxu0 %v3036
      %3516 = vmatmul.mubr.f32.gmra.mrb[0].mxu0 %v3035
      %v3517 = vpop.f32.mrb[0].mxu0
      %v3518 = vadd.f32 %v3373, %v3517
      %v3519 = vpop.f32.mrb[0].mxu0
      %3520 = vmatprep.mubr.f32.mxu0 %v3045
      %3521 = vmatmul.mubr.f32.gmra.mrb[0].mxu0 %v3044
      %v3522 = vpop.f32.mrb[0].mxu0
      %v3523 = vadd.f32 %v3378, %v3522
      %v3524 = vpop.f32.mrb[0].mxu0
      %3525 = vmatprep.mubr.f32.mxu0 %v3054
      %3526 = vmatmul.mubr.f32.gmra.mrb[0].mxu0 %v3053
      %v3527 = vpop.f32.mrb[0].mxu0
      %v3528 = vadd.f32 %v3383, %v3527
      %v3529 = vpop.f32.mrb[0].mxu0
      %3530 = vmatprep.mubr.f32.mxu0 %v3063
      %3531 = vmatmul.mubr.f32.gmra.mrb[0].mxu0 %v3062
      %v3532 = vpop.f32.mrb[0].mxu0
      %v3533 = vadd.f32 %v3388, %v3532
      %v3534 = vpop.f32.mrb[0].mxu0
      %3535 = vmatprep.mubr.f32.mxu0 %v3072
      %3536 = vmatmul.mubr.f32.gmra.mrb[0].mxu0 %v3071
      %v3537 = vpop.f32.mrb[0].mxu0
      %v3538 = vadd.f32 %v3393, %v3537
      %v3539 = vpop.f32.mrb[0].mxu0
      %3540 = vmatprep.mubr.f32.mxu0 %v3081
      %3541 = vmatmul.mubr.f32.gmra.mrb[0].mxu0 %v3080
      %v3542 = vpop.f32.mrb[0].mxu0
      %v3543 = vadd.f32 %v3398, %v3542
      %v3544 = vpop.f32.mrb[0].mxu0
      %3545 = vmatprep.mubr.f32.mxu0 %v3090
      %3546 = vmatmul.mubr.f32.gmra.mrb[0].mxu0 %v3089
      %v3547 = vpop.f32.mrb[0].mxu0
      %v3548 = vadd.f32 %v3403, %v3547
      %v3549 = vpop.f32.mrb[0].mxu0
      %3550 = vmatprep.mubr.f32.mxu0 %v3099
      %3551 = vmatmul.mubr.f32.gmra.mrb[0].mxu0 %v3098
      %v3552 = vpop.f32.mrb[0].mxu0
      %v3553 = vadd.f32 %v3408, %v3552
      %v3554 = vpop.f32.mrb[0].mxu0
      %3555 = vmatprep.mubr.f32.mxu0 %v3108
      %3556 = vmatmul.mubr.f32.gmra.mrb[0].mxu0 %v3107
      %v3557 = vpop.f32.mrb[0].mxu0
      %v3558 = vadd.f32 %v3413, %v3557
      %v3559 = vpop.f32.mrb[0].mxu0
      %3560 = vmatprep.mubr.f32.mxu0 %v3117
      %3561 = vmatmul.mubr.f32.gmra.mrb[0].mxu0 %v3116
      %v3562 = vpop.f32.mrb[0].mxu0
      %v3563 = vadd.f32 %v3418, %v3562
      %v3564 = vpop.f32.mrb[0].mxu0
      %3565 = vmatprep.mubr.f32.mxu0 %v3126
      %3566 = vmatmul.mubr.f32.gmra.mrb[0].mxu0 %v3125
      %v3567 = vpop.f32.mrb[0].mxu0
      %v3568 = vadd.f32 %v3423, %v3567
      %v3569 = vpop.f32.mrb[0].mxu0
      %3570 = vmatprep.mubr.f32.mxu0 %v3135
      %3571 = vmatmul.mubr.f32.gmra.mrb[0].mxu0 %v3134
      %v3572 = vpop.f32.mrb[0].mxu0
      %v3573 = vadd.f32 %v3428, %v3572
      %v3574 = vpop.f32.mrb[0].mxu0
      %3575 = vdwg.mxu0
      %3576 = vmatprep.subr.mxu0 0.0
      %3577 = vmatpush1.msra.mxu0 %v3206
      %3578 = vmatprep.subr.mxu0 0.0
      %3579 = vmatpush1.msra.mxu0 %v3207
      %3580 = vmatprep.subr.mxu0 0.0
      %3581 = vmatpush1.msra.mxu0 %v3208
      %3582 = vmatprep.subr.mxu0 0.0
      %3583 = vmatpush1.msra.mxu0 %v3209
      %3584 = vmatprep.subr.mxu0 0.0
      %3585 = vmatpush1.msra.mxu0 %v3210
      %3586 = vmatprep.subr.mxu0 0.0
      %3587 = vmatpush1.msra.mxu0 %v3211
      %3588 = vmatprep.subr.mxu0 0.0
      %3589 = vmatpush1.msra.mxu0 %v3212
      %3590 = vmatprep.subr.mxu0 0.0
      %3591 = vmatpush1.msra.mxu0 %v3213
      %3592 = vmatprep.subr.mxu0 0.0
      %3593 = vmatpush1.msra.mxu0 %v3214
      %3594 = vmatprep.subr.mxu0 0.0
      %3595 = vmatpush1.msra.mxu0 %v3215
      %3596 = vmatprep.subr.mxu0 0.0
      %3597 = vmatpush1.msra.mxu0 %v3216
      %3598 = vmatprep.subr.mxu0 0.0
      %3599 = vmatpush1.msra.mxu0 %v3217
      %3600 = vmatprep.subr.mxu0 0.0
      %3601 = vmatpush1.msra.mxu0 %v3218
      %3602 = vmatprep.subr.mxu0 0.0
      %3603 = vmatpush1.msra.mxu0 %v3219
      %3604 = vmatprep.subr.mxu0 0.0
      %3605 = vmatpush1.msra.mxu0 %v3220
      %3606 = vmatprep.subr.mxu0 0.0
      %3607 = vmatpush1.msra.mxu0 %v3221
      %3608 = vmatprep.subr.mxu0 0.0
      %3609 = vmatpush1.msra.mxu0 %v3222
      %3610 = vmatprep.subr.mxu0 0.0
      %3611 = vmatpush1.msra.mxu0 %v3223
      %3612 = vmatprep.subr.mxu0 0.0
      %3613 = vmatpush1.msra.mxu0 %v3224
      %3614 = vmatprep.subr.mxu0 0.0
      %3615 = vmatpush1.msra.mxu0 %v3225
      %3616 = vmatprep.subr.mxu0 0.0
      %3617 = vmatpush1.msra.mxu0 %v3226
      %3618 = vmatprep.subr.mxu0 0.0
      %3619 = vmatpush1.msra.mxu0 %v3227
      %3620 = vmatprep.subr.mxu0 0.0
      %3621 = vmatpush1.msra.mxu0 %v3228
      %3622 = vmatprep.subr.mxu0 0.0
      %3623 = vmatpush1.msra.mxu0 %v3229
      %3624 = vmatprep.subr.mxu0 0.0
      %3625 = vmatpush1.msra.mxu0 %v3230
      %3626 = vmatprep.subr.mxu0 0.0
      %3627 = vmatpush1.msra.mxu0 %v3231
      %3628 = vmatprep.subr.mxu0 0.0
      %3629 = vmatpush1.msra.mxu0 %v3232
      %3630 = vmatprep.subr.mxu0 0.0
      %3631 = vmatpush1.msra.mxu0 %v3233
      %3632 = vmatprep.subr.mxu0 0.0
      %3633 = vmatpush1.msra.mxu0 %v3234
      %3634 = vmatprep.subr.mxu0 0.0
      %3635 = vmatpush1.msra.mxu0 %v3235
      %3636 = vmatprep.subr.mxu0 0.0
      %3637 = vmatpush1.msra.mxu0 %v3236
      %3638 = vmatprep.subr.mxu0 0.0
      %3639 = vmatpush1.msra.mxu0 %v3237
      %3640 = vmatprep.mubr.f32.mxu0 %v3002
      %3641 = vmatmul.mubr.f32.gmra.mrb[0].mxu0 %v3001
      %v3642 = vpop.f32.mrb[0].mxu0
      %v3643 = vadd.f32 %v3498, %v3642
      %v3644 = vpop.f32.mrb[0].mxu0
      %3645 = vmatprep.mubr.f32.mxu0 %v3011
      %3646 = vmatmul.mubr.f32.gmra.mrb[0].mxu0 %v3010
      %v3647 = vpop.f32.mrb[0].mxu0
      %v3648 = vadd.f32 %v3503, %v3647
      %v3649 = vpop.f32.mrb[0].mxu0
      %3650 = vmatprep.mubr.f32.mxu0 %v3020
      %3651 = vmatmul.mubr.f32.gmra.mrb[0].mxu0 %v3019
      %v3652 = vpop.f32.mrb[0].mxu0
      %v3653 = vadd.f32 %v3508, %v3652
      %v3654 = vpop.f32.mrb[0].mxu0
      %3655 = vmatprep.mubr.f32.mxu0 %v3029
      %3656 = vmatmul.mubr.f32.gmra.mrb[0].mxu0 %v3028
      %v3657 = vpop.f32.mrb[0].mxu0
      %v3658 = vadd.f32 %v3513, %v3657
      %v3659 = vpop.f32.mrb[0].mxu0
      %3660 = vmatprep.mubr.f32.mxu0 %v3038
      %3661 = vmatmul.mubr.f32.gmra.mrb[0].mxu0 %v3037
      %v3662 = vpop.f32.mrb[0].mxu0
      %v3663 = vadd.f32 %v3518, %v3662
      %v3664 = vpop.f32.mrb[0].mxu0
      %3665 = vmatprep.mubr.f32.mxu0 %v3047
      %3666 = vmatmul.mubr.f32.gmra.mrb[0].mxu0 %v3046
      %v3667 = vpop.f32.mrb[0].mxu0
      %v3668 = vadd.f32 %v3523, %v3667
      %v3669 = vpop.f32.mrb[0].mxu0
      %3670 = vmatprep.mubr.f32.mxu0 %v3056
      %3671 = vmatmul.mubr.f32.gmra.mrb[0].mxu0 %v3055
      %v3672 = vpop.f32.mrb[0].mxu0
      %v3673 = vadd.f32 %v3528, %v3672
      %v3674 = vpop.f32.mrb[0].mxu0
      %3675 = vmatprep.mubr.f32.mxu0 %v3065
      %3676 = vmatmul.mubr.f32.gmra.mrb[0].mxu0 %v3064
      %v3677 = vpop.f32.mrb[0].mxu0
      %v3678 = vadd.f32 %v3533, %v3677
      %v3679 = vpop.f32.mrb[0].mxu0
      %3680 = vmatprep.mubr.f32.mxu0 %v3074
      %3681 = vmatmul.mubr.f32.gmra.mrb[0].mxu0 %v3073
      %v3682 = vpop.f32.mrb[0].mxu0
      %v3683 = vadd.f32 %v3538, %v3682
      %v3684 = vpop.f32.mrb[0].mxu0
      %3685 = vmatprep.mubr.f32.mxu0 %v3083
      %3686 = vmatmul.mubr.f32.gmra.mrb[0].mxu0 %v3082
      %v3687 = vpop.f32.mrb[0].mxu0
      %v3688 = vadd.f32 %v3543, %v3687
      %v3689 = vpop.f32.mrb[0].mxu0
      %3690 = vmatprep.mubr.f32.mxu0 %v3092
      %3691 = vmatmul.mubr.f32.gmra.mrb[0].mxu0 %v3091
      %v3692 = vpop.f32.mrb[0].mxu0
      %v3693 = vadd.f32 %v3548, %v3692
      %v3694 = vpop.f32.mrb[0].mxu0
      %3695 = vmatprep.mubr.f32.mxu0 %v3101
      %3696 = vmatmul.mubr.f32.gmra.mrb[0].mxu0 %v3100
      %v3697 = vpop.f32.mrb[0].mxu0
      %v3698 = vadd.f32 %v3553, %v3697
      %v3699 = vpop.f32.mrb[0].mxu0
      %3700 = vmatprep.mubr.f32.mxu0 %v3110
      %3701 = vmatmul.mubr.f32.gmra.mrb[0].mxu0 %v3109
      %v3702 = vpop.f32.mrb[0].mxu0
      %v3703 = vadd.f32 %v3558, %v3702
      %v3704 = vpop.f32.mrb[0].mxu0
      %3705 = vmatprep.mubr.f32.mxu0 %v3119
      %3706 = vmatmul.mubr.f32.gmra.mrb[0].mxu0 %v3118
      %v3707 = vpop.f32.mrb[0].mxu0
      %v3708 = vadd.f32 %v3563, %v3707
      %v3709 = vpop.f32.mrb[0].mxu0
      %3710 = vmatprep.mubr.f32.mxu0 %v3128
      %3711 = vmatmul.mubr.f32.gmra.mrb[0].mxu0 %v3127
      %v3712 = vpop.f32.mrb[0].mxu0
      %v3713 = vadd.f32 %v3568, %v3712
      %v3714 = vpop.f32.mrb[0].mxu0
      %3715 = vmatprep.mubr.f32.mxu0 %v3137
      %3716 = vmatmul.mubr.f32.gmra.mrb[0].mxu0 %v3136
      %v3717 = vpop.f32.mrb[0].mxu0
      %v3718 = vadd.f32 %v3573, %v3717
      %v3719 = vpop.f32.mrb[0].mxu0
      %3720 = vdwg.mxu0
      %3721 = vmatprep.subr.mxu0 0.0
      %3722 = vmatpush1.msra.mxu0 %v3238
      %3723 = vmatprep.subr.mxu0 0.0
      %3724 = vmatpush1.msra.mxu0 %v3239
      %3725 = vmatprep.subr.mxu0 0.0
      %3726 = vmatpush1.msra.mxu0 %v3240
      %3727 = vmatprep.subr.mxu0 0.0
      %3728 = vmatpush1.msra.mxu0 %v3241
      %3729 = vmatprep.subr.mxu0 0.0
      %3730 = vmatpush1.msra.mxu0 %v3242
      %3731 = vmatprep.subr.mxu0 0.0
      %3732 = vmatpush1.msra.mxu0 %v3243
      %3733 = vmatprep.subr.mxu0 0.0
      %3734 = vmatpush1.msra.mxu0 %v3244
      %3735 = vmatprep.subr.mxu0 0.0
      %3736 = vmatpush1.msra.mxu0 %v3245
      %3737 = vmatprep.subr.mxu0 0.0
      %3738 = vmatpush1.msra.mxu0 %v3246
      %3739 = vmatprep.subr.mxu0 0.0
      %3740 = vmatpush1.msra.mxu0 %v3247
      %3741 = vmatprep.subr.mxu0 0.0
      %3742 = vmatpush1.msra.mxu0 %v3248
      %3743 = vmatprep.subr.mxu0 0.0
      %3744 = vmatpush1.msra.mxu0 %v3249
      %3745 = vmatprep.subr.mxu0 0.0
      %3746 = vmatpush1.msra.mxu0 %v3250
      %3747 = vmatprep.subr.mxu0 0.0
      %3748 = vmatpush1.msra.mxu0 %v3251
      %3749 = vmatprep.subr.mxu0 0.0
      %3750 = vmatpush1.msra.mxu0 %v3252
      %3751 = vmatprep.subr.mxu0 0.0
      %3752 = vmatpush1.msra.mxu0 %v3253
      %3753 = vmatprep.subr.mxu0 0.0
      %3754 = vmatpush1.msra.mxu0 %v3254
      %3755 = vmatprep.subr.mxu0 0.0
      %3756 = vmatpush1.msra.mxu0 %v3255
      %3757 = vmatprep.subr.mxu0 0.0
      %3758 = vmatpush1.msra.mxu0 %v3256
      %3759 = vmatprep.subr.mxu0 0.0
      %3760 = vmatpush1.msra.mxu0 %v3257
      %3761 = vmatprep.subr.mxu0 0.0
      %3762 = vmatpush1.msra.mxu0 %v3258
      %3763 = vmatprep.subr.mxu0 0.0
      %3764 = vmatpush1.msra.mxu0 %v3259
      %3765 = vmatprep.subr.mxu0 0.0
      %3766 = vmatpush1.msra.mxu0 %v3260
      %3767 = vmatprep.subr.mxu0 0.0
      %3768 = vmatpush1.msra.mxu0 %v3261
      %3769 = vmatprep.subr.mxu0 0.0
      %3770 = vmatpush1.msra.mxu0 %v3262
      %3771 = vmatprep.subr.mxu0 0.0
      %3772 = vmatpush1.msra.mxu0 %v3263
      %3773 = vmatprep.subr.mxu0 0.0
      %3774 = vmatpush1.msra.mxu0 %v3264
      %3775 = vmatprep.subr.mxu0 0.0
      %3776 = vmatpush1.msra.mxu0 %v3265
      %3777 = vmatprep.subr.mxu0 0.0
      %3778 = vmatpush1.msra.mxu0 %v3266
      %3779 = vmatprep.subr.mxu0 0.0
      %3780 = vmatpush1.msra.mxu0 %v3267
      %3781 = vmatprep.subr.mxu0 0.0
      %3782 = vmatpush1.msra.mxu0 %v3268
      %3783 = vmatprep.subr.mxu0 0.0
      %3784 = vmatpush1.msra.mxu0 %v3269
      %3785 = vmatprep.mubr.f32.mxu0 %v3004
      %3786 = vmatmul.mubr.f32.gmra.mrb[0].mxu0 %v3003
      %v3787 = vpop.f32.mrb[0].mxu0
      %v3788 = vadd.f32 %v3643, %v3787
      %v3789 = vpop.f32.mrb[0].mxu0
      %3790 = vmatprep.mubr.f32.mxu0 %v3013
      %3791 = vmatmul.mubr.f32.gmra.mrb[0].mxu0 %v3012
      %v3792 = vpop.f32.mrb[0].mxu0
      %v3793 = vadd.f32 %v3648, %v3792
      %v3794 = vpop.f32.mrb[0].mxu0
      %3795 = vmatprep.mubr.f32.mxu0 %v3022
      %3796 = vmatmul.mubr.f32.gmra.mrb[0].mxu0 %v3021
      %v3797 = vpop.f32.mrb[0].mxu0
      %v3798 = vadd.f32 %v3653, %v3797
      %v3799 = vpop.f32.mrb[0].mxu0
      %3800 = vmatprep.mubr.f32.mxu0 %v3031
      %3801 = vmatmul.mubr.f32.gmra.mrb[0].mxu0 %v3030
      %v3802 = vpop.f32.mrb[0].mxu0
      %v3803 = vadd.f32 %v3658, %v3802
      %v3804 = vpop.f32.mrb[0].mxu0
      %3805 = vmatprep.mubr.f32.mxu0 %v3040
      %3806 = vmatmul.mubr.f32.gmra.mrb[0].mxu0 %v3039
      %v3807 = vpop.f32.mrb[0].mxu0
      %v3808 = vadd.f32 %v3663, %v3807
      %v3809 = vpop.f32.mrb[0].mxu0
      %3810 = vmatprep.mubr.f32.mxu0 %v3049
      %3811 = vmatmul.mubr.f32.gmra.mrb[0].mxu0 %v3048
      %v3812 = vpop.f32.mrb[0].mxu0
      %v3813 = vadd.f32 %v3668, %v3812
      %v3814 = vpop.f32.mrb[0].mxu0
      %3815 = vmatprep.mubr.f32.mxu0 %v3058
      %3816 = vmatmul.mubr.f32.gmra.mrb[0].mxu0 %v3057
      %v3817 = vpop.f32.mrb[0].mxu0
      %v3818 = vadd.f32 %v3673, %v3817
      %v3819 = vpop.f32.mrb[0].mxu0
      %3820 = vmatprep.mubr.f32.mxu0 %v3067
      %3821 = vmatmul.mubr.f32.gmra.mrb[0].mxu0 %v3066
      %v3822 = vpop.f32.mrb[0].mxu0
      %v3823 = vadd.f32 %v3678, %v3822
      %v3824 = vpop.f32.mrb[0].mxu0
      %3825 = vmatprep.mubr.f32.mxu0 %v3076
      %3826 = vmatmul.mubr.f32.gmra.mrb[0].mxu0 %v3075
      %v3827 = vpop.f32.mrb[0].mxu0
      %v3828 = vadd.f32 %v3683, %v3827
      %v3829 = vpop.f32.mrb[0].mxu0
      %3830 = vmatprep.mubr.f32.mxu0 %v3085
      %3831 = vmatmul.mubr.f32.gmra.mrb[0].mxu0 %v3084
      %v3832 = vpop.f32.mrb[0].mxu0
      %v3833 = vadd.f32 %v3688, %v3832
      %v3834 = vpop.f32.mrb[0].mxu0
      %3835 = vmatprep.mubr.f32.mxu0 %v3094
      %3836 = vmatmul.mubr.f32.gmra.mrb[0].mxu0 %v3093
      %v3837 = vpop.f32.mrb[0].mxu0
      %v3838 = vadd.f32 %v3693, %v3837
      %v3839 = vpop.f32.mrb[0].mxu0
      %3840 = vmatprep.mubr.f32.mxu0 %v3103
      %3841 = vmatmul.mubr.f32.gmra.mrb[0].mxu0 %v3102
      %v3842 = vpop.f32.mrb[0].mxu0
      %v3843 = vadd.f32 %v3698, %v3842
      %v3844 = vpop.f32.mrb[0].mxu0
      %3845 = vmatprep.mubr.f32.mxu0 %v3112
      %3846 = vmatmul.mubr.f32.gmra.mrb[0].mxu0 %v3111
      %v3847 = vpop.f32.mrb[0].mxu0
      %v3848 = vadd.f32 %v3703, %v3847
      %v3849 = vpop.f32.mrb[0].mxu0
      %3850 = vmatprep.mubr.f32.mxu0 %v3121
      %3851 = vmatmul.mubr.f32.gmra.mrb[0].mxu0 %v3120
      %v3852 = vpop.f32.mrb[0].mxu0
      %v3853 = vadd.f32 %v3708, %v3852
      %v3854 = vpop.f32.mrb[0].mxu0
      %3855 = vmatprep.mubr.f32.mxu0 %v3130
      %3856 = vmatmul.mubr.f32.gmra.mrb[0].mxu0 %v3129
      %v3857 = vpop.f32.mrb[0].mxu0
      %v3858 = vadd.f32 %v3713, %v3857
      %v3859 = vpop.f32.mrb[0].mxu0
      %3860 = vmatprep.mubr.f32.mxu0 %v3139
      %3861 = vmatmul.mubr.f32.gmra.mrb[0].mxu0 %v3138
      %v3862 = vpop.f32.mrb[0].mxu0
      %v3863 = vadd.f32 %v3718, %v3862
      %v3864 = vpop.f32.mrb[0].mxu0
      %3865 = vdwg.mxu0
      %3866 = vmatprep.subr.mxu0 0.0
      %3867 = vmatpush1.msra.mxu0 %v3270
      %3868 = vmatprep.subr.mxu0 0.0
      %3869 = vmatpush1.msra.mxu0 %v3271
      %3870 = vmatprep.subr.mxu0 0.0
      %3871 = vmatpush1.msra.mxu0 %v3272
      %3872 = vmatprep.subr.mxu0 0.0
      %3873 = vmatpush1.msra.mxu0 %v3273
      %3874 = vmatprep.subr.mxu0 0.0
      %3875 = vmatpush1.msra.mxu0 %v3274
      %3876 = vmatprep.subr.mxu0 0.0
      %3877 = vmatpush1.msra.mxu0 %v3275
      %3878 = vmatprep.subr.mxu0 0.0
      %3879 = vmatpush1.msra.mxu0 %v3276
      %3880 = vmatprep.subr.mxu0 0.0
      %3881 = vmatpush1.msra.mxu0 %v3277
      %3882 = vmatprep.subr.mxu0 0.0
      %3883 = vmatpush1.msra.mxu0 %v3278
      %3884 = vmatprep.subr.mxu0 0.0
      %3885 = vmatpush1.msra.mxu0 %v3279
      %3886 = vmatprep.subr.mxu0 0.0
      %3887 = vmatpush1.msra.mxu0 %v3280
      %3888 = vmatprep.subr.mxu0 0.0
      %3889 = vmatpush1.msra.mxu0 %v3281
      %3890 = vmatprep.subr.mxu0 0.0
      %3891 = vmatpush1.msra.mxu0 %v3282
      %3892 = vmatprep.subr.mxu0 0.0
      %3893 = vmatpush1.msra.mxu0 %v3283
      %3894 = vmatprep.subr.mxu0 0.0
      %3895 = vmatpush1.msra.mxu0 %v3284
      %3896 = vmatprep.subr.mxu0 0.0
      %3897 = vmatpush1.msra.mxu0 %v3285
      %3898 = vmatprep.subr.mxu0 0.0
      %3899 = vmatpush1.msra.mxu0 0.0
      %3900 = vmatprep.subr.mxu0 0.0
      %3901 = vmatpush1.msra.mxu0 0.0
      %3902 = vmatprep.subr.mxu0 0.0
      %3903 = vmatpush1.msra.mxu0 0.0
      %3904 = vmatprep.subr.mxu0 0.0
      %3905 = vmatpush1.msra.mxu0 0.0
      %3906 = vmatprep.subr.mxu0 0.0
      %3907 = vmatpush1.msra.mxu0 0.0
      %3908 = vmatprep.subr.mxu0 0.0
      %3909 = vmatpush1.msra.mxu0 0.0
      %3910 = vmatprep.subr.mxu0 0.0
      %3911 = vmatpush1.msra.mxu0 0.0
      %3912 = vmatprep.subr.mxu0 0.0
      %3913 = vmatpush1.msra.mxu0 0.0
      %3914 = vmatprep.subr.mxu0 0.0
      %3915 = vmatpush1.msra.mxu0 0.0
      %3916 = vmatprep.subr.mxu0 0.0
      %3917 = vmatpush1.msra.mxu0 0.0
      %3918 = vmatprep.subr.mxu0 0.0
      %3919 = vmatpush1.msra.mxu0 0.0
      %3920 = vmatprep.subr.mxu0 0.0
      %3921 = vmatpush1.msra.mxu0 0.0
      %3922 = vmatprep.subr.mxu0 0.0
      %3923 = vmatpush1.msra.mxu0 0.0
      %3924 = vmatprep.subr.mxu0 0.0
      %3925 = vmatpush1.msra.mxu0 0.0
      %3926 = vmatprep.subr.mxu0 0.0
      %3927 = vmatpush1.msra.mxu0 0.0
      %3928 = vmatprep.subr.mxu0 0.0
      %3929 = vmatpush1.msra.mxu0 0.0
      %3930 = vmatprep.mubr.f32.mxu0 0.0
      %3931 = vmatmul.mubr.f32.gmra.mrb[0].mxu0 %v3005
      %v3932 = vpop.f32.mrb[0].mxu0
      %v3933 = vadd.f32 %v3788, %v3932
      %v3934 = vpop.f32.mrb[0].mxu0
      %3935 = vmatprep.mubr.f32.mxu0 0.0
      %3936 = vmatmul.mubr.f32.gmra.mrb[0].mxu0 %v3014
      %v3937 = vpop.f32.mrb[0].mxu0
      %v3938 = vadd.f32 %v3793, %v3937
      %v3939 = vpop.f32.mrb[0].mxu0
      %3940 = vmatprep.mubr.f32.mxu0 0.0
      %3941 = vmatmul.mubr.f32.gmra.mrb[0].mxu0 %v3023
      %v3942 = vpop.f32.mrb[0].mxu0
      %v3943 = vadd.f32 %v3798, %v3942
      %v3944 = vpop.f32.mrb[0].mxu0
      %3945 = vmatprep.mubr.f32.mxu0 0.0
      %3946 = vmatmul.mubr.f32.gmra.mrb[0].mxu0 %v3032
      %v3947 = vpop.f32.mrb[0].mxu0
      %v3948 = vadd.f32 %v3803, %v3947
      %v3949 = vpop.f32.mrb[0].mxu0
      %3950 = vmatprep.mubr.f32.mxu0 0.0
      %3951 = vmatmul.mubr.f32.gmra.mrb[0].mxu0 %v3041
      %v3952 = vpop.f32.mrb[0].mxu0
      %v3953 = vadd.f32 %v3808, %v3952
      %v3954 = vpop.f32.mrb[0].mxu0
      %3955 = vmatprep.mubr.f32.mxu0 0.0
      %3956 = vmatmul.mubr.f32.gmra.mrb[0].mxu0 %v3050
      %v3957 = vpop.f32.mrb[0].mxu0
      %v3958 = vadd.f32 %v3813, %v3957
      %v3959 = vpop.f32.mrb[0].mxu0
      %3960 = vmatprep.mubr.f32.mxu0 0.0
      %3961 = vmatmul.mubr.f32.gmra.mrb[0].mxu0 %v3059
      %v3962 = vpop.f32.mrb[0].mxu0
      %v3963 = vadd.f32 %v3818, %v3962
      %v3964 = vpop.f32.mrb[0].mxu0
      %3965 = vmatprep.mubr.f32.mxu0 0.0
      %3966 = vmatmul.mubr.f32.gmra.mrb[0].mxu0 %v3068
      %v3967 = vpop.f32.mrb[0].mxu0
      %v3968 = vadd.f32 %v3823, %v3967
      %v3969 = vpop.f32.mrb[0].mxu0
      %3970 = vmatprep.mubr.f32.mxu0 0.0
      %3971 = vmatmul.mubr.f32.gmra.mrb[0].mxu0 %v3077
      %v3972 = vpop.f32.mrb[0].mxu0
      %v3973 = vadd.f32 %v3828, %v3972
      %v3974 = vpop.f32.mrb[0].mxu0
      %3975 = vmatprep.mubr.f32.mxu0 0.0
      %3976 = vmatmul.mubr.f32.gmra.mrb[0].mxu0 %v3086
      %v3977 = vpop.f32.mrb[0].mxu0
      %v3978 = vadd.f32 %v3833, %v3977
      %v3979 = vpop.f32.mrb[0].mxu0
      %3980 = vmatprep.mubr.f32.mxu0 0.0
      %3981 = vmatmul.mubr.f32.gmra.mrb[0].mxu0 %v3095
      %v3982 = vpop.f32.mrb[0].mxu0
      %v3983 = vadd.f32 %v3838, %v3982
      %v3984 = vpop.f32.mrb[0].mxu0
      %3985 = vmatprep.mubr.f32.mxu0 0.0
      %3986 = vmatmul.mubr.f32.gmra.mrb[0].mxu0 %v3104
      %v3987 = vpop.f32.mrb[0].mxu0
      %v3988 = vadd.f32 %v3843, %v3987
      %v3989 = vpop.f32.mrb[0].mxu0
      %3990 = vmatprep.mubr.f32.mxu0 0.0
      %3991 = vmatmul.mubr.f32.gmra.mrb[0].mxu0 %v3113
      %v3992 = vpop.f32.mrb[0].mxu0
      %v3993 = vadd.f32 %v3848, %v3992
      %v3994 = vpop.f32.mrb[0].mxu0
      %3995 = vmatprep.mubr.f32.mxu0 0.0
      %3996 = vmatmul.mubr.f32.gmra.mrb[0].mxu0 %v3122
      %v3997 = vpop.f32.mrb[0].mxu0
      %v3998 = vadd.f32 %v3853, %v3997
      %v3999 = vpop.f32.mrb[0].mxu0
      %4000 = vmatprep.mubr.f32.mxu0 0.0
      %4001 = vmatmul.mubr.f32.gmra.mrb[0].mxu0 %v3131
      %v4002 = vpop.f32.mrb[0].mxu0
      %v4003 = vadd.f32 %v3858, %v4002
      %v4004 = vpop.f32.mrb[0].mxu0
      %4005 = vmatprep.mubr.f32.mxu0 0.0
      %4006 = vmatmul.mubr.f32.gmra.mrb[0].mxu0 %v3140
      %v4007 = vpop.f32.mrb[0].mxu0
      %v4008 = vadd.f32 %v3863, %v4007
      %v4009 = vpop.f32.mrb[0].mxu0
      %4010 = vdwg.mxu0
      %v4011 = vadd.f32 %v3933, %v1889
      %v4012 = vadd.f32 %v3938, %v1889
      %v4013 = vadd.f32 %v3943, %v1889
      %v4014 = vadd.f32 %v3948, %v1889
      %v4015 = vadd.f32 %v3953, %v1889
      %v4016 = vadd.f32 %v3958, %v1889
      %v4017 = vadd.f32 %v3963, %v1889
      %v4018 = vadd.f32 %v3968, %v1889
      %v4019 = vadd.f32 %v3973, %v1889
      %v4020 = vadd.f32 %v3978, %v1889
      %v4021 = vadd.f32 %v3983, %v1889
      %v4022 = vadd.f32 %v3988, %v1889
      %v4023 = vadd.f32 %v3993, %v1889
      %v4024 = vadd.f32 %v3998, %v1889
      %v4025 = vadd.f32 %v4003, %v1889
      %v4026 = vadd.f32 %v4008, %v1889
      %v4027 = vxor.u32 %v4011, 2147483648
      %v4028 = vxor.u32 %v4012, 2147483648
      %v4029 = vxor.u32 %v4013, 2147483648
      %v4030 = vxor.u32 %v4014, 2147483648
      %v4031 = vxor.u32 %v4015, 2147483648
      %v4032 = vxor.u32 %v4016, 2147483648
      %v4033 = vxor.u32 %v4017, 2147483648
      %v4034 = vxor.u32 %v4018, 2147483648
      %v4035 = vxor.u32 %v4019, 2147483648
      %v4036 = vxor.u32 %v4020, 2147483648
      %v4037 = vxor.u32 %v4021, 2147483648
      %v4038 = vxor.u32 %v4022, 2147483648
      %v4039 = vxor.u32 %v4023, 2147483648
      %v4040 = vxor.u32 %v4024, 2147483648
      %v4041 = vxor.u32 %v4025, 2147483648
      %v4042 = vxor.u32 %v4026, 2147483648
      %v4043 = vmul.f32 %v4027, 1.442695
      %v4044 = vpow.pop %v4043
      %v4045 = vmul.f32 %v4028, 1.442695
      %v4046 = vpow.pop %v4045
      %v4047 = vmul.f32 %v4029, 1.442695
      %v4048 = vpow.pop %v4047
      %v4049 = vmul.f32 %v4030, 1.442695
      %v4050 = vpow.pop %v4049
      %v4051 = vmul.f32 %v4031, 1.442695
      %v4052 = vpow.pop %v4051
      %v4053 = vmul.f32 %v4032, 1.442695
      %v4054 = vpow.pop %v4053
      %v4055 = vmul.f32 %v4033, 1.442695
      %v4056 = vpow.pop %v4055
      %v4057 = vmul.f32 %v4034, 1.442695
      %v4058 = vpow.pop %v4057
      %v4059 = vmul.f32 %v4035, 1.442695
      %v4060 = vpow.pop %v4059
      %v4061 = vmul.f32 %v4036, 1.442695
      %v4062 = vpow.pop %v4061
      %v4063 = vmul.f32 %v4037, 1.442695
      %v4064 = vpow.pop %v4063
      %v4065 = vmul.f32 %v4038, 1.442695
      %v4066 = vpow.pop %v4065
      %v4067 = vmul.f32 %v4039, 1.442695
      %v4068 = vpow.pop %v4067
      %v4069 = vmul.f32 %v4040, 1.442695
      %v4070 = vpow.pop %v4069
      %v4071 = vmul.f32 %v4041, 1.442695
      %v4072 = vpow.pop %v4071
      %v4073 = vmul.f32 %v4042, 1.442695
      %v4074 = vpow.pop %v4073
      %v4075 = vadd.f32 %v4044, 1.0
      %v4076 = vadd.f32 %v4046, 1.0
      %v4077 = vadd.f32 %v4048, 1.0
      %v4078 = vadd.f32 %v4050, 1.0
      %v4079 = vadd.f32 %v4052, 1.0
      %v4080 = vadd.f32 %v4054, 1.0
      %v4081 = vadd.f32 %v4056, 1.0
      %v4082 = vadd.f32 %v4058, 1.0
      %v4083 = vadd.f32 %v4060, 1.0
      %v4084 = vadd.f32 %v4062, 1.0
      %v4085 = vadd.f32 %v4064, 1.0
      %v4086 = vadd.f32 %v4066, 1.0
      %v4087 = vadd.f32 %v4068, 1.0
      %v4088 = vadd.f32 %v4070, 1.0
      %v4089 = vadd.f32 %v4072, 1.0
      %v4090 = vadd.f32 %v4074, 1.0
      %v4091 = vrcp.pop %v4075
      %v4092 = vmul.f32 1.0, %v4091
      %v4093 = vrcp.pop %v4076
      %v4094 = vmul.f32 1.0, %v4093
      %v4095 = vrcp.pop %v4077
      %v4096 = vmul.f32 1.0, %v4095
      %v4097 = vrcp.pop %v4078
      %v4098 = vmul.f32 1.0, %v4097
      %v4099 = vrcp.pop %v4079
      %v4100 = vmul.f32 1.0, %v4099
      %v4101 = vrcp.pop %v4080
      %v4102 = vmul.f32 1.0, %v4101
      %v4103 = vrcp.pop %v4081
      %v4104 = vmul.f32 1.0, %v4103
      %v4105 = vrcp.pop %v4082
      %v4106 = vmul.f32 1.0, %v4105
      %v4107 = vrcp.pop %v4083
      %v4108 = vmul.f32 1.0, %v4107
      %v4109 = vrcp.pop %v4084
      %v4110 = vmul.f32 1.0, %v4109
      %v4111 = vrcp.pop %v4085
      %v4112 = vmul.f32 1.0, %v4111
      %v4113 = vrcp.pop %v4086
      %v4114 = vmul.f32 1.0, %v4113
      %v4115 = vrcp.pop %v4087
      %v4116 = vmul.f32 1.0, %v4115
      %v4117 = vrcp.pop %v4088
      %v4118 = vmul.f32 1.0, %v4117
      %v4119 = vrcp.pop %v4089
      %v4120 = vmul.f32 1.0, %v4119
      %v4121 = vrcp.pop %v4090
      %v4122 = vmul.f32 1.0, %v4121
      %v4123 = vtanh.pop %v3933
      %v4124 = vtanh.pop %v3938
      %v4125 = vtanh.pop %v3943
      %v4126 = vtanh.pop %v3948
      %v4127 = vtanh.pop %v3953
      %v4128 = vtanh.pop %v3958
      %v4129 = vtanh.pop %v3963
      %v4130 = vtanh.pop %v3968
      %v4131 = vtanh.pop %v3973
      %v4132 = vtanh.pop %v3978
      %v4133 = vtanh.pop %v3983
      %v4134 = vtanh.pop %v3988
      %v4135 = vtanh.pop %v3993
      %v4136 = vtanh.pop %v3998
      %v4137 = vtanh.pop %v4003
      %v4138 = vtanh.pop %v4008
      %v4139 = vsel %vm1888, %v4123, %v4092
      %v4140 = vsel %vm1888, %v4124, %v4094
      %v4141 = vsel %vm1888, %v4125, %v4096
      %v4142 = vsel %vm1888, %v4126, %v4098
      %v4143 = vsel %vm1888, %v4127, %v4100
      %v4144 = vsel %vm1888, %v4128, %v4102
      %v4145 = vsel %vm1888, %v4129, %v4104
      %v4146 = vsel %vm1888, %v4130, %v4106
      %v4147 = vsel %vm1888, %v4131, %v4108
      %v4148 = vsel %vm1888, %v4132, %v4110
      %v4149 = vsel %vm1888, %v4133, %v4112
      %v4150 = vsel %vm1888, %v4134, %v4114
      %v4151 = vsel %vm1888, %v4135, %v4116
      %v4152 = vsel %vm1888, %v4136, %v4118
      %v4153 = vsel %vm1888, %v4137, %v4120
      %v4154 = vsel %vm1888, %v4138, %v4122
      %v4155 = vld [vmem:[#allocation5] sm:$0xff]
      %v4156 = vld [vmem:[#allocation5 + $0x8] sm:$0xff]
      %v4157 = vld [vmem:[#allocation5 + $0x10] sm:$0xff]
      %v4158 = vld [vmem:[#allocation5 + $0x18] sm:$0xff]
      %v4159 = vld [vmem:[#allocation5 + $0x20] sm:$0xff]
      %v4160 = vld [vmem:[#allocation5 + $0x28] sm:$0xff]
      %v4161 = vld [vmem:[#allocation5 + $0x30] sm:$0xff]
      %v4162 = vld [vmem:[#allocation5 + $0x38] sm:$0xff]
      %v4163 = vld [vmem:[#allocation5 + $0x40] sm:$0xff]
      %v4164 = vld [vmem:[#allocation5 + $0x48] sm:$0xff]
      %v4165 = vld [vmem:[#allocation5 + $0x50] sm:$0xff]
      %v4166 = vld [vmem:[#allocation5 + $0x58] sm:$0xff]
      %v4167 = vld [vmem:[#allocation5 + $0x60] sm:$0xff]
      %v4168 = vld [vmem:[#allocation5 + $0x68] sm:$0xff]
      %v4169 = vld [vmem:[#allocation5 + $0x70] sm:$0xff]
      %v4170 = vld [vmem:[#allocation5 + $0x78] sm:$0xff]
      %4187 = vrot.lane.b32.xlu0 %v4155, 32
      %v4188 = vpop.permute.xlu0 %4187
      %4189 = vrot.lane.b32.xlu0 %v4156, 32
      %v4190 = vpop.permute.xlu0 %4189
      %4191 = vrot.lane.b32.xlu0 %v4157, 32
      %v4192 = vpop.permute.xlu0 %4191
      %4193 = vrot.lane.b32.xlu0 %v4158, 32
      %v4194 = vpop.permute.xlu0 %4193
      %4195 = vrot.lane.b32.xlu0 %v4159, 32
      %v4196 = vpop.permute.xlu0 %4195
      %4197 = vrot.lane.b32.xlu0 %v4160, 32
      %v4198 = vpop.permute.xlu0 %4197
      %4199 = vrot.lane.b32.xlu0 %v4161, 32
      %v4200 = vpop.permute.xlu0 %4199
      %4201 = vrot.lane.b32.xlu0 %v4162, 32
      %v4202 = vpop.permute.xlu0 %4201
      %4203 = vrot.lane.b32.xlu0 %v4163, 32
      %v4204 = vpop.permute.xlu0 %4203
      %4205 = vrot.lane.b32.xlu0 %v4164, 32
      %v4206 = vpop.permute.xlu0 %4205
      %4207 = vrot.lane.b32.xlu0 %v4165, 32
      %v4208 = vpop.permute.xlu0 %4207
      %4209 = vrot.lane.b32.xlu0 %v4166, 32
      %v4210 = vpop.permute.xlu0 %4209
      %4211 = vrot.lane.b32.xlu0 %v4167, 32
      %v4212 = vpop.permute.xlu0 %4211
      %4213 = vrot.lane.b32.xlu0 %v4168, 32
      %v4214 = vpop.permute.xlu0 %4213
      %4215 = vrot.lane.b32.xlu0 %v4169, 32
      %v4216 = vpop.permute.xlu0 %4215
      %4217 = vrot.lane.b32.xlu0 %v4170, 32
      %v4218 = vpop.permute.xlu0 %4217
      %v4235 = vmul.f32 %v4139, %v4188
      %v4236 = vmul.f32 %v4140, %v4190
      %v4237 = vmul.f32 %v4141, %v4192
      %v4238 = vmul.f32 %v4142, %v4194
      %v4239 = vmul.f32 %v4143, %v4196
      %v4240 = vmul.f32 %v4144, %v4198
      %v4241 = vmul.f32 %v4145, %v4200
      %v4242 = vmul.f32 %v4146, %v4202
      %v4243 = vmul.f32 %v4147, %v4204
      %v4244 = vmul.f32 %v4148, %v4206
      %v4245 = vmul.f32 %v4149, %v4208
      %v4246 = vmul.f32 %v4150, %v4210
      %v4247 = vmul.f32 %v4151, %v4212
      %v4248 = vmul.f32 %v4152, %v4214
      %v4249 = vmul.f32 %v4153, %v4216
      %v4250 = vmul.f32 %v4154, %v4218
      %4267 = vrot.lane.b32.xlu0 %v4139, 64
      %v4268 = vpop.permute.xlu0 %4267
      %4269 = vrot.lane.b32.xlu0 %v4140, 64
      %v4270 = vpop.permute.xlu0 %4269
      %4271 = vrot.lane.b32.xlu0 %v4141, 64
      %v4272 = vpop.permute.xlu0 %4271
      %4273 = vrot.lane.b32.xlu0 %v4142, 64
      %v4274 = vpop.permute.xlu0 %4273
      %4275 = vrot.lane.b32.xlu0 %v4143, 64
      %v4276 = vpop.permute.xlu0 %4275
      %4277 = vrot.lane.b32.xlu0 %v4144, 64
      %v4278 = vpop.permute.xlu0 %4277
      %4279 = vrot.lane.b32.xlu0 %v4145, 64
      %v4280 = vpop.permute.xlu0 %4279
      %4281 = vrot.lane.b32.xlu0 %v4146, 64
      %v4282 = vpop.permute.xlu0 %4281
      %4283 = vrot.lane.b32.xlu0 %v4147, 64
      %v4284 = vpop.permute.xlu0 %4283
      %4285 = vrot.lane.b32.xlu0 %v4148, 64
      %v4286 = vpop.permute.xlu0 %4285
      %4287 = vrot.lane.b32.xlu0 %v4149, 64
      %v4288 = vpop.permute.xlu0 %4287
      %4289 = vrot.lane.b32.xlu0 %v4150, 64
      %v4290 = vpop.permute.xlu0 %4289
      %4291 = vrot.lane.b32.xlu0 %v4151, 64
      %v4292 = vpop.permute.xlu0 %4291
      %4293 = vrot.lane.b32.xlu0 %v4152, 64
      %v4294 = vpop.permute.xlu0 %4293
      %4295 = vrot.lane.b32.xlu0 %v4153, 64
      %v4296 = vpop.permute.xlu0 %4295
      %4297 = vrot.lane.b32.xlu0 %v4154, 64
      %v4298 = vpop.permute.xlu0 %4297
      %v4315 = vmul.f32 %v4139, %v4268
      %v4316 = vmul.f32 %v4140, %v4270
      %v4317 = vmul.f32 %v4141, %v4272
      %v4318 = vmul.f32 %v4142, %v4274
      %v4319 = vmul.f32 %v4143, %v4276
      %v4320 = vmul.f32 %v4144, %v4278
      %v4321 = vmul.f32 %v4145, %v4280
      %v4322 = vmul.f32 %v4146, %v4282
      %v4323 = vmul.f32 %v4147, %v4284
      %v4324 = vmul.f32 %v4148, %v4286
      %v4325 = vmul.f32 %v4149, %v4288
      %v4326 = vmul.f32 %v4150, %v4290
      %v4327 = vmul.f32 %v4151, %v4292
      %v4328 = vmul.f32 %v4152, %v4294
      %v4329 = vmul.f32 %v4153, %v4296
      %v4330 = vmul.f32 %v4154, %v4298
      %4347 = vrot.lane.b32.xlu0 %v4315, 32
      %v4348 = vpop.permute.xlu0 %4347
      %4349 = vrot.lane.b32.xlu0 %v4316, 32
      %v4350 = vpop.permute.xlu0 %4349
      %4351 = vrot.lane.b32.xlu0 %v4317, 32
      %v4352 = vpop.permute.xlu0 %4351
      %4353 = vrot.lane.b32.xlu0 %v4318, 32
      %v4354 = vpop.permute.xlu0 %4353
      %4355 = vrot.lane.b32.xlu0 %v4319, 32
      %v4356 = vpop.permute.xlu0 %4355
      %4357 = vrot.lane.b32.xlu0 %v4320, 32
      %v4358 = vpop.permute.xlu0 %4357
      %4359 = vrot.lane.b32.xlu0 %v4321, 32
      %v4360 = vpop.permute.xlu0 %4359
      %4361 = vrot.lane.b32.xlu0 %v4322, 32
      %v4362 = vpop.permute.xlu0 %4361
      %4363 = vrot.lane.b32.xlu0 %v4323, 32
      %v4364 = vpop.permute.xlu0 %4363
      %4365 = vrot.lane.b32.xlu0 %v4324, 32
      %v4366 = vpop.permute.xlu0 %4365
      %4367 = vrot.lane.b32.xlu0 %v4325, 32
      %v4368 = vpop.permute.xlu0 %4367
      %4369 = vrot.lane.b32.xlu0 %v4326, 32
      %v4370 = vpop.permute.xlu0 %4369
      %4371 = vrot.lane.b32.xlu0 %v4327, 32
      %v4372 = vpop.permute.xlu0 %4371
      %4373 = vrot.lane.b32.xlu0 %v4328, 32
      %v4374 = vpop.permute.xlu0 %4373
      %4375 = vrot.lane.b32.xlu0 %v4329, 32
      %v4376 = vpop.permute.xlu0 %4375
      %4377 = vrot.lane.b32.xlu0 %v4330, 32
      %v4378 = vpop.permute.xlu0 %4377
      %v4395 = vadd.f32 %v4235, %v4348
      %v4396 = vadd.f32 %v4236, %v4350
      %v4397 = vadd.f32 %v4237, %v4352
      %v4398 = vadd.f32 %v4238, %v4354
      %v4399 = vadd.f32 %v4239, %v4356
      %v4400 = vadd.f32 %v4240, %v4358
      %v4401 = vadd.f32 %v4241, %v4360
      %v4402 = vadd.f32 %v4242, %v4362
      %v4403 = vadd.f32 %v4243, %v4364
      %v4404 = vadd.f32 %v4244, %v4366
      %v4405 = vadd.f32 %v4245, %v4368
      %v4406 = vadd.f32 %v4246, %v4370
      %v4407 = vadd.f32 %v4247, %v4372
      %v4408 = vadd.f32 %v4248, %v4374
      %v4409 = vadd.f32 %v4249, %v4376
      %v4410 = vadd.f32 %v4250, %v4378
      %v4411 = vtanh.pop %v4395
      %v4412 = vtanh.pop %v4396
      %v4413 = vtanh.pop %v4397
      %v4414 = vtanh.pop %v4398
      %v4415 = vtanh.pop %v4399
      %v4416 = vtanh.pop %v4400
      %v4417 = vtanh.pop %v4401
      %v4418 = vtanh.pop %v4402
      %v4419 = vtanh.pop %v4403
      %v4420 = vtanh.pop %v4404
      %v4421 = vtanh.pop %v4405
      %v4422 = vtanh.pop %v4406
      %v4423 = vtanh.pop %v4407
      %v4424 = vtanh.pop %v4408
      %v4425 = vtanh.pop %v4409
      %v4426 = vtanh.pop %v4410
      %4443 = vrot.lane.b32.xlu0 %v4411, 64
      %v4444 = vpop.permute.xlu0 %4443
      %4445 = vrot.lane.b32.xlu0 %v4412, 64
      %v4446 = vpop.permute.xlu0 %4445
      %4447 = vrot.lane.b32.xlu0 %v4413, 64
      %v4448 = vpop.permute.xlu0 %4447
      %4449 = vrot.lane.b32.xlu0 %v4414, 64
      %v4450 = vpop.permute.xlu0 %4449
      %4451 = vrot.lane.b32.xlu0 %v4415, 64
      %v4452 = vpop.permute.xlu0 %4451
      %4453 = vrot.lane.b32.xlu0 %v4416, 64
      %v4454 = vpop.permute.xlu0 %4453
      %4455 = vrot.lane.b32.xlu0 %v4417, 64
      %v4456 = vpop.permute.xlu0 %4455
      %4457 = vrot.lane.b32.xlu0 %v4418, 64
      %v4458 = vpop.permute.xlu0 %4457
      %4459 = vrot.lane.b32.xlu0 %v4419, 64
      %v4460 = vpop.permute.xlu0 %4459
      %4461 = vrot.lane.b32.xlu0 %v4420, 64
      %v4462 = vpop.permute.xlu0 %4461
      %4463 = vrot.lane.b32.xlu0 %v4421, 64
      %v4464 = vpop.permute.xlu0 %4463
      %4465 = vrot.lane.b32.xlu0 %v4422, 64
      %v4466 = vpop.permute.xlu0 %4465
      %4467 = vrot.lane.b32.xlu0 %v4423, 64
      %v4468 = vpop.permute.xlu0 %4467
      %4469 = vrot.lane.b32.xlu0 %v4424, 64
      %v4470 = vpop.permute.xlu0 %4469
      %4471 = vrot.lane.b32.xlu0 %v4425, 64
      %v4472 = vpop.permute.xlu0 %4471
      %4473 = vrot.lane.b32.xlu0 %v4426, 64
      %v4474 = vpop.permute.xlu0 %4473
      %v4491 = vmul.f32 %v4139, %v4444
      %v4492 = vmul.f32 %v4140, %v4446
      %v4493 = vmul.f32 %v4141, %v4448
      %v4494 = vmul.f32 %v4142, %v4450
      %v4495 = vmul.f32 %v4143, %v4452
      %v4496 = vmul.f32 %v4144, %v4454
      %v4497 = vmul.f32 %v4145, %v4456
      %v4498 = vmul.f32 %v4146, %v4458
      %v4499 = vmul.f32 %v4147, %v4460
      %v4500 = vmul.f32 %v4148, %v4462
      %v4501 = vmul.f32 %v4149, %v4464
      %v4502 = vmul.f32 %v4150, %v4466
      %v4503 = vmul.f32 %v4151, %v4468
      %v4504 = vmul.f32 %v4152, %v4470
      %v4505 = vmul.f32 %v4153, %v4472
      %v4506 = vmul.f32 %v4154, %v4474
      %4523 = vrot.lane.b32.xlu0 %v4395, 96
      %v4524 = vpop.permute.xlu0 %4523
      %4525 = vrot.lane.b32.xlu0 %v4396, 96
      %v4526 = vpop.permute.xlu0 %4525
      %4527 = vrot.lane.b32.xlu0 %v4397, 96
      %v4528 = vpop.permute.xlu0 %4527
      %4529 = vrot.lane.b32.xlu0 %v4398, 96
      %v4530 = vpop.permute.xlu0 %4529
      %4531 = vrot.lane.b32.xlu0 %v4399, 96
      %v4532 = vpop.permute.xlu0 %4531
      %4533 = vrot.lane.b32.xlu0 %v4400, 96
      %v4534 = vpop.permute.xlu0 %4533
      %4535 = vrot.lane.b32.xlu0 %v4401, 96
      %v4536 = vpop.permute.xlu0 %4535
      %4537 = vrot.lane.b32.xlu0 %v4402, 96
      %v4538 = vpop.permute.xlu0 %4537
      %4539 = vrot.lane.b32.xlu0 %v4403, 96
      %v4540 = vpop.permute.xlu0 %4539
      %4541 = vrot.lane.b32.xlu0 %v4404, 96
      %v4542 = vpop.permute.xlu0 %4541
      %4543 = vrot.lane.b32.xlu0 %v4405, 96
      %v4544 = vpop.permute.xlu0 %4543
      %4545 = vrot.lane.b32.xlu0 %v4406, 96
      %v4546 = vpop.permute.xlu0 %4545
      %4547 = vrot.lane.b32.xlu0 %v4407, 96
      %v4548 = vpop.permute.xlu0 %4547
      %4549 = vrot.lane.b32.xlu0 %v4408, 96
      %v4550 = vpop.permute.xlu0 %4549
      %4551 = vrot.lane.b32.xlu0 %v4409, 96
      %v4552 = vpop.permute.xlu0 %4551
      %4553 = vrot.lane.b32.xlu0 %v4410, 96
      %v4554 = vpop.permute.xlu0 %4553
      %4571 = vst.msk [vmem:[#allocation5] sm:$0xff] %vm2450, %v4524
      %4572 = vst.msk [vmem:[#allocation5 + $0x8] sm:$0xff] %vm2450, %v4526
      %4573 = vst.msk [vmem:[#allocation5 + $0x10] sm:$0xff] %vm2450, %v4528
      %4574 = vst.msk [vmem:[#allocation5 + $0x18] sm:$0xff] %vm2450, %v4530
      %4575 = vst.msk [vmem:[#allocation5 + $0x20] sm:$0xff] %vm2450, %v4532
      %4576 = vst.msk [vmem:[#allocation5 + $0x28] sm:$0xff] %vm2450, %v4534
      %4577 = vst.msk [vmem:[#allocation5 + $0x30] sm:$0xff] %vm2450, %v4536
      %4578 = vst.msk [vmem:[#allocation5 + $0x38] sm:$0xff] %vm2450, %v4538
      %4579 = vst.msk [vmem:[#allocation5 + $0x40] sm:$0xff] %vm2450, %v4540
      %4580 = vst.msk [vmem:[#allocation5 + $0x48] sm:$0xff] %vm2450, %v4542
      %4581 = vst.msk [vmem:[#allocation5 + $0x50] sm:$0xff] %vm2450, %v4544
      %4582 = vst.msk [vmem:[#allocation5 + $0x58] sm:$0xff] %vm2450, %v4546
      %4583 = vst.msk [vmem:[#allocation5 + $0x60] sm:$0xff] %vm2450, %v4548
      %4584 = vst.msk [vmem:[#allocation5 + $0x68] sm:$0xff] %vm2450, %v4550
      %4585 = vst.msk [vmem:[#allocation5 + $0x70] sm:$0xff] %vm2450, %v4552
      %4586 = vst.msk [vmem:[#allocation5 + $0x78] sm:$0xff] %vm2450, %v4554
      %4603 = vrot.lane.b32.xlu0 %v4491, 64
      %v4604 = vpop.permute.xlu0 %4603
      %4605 = vrot.lane.b32.xlu0 %v4492, 64
      %v4606 = vpop.permute.xlu0 %4605
      %4607 = vrot.lane.b32.xlu0 %v4493, 64
      %v4608 = vpop.permute.xlu0 %4607
      %4609 = vrot.lane.b32.xlu0 %v4494, 64
      %v4610 = vpop.permute.xlu0 %4609
      %4611 = vrot.lane.b32.xlu0 %v4495, 64
      %v4612 = vpop.permute.xlu0 %4611
      %4613 = vrot.lane.b32.xlu0 %v4496, 64
      %v4614 = vpop.permute.xlu0 %4613
      %4615 = vrot.lane.b32.xlu0 %v4497, 64
      %v4616 = vpop.permute.xlu0 %4615
      %4617 = vrot.lane.b32.xlu0 %v4498, 64
      %v4618 = vpop.permute.xlu0 %4617
      %4619 = vrot.lane.b32.xlu0 %v4499, 64
      %v4620 = vpop.permute.xlu0 %4619
      %4621 = vrot.lane.b32.xlu0 %v4500, 64
      %v4622 = vpop.permute.xlu0 %4621
      %4623 = vrot.lane.b32.xlu0 %v4501, 64
      %v4624 = vpop.permute.xlu0 %4623
      %4625 = vrot.lane.b32.xlu0 %v4502, 64
      %v4626 = vpop.permute.xlu0 %4625
      %4627 = vrot.lane.b32.xlu0 %v4503, 64
      %v4628 = vpop.permute.xlu0 %4627
      %4629 = vrot.lane.b32.xlu0 %v4504, 64
      %v4630 = vpop.permute.xlu0 %4629
      %4631 = vrot.lane.b32.xlu0 %v4505, 64
      %v4632 = vpop.permute.xlu0 %4631
      %4633 = vrot.lane.b32.xlu0 %v4506, 64
      %v4634 = vpop.permute.xlu0 %4633
      %vm4651 = vcmask 523520
      %4652 = vst.msk [vmem:[%s2596 + $0x1] sm:$0xff] %vm4651, %v4604
      %4653 = vst.msk [vmem:[%s2596 + $0x11] sm:$0xff] %vm4651, %v4606
      %4654 = vst.msk [vmem:[%s2596 + $0x21] sm:$0xff] %vm4651, %v4608
      %4655 = vst.msk [vmem:[%s2596 + $0x31] sm:$0xff] %vm4651, %v4610
      %4656 = vst.msk [vmem:[%s2596 + $0x41] sm:$0xff] %vm4651, %v4612
      %4657 = vst.msk [vmem:[%s2596 + $0x51] sm:$0xff] %vm4651, %v4614
      %4658 = vst.msk [vmem:[%s2596 + $0x61] sm:$0xff] %vm4651, %v4616
      %4659 = vst.msk [vmem:[%s2596 + $0x71] sm:$0xff] %vm4651, %v4618
      %4660 = vst.msk [vmem:[%s2596 + $0xa1] sm:$0xff] %vm4651, %v4620
      %4661 = vst.msk [vmem:[%s2596 + $0xb1] sm:$0xff] %vm4651, %v4622
      %4662 = vst.msk [vmem:[%s2596 + $0xc1] sm:$0xff] %vm4651, %v4624
      %4663 = vst.msk [vmem:[%s2596 + $0xd1] sm:$0xff] %vm4651, %v4626
      %4664 = vst.msk [vmem:[%s2596 + $0xe1] sm:$0xff] %vm4651, %v4628
      %4665 = vst.msk [vmem:[%s2596 + $0xf1] sm:$0xff] %vm4651, %v4630
      %4666 = vst.msk [vmem:[%s2596 + $0x101] sm:$0xff] %vm4651, %v4632
      %4667 = vst.msk [vmem:[%s2596 + $0x111] sm:$0xff] %vm4651, %v4634
      %v4668 = vld [vmem:[%s3] sm:$0xff]
      %v4669 = vld [vmem:[%s3 + $0x8] sm:$0xff]
      %v4670 = vld [vmem:[%s3 + $0x10] sm:$0xff]
      %v4671 = vld [vmem:[%s3 + $0x18] sm:$0xff]
      %4672 = vrot.lane.b32.xlu0 %v4491, 32
      %v4673 = vpop.permute.xlu0 %4672
      %4674 = vrot.lane.b32.xlu0 %v4492, 32
      %v4675 = vpop.permute.xlu0 %4674
      %4676 = vrot.lane.b32.xlu0 %v4493, 32
      %v4677 = vpop.permute.xlu0 %4676
      %4678 = vrot.lane.b32.xlu0 %v4494, 32
      %v4679 = vpop.permute.xlu0 %4678
      %4680 = vrot.lane.b32.xlu0 %v4495, 32
      %v4681 = vpop.permute.xlu0 %4680
      %4682 = vrot.lane.b32.xlu0 %v4496, 32
      %v4683 = vpop.permute.xlu0 %4682
      %4684 = vrot.lane.b32.xlu0 %v4497, 32
      %v4685 = vpop.permute.xlu0 %4684
      %4686 = vrot.lane.b32.xlu0 %v4498, 32
      %v4687 = vpop.permute.xlu0 %4686
      %4688 = vrot.lane.b32.xlu0 %v4499, 32
      %v4689 = vpop.permute.xlu0 %4688
      %4690 = vrot.lane.b32.xlu0 %v4500, 32
      %v4691 = vpop.permute.xlu0 %4690
      %4692 = vrot.lane.b32.xlu0 %v4501, 32
      %v4693 = vpop.permute.xlu0 %4692
      %4694 = vrot.lane.b32.xlu0 %v4502, 32
      %v4695 = vpop.permute.xlu0 %4694
      %4696 = vrot.lane.b32.xlu0 %v4503, 32
      %v4697 = vpop.permute.xlu0 %4696
      %4698 = vrot.lane.b32.xlu0 %v4504, 32
      %v4699 = vpop.permute.xlu0 %4698
      %4700 = vrot.lane.b32.xlu0 %v4505, 32
      %v4701 = vpop.permute.xlu0 %4700
      %4702 = vrot.lane.b32.xlu0 %v4506, 32
      %v4703 = vpop.permute.xlu0 %4702
      %v4704 = vsel %vm2450, %v4673, 0
      %v4706 = vsel %vm2450, %v4675, 0
      %v4708 = vsel %vm2450, %v4677, 0
      %v4710 = vsel %vm2450, %v4679, 0
      %v4712 = vsel %vm2450, %v4681, 0
      %v4714 = vsel %vm2450, %v4683, 0
      %v4716 = vsel %vm2450, %v4685, 0
      %v4718 = vsel %vm2450, %v4687, 0
      %v4720 = vsel %vm2450, %v4689, 0
      %v4722 = vsel %vm2450, %v4691, 0
      %v4724 = vsel %vm2450, %v4693, 0
      %v4726 = vsel %vm2450, %v4695, 0
      %v4728 = vsel %vm2450, %v4697, 0
      %v4730 = vsel %vm2450, %v4699, 0
      %v4732 = vsel %vm2450, %v4701, 0
      %v4734 = vsel %vm2450, %v4703, 0
      %4736 = vmatprep.subr.mxu0 0.0
      %4737 = vmatpush1.msra.mxu0 %v4668
      %4738 = vmatprep.subr.mxu0 0.0
      %4739 = vmatpush1.msra.mxu0 %v4669
      %4740 = vmatprep.subr.mxu0 0.0
      %4741 = vmatpush1.msra.mxu0 %v4670
      %4742 = vmatprep.subr.mxu0 0.0
      %4743 = vmatpush1.msra.mxu0 %v4671
      %4744 = vmatprep.subr.mxu0 0.0
      %4745 = vmatpush1.msra.mxu0 0.0
      %4746 = vmatprep.subr.mxu0 0.0
      %4747 = vmatpush1.msra.mxu0 0.0
      %4748 = vmatprep.subr.mxu0 0.0
      %4749 = vmatpush1.msra.mxu0 0.0
      %4750 = vmatprep.subr.mxu0 0.0
      %4751 = vmatpush1.msra.mxu0 0.0
      %4752 = vmatprep.subr.mxu0 0.0
      %4753 = vmatpush1.msra.mxu0 0.0
      %4754 = vmatprep.subr.mxu0 0.0
      %4755 = vmatpush1.msra.mxu0 0.0
      %4756 = vmatprep.subr.mxu0 0.0
      %4757 = vmatpush1.msra.mxu0 0.0
      %4758 = vmatprep.subr.mxu0 0.0
      %4759 = vmatpush1.msra.mxu0 0.0
      %4760 = vmatprep.subr.mxu0 0.0
      %4761 = vmatpush1.msra.mxu0 0.0
      %4762 = vmatprep.subr.mxu0 0.0
      %4763 = vmatpush1.msra.mxu0 0.0
      %4764 = vmatprep.subr.mxu0 0.0
      %4765 = vmatpush1.msra.mxu0 0.0
      %4766 = vmatprep.subr.mxu0 0.0
      %4767 = vmatpush1.msra.mxu0 0.0
      %4768 = vmatprep.subr.mxu0 0.0
      %4769 = vmatpush1.msra.mxu0 0.0
      %4770 = vmatprep.subr.mxu0 0.0
      %4771 = vmatpush1.msra.mxu0 0.0
      %4772 = vmatprep.subr.mxu0 0.0
      %4773 = vmatpush1.msra.mxu0 0.0
      %4774 = vmatprep.subr.mxu0 0.0
      %4775 = vmatpush1.msra.mxu0 0.0
      %4776 = vmatprep.subr.mxu0 0.0
      %4777 = vmatpush1.msra.mxu0 0.0
      %4778 = vmatprep.subr.mxu0 0.0
      %4779 = vmatpush1.msra.mxu0 0.0
      %4780 = vmatprep.subr.mxu0 0.0
      %4781 = vmatpush1.msra.mxu0 0.0
      %4782 = vmatprep.subr.mxu0 0.0
      %4783 = vmatpush1.msra.mxu0 0.0
      %4784 = vmatprep.subr.mxu0 0.0
      %4785 = vmatpush1.msra.mxu0 0.0
      %4786 = vmatprep.subr.mxu0 0.0
      %4787 = vmatpush1.msra.mxu0 0.0
      %4788 = vmatprep.subr.mxu0 0.0
      %4789 = vmatpush1.msra.mxu0 0.0
      %4790 = vmatprep.subr.mxu0 0.0
      %4791 = vmatpush1.msra.mxu0 0.0
      %4792 = vmatprep.subr.mxu0 0.0
      %4793 = vmatpush1.msra.mxu0 0.0
      %4794 = vmatprep.subr.mxu0 0.0
      %4795 = vmatpush1.msra.mxu0 0.0
      %4796 = vmatprep.subr.mxu0 0.0
      %4797 = vmatpush1.msra.mxu0 0.0
      %4798 = vmatprep.subr.mxu0 0.0
      %4799 = vmatpush1.msra.mxu0 0.0
      %4800 = vmatprep.mubr.f32.mxu0 0.0
      %4801 = vmatmul.mubr.f32.gmra.mrb[0].mxu0 %v4704
      %v4802 = vpop.f32.mrb[0].mxu0
      %v4803 = vadd.f32 0.0, %v4802
      %v4804 = vpop.f32.mrb[0].mxu0
      %4805 = vmatprep.mubr.f32.mxu0 0.0
      %4806 = vmatmul.mubr.f32.gmra.mrb[0].mxu0 %v4706
      %v4807 = vpop.f32.mrb[0].mxu0
      %v4808 = vadd.f32 0.0, %v4807
      %v4809 = vpop.f32.mrb[0].mxu0
      %4810 = vmatprep.mubr.f32.mxu0 0.0
      %4811 = vmatmul.mubr.f32.gmra.mrb[0].mxu0 %v4708
      %v4812 = vpop.f32.mrb[0].mxu0
      %v4813 = vadd.f32 0.0, %v4812
      %v4814 = vpop.f32.mrb[0].mxu0
      %4815 = vmatprep.mubr.f32.mxu0 0.0
      %4816 = vmatmul.mubr.f32.gmra.mrb[0].mxu0 %v4710
      %v4817 = vpop.f32.mrb[0].mxu0
      %v4818 = vadd.f32 0.0, %v4817
      %v4819 = vpop.f32.mrb[0].mxu0
      %4820 = vmatprep.mubr.f32.mxu0 0.0
      %4821 = vmatmul.mubr.f32.gmra.mrb[0].mxu0 %v4712
      %v4822 = vpop.f32.mrb[0].mxu0
      %v4823 = vadd.f32 0.0, %v4822
      %v4824 = vpop.f32.mrb[0].mxu0
      %4825 = vmatprep.mubr.f32.mxu0 0.0
      %4826 = vmatmul.mubr.f32.gmra.mrb[0].mxu0 %v4714
      %v4827 = vpop.f32.mrb[0].mxu0
      %v4828 = vadd.f32 0.0, %v4827
      %v4829 = vpop.f32.mrb[0].mxu0
      %4830 = vmatprep.mubr.f32.mxu0 0.0
      %4831 = vmatmul.mubr.f32.gmra.mrb[0].mxu0 %v4716
      %v4832 = vpop.f32.mrb[0].mxu0
      %v4833 = vadd.f32 0.0, %v4832
      %v4834 = vpop.f32.mrb[0].mxu0
      %4835 = vmatprep.mubr.f32.mxu0 0.0
      %4836 = vmatmul.mubr.f32.gmra.mrb[0].mxu0 %v4718
      %v4837 = vpop.f32.mrb[0].mxu0
      %v4838 = vadd.f32 0.0, %v4837
      %v4839 = vpop.f32.mrb[0].mxu0
      %4840 = vmatprep.mubr.f32.mxu0 0.0
      %4841 = vmatmul.mubr.f32.gmra.mrb[0].mxu0 %v4720
      %v4842 = vpop.f32.mrb[0].mxu0
      %v4843 = vadd.f32 0.0, %v4842
      %v4844 = vpop.f32.mrb[0].mxu0
      %4845 = vmatprep.mubr.f32.mxu0 0.0
      %4846 = vmatmul.mubr.f32.gmra.mrb[0].mxu0 %v4722
      %v4847 = vpop.f32.mrb[0].mxu0
      %v4848 = vadd.f32 0.0, %v4847
      %v4849 = vpop.f32.mrb[0].mxu0
      %4850 = vmatprep.mubr.f32.mxu0 0.0
      %4851 = vmatmul.mubr.f32.gmra.mrb[0].mxu0 %v4724
      %v4852 = vpop.f32.mrb[0].mxu0
      %v4853 = vadd.f32 0.0, %v4852
      %v4854 = vpop.f32.mrb[0].mxu0
      %4855 = vmatprep.mubr.f32.mxu0 0.0
      %4856 = vmatmul.mubr.f32.gmra.mrb[0].mxu0 %v4726
      %v4857 = vpop.f32.mrb[0].mxu0
      %v4858 = vadd.f32 0.0, %v4857
      %v4859 = vpop.f32.mrb[0].mxu0
      %4860 = vmatprep.mubr.f32.mxu0 0.0
      %4861 = vmatmul.mubr.f32.gmra.mrb[0].mxu0 %v4728
      %v4862 = vpop.f32.mrb[0].mxu0
      %v4863 = vadd.f32 0.0, %v4862
      %v4864 = vpop.f32.mrb[0].mxu0
      %4865 = vmatprep.mubr.f32.mxu0 0.0
      %4866 = vmatmul.mubr.f32.gmra.mrb[0].mxu0 %v4730
      %v4867 = vpop.f32.mrb[0].mxu0
      %v4868 = vadd.f32 0.0, %v4867
      %v4869 = vpop.f32.mrb[0].mxu0
      %4870 = vmatprep.mubr.f32.mxu0 0.0
      %4871 = vmatmul.mubr.f32.gmra.mrb[0].mxu0 %v4732
      %v4872 = vpop.f32.mrb[0].mxu0
      %v4873 = vadd.f32 0.0, %v4872
      %v4874 = vpop.f32.mrb[0].mxu0
      %4875 = vmatprep.mubr.f32.mxu0 0.0
      %4876 = vmatmul.mubr.f32.gmra.mrb[0].mxu0 %v4734
      %v4877 = vpop.f32.mrb[0].mxu0
      %v4878 = vadd.f32 0.0, %v4877
      %v4879 = vpop.f32.mrb[0].mxu0
      %4880 = vdwg.mxu0
      %4881 = vst.msk [vmem:[#allocation6] sm:$0xff] %vm465, %v4803
      %4882 = vst.msk [vmem:[#allocation6 + $0x8] sm:$0xff] %vm465, %v4808
      %4883 = vst.msk [vmem:[#allocation6 + $0x10] sm:$0xff] %vm465, %v4813
      %4884 = vst.msk [vmem:[#allocation6 + $0x18] sm:$0xff] %vm465, %v4818
      %4885 = vst.msk [vmem:[#allocation6 + $0x20] sm:$0xff] %vm465, %v4823
      %4886 = vst.msk [vmem:[#allocation6 + $0x28] sm:$0xff] %vm465, %v4828
      %4887 = vst.msk [vmem:[#allocation6 + $0x30] sm:$0xff] %vm465, %v4833
      %4888 = vst.msk [vmem:[#allocation6 + $0x38] sm:$0xff] %vm465, %v4838
      %4889 = vst.msk [vmem:[#allocation6 + $0x40] sm:$0xff] %vm465, %v4843
      %4890 = vst.msk [vmem:[#allocation6 + $0x48] sm:$0xff] %vm465, %v4848
      %4891 = vst.msk [vmem:[#allocation6 + $0x50] sm:$0xff] %vm465, %v4853
      %4892 = vst.msk [vmem:[#allocation6 + $0x58] sm:$0xff] %vm465, %v4858
      %4893 = vst.msk [vmem:[#allocation6 + $0x60] sm:$0xff] %vm465, %v4863
      %4894 = vst.msk [vmem:[#allocation6 + $0x68] sm:$0xff] %vm465, %v4868
      %4895 = vst.msk [vmem:[#allocation6 + $0x70] sm:$0xff] %vm465, %v4873
      %4896 = vst.msk [vmem:[#allocation6 + $0x78] sm:$0xff] %vm465, %v4878
      %4897 = vst.msk [vmem:[%s217] sm:$0xff] %vm465, %v4803
      %4898 = vst.msk [vmem:[%s217 + $0x8] sm:$0xff] %vm465, %v4808
      %4899 = vst.msk [vmem:[%s217 + $0x10] sm:$0xff] %vm465, %v4813
      %4900 = vst.msk [vmem:[%s217 + $0x18] sm:$0xff] %vm465, %v4818
      %4901 = vst.msk [vmem:[%s217 + $0x20] sm:$0xff] %vm465, %v4823
      %4902 = vst.msk [vmem:[%s217 + $0x28] sm:$0xff] %vm465, %v4828
      %4903 = vst.msk [vmem:[%s217 + $0x30] sm:$0xff] %vm465, %v4833
      %4904 = vst.msk [vmem:[%s217 + $0x38] sm:$0xff] %vm465, %v4838
      %4905 = vst.msk [vmem:[%s217 + $0x40] sm:$0xff] %vm465, %v4843
      %4906 = vst.msk [vmem:[%s217 + $0x48] sm:$0xff] %vm465, %v4848
      %4907 = vst.msk [vmem:[%s217 + $0x50] sm:$0xff] %vm465, %v4853
      %4908 = vst.msk [vmem:[%s217 + $0x58] sm:$0xff] %vm465, %v4858
      %4909 = vst.msk [vmem:[%s217 + $0x60] sm:$0xff] %vm465, %v4863
      %4910 = vst.msk [vmem:[%s217 + $0x68] sm:$0xff] %vm465, %v4868
      %4911 = vst.msk [vmem:[%s217 + $0x70] sm:$0xff] %vm465, %v4873
      %4912 = vst.msk [vmem:[%s217 + $0x78] sm:$0xff] %vm465, %v4878
      %p4913 = scmp.lt.s32.totalorder %s15, 6
      %s4914 = scalar_select %p4913, %s15, 6
      %s4915 = smul.addr %s4914, 16
      %s4916 = smul.addr %s4915, 8
      %s4917 = scalar_lea.vmem %s4, %s4916
      // Predicated region
      $region41: #{convlstm_forward.1} parent=35 // pred_check
        %p4918 = pneg %p127
      $region42: #{convlstm_forward.1} parent=35 // pred_check_branch
        %4920 = sbr.rel (%p4918) target = $region44
      $region43: #{convlstm_forward.1} parent=35 // pred_region
        _
      $region44: #{convlstm_forward.1} parent=35 // pred_fallthru
        _
    $region36: #{convlstm_forward.1} parent=5 // pred_fallthru
      _
    %p4921 = scmp.le.s32.totalorder 2, %s10
    // Predicated region
    $region45: #{convlstm_forward.1} parent=5 // pred_check
      %p4922 = pneg %p4921
    $region46: #{convlstm_forward.1} parent=5 // pred_check_branch
      %4924 = sbr.rel (%p4922) target = $region48
    $region47: #{convlstm_forward.1} parent=5 // pred_region
      %s4925 = ssub.s32 %s10, 2
      // Predicated region
      $region49: #{convlstm_forward.1} parent=47 // pred_check
        %p4926 = pneg %p133
      $region50: #{convlstm_forward.1} parent=47 // pred_check_branch
        %4928 = sbr.rel (%p4926) target = $region52
      $region51: #{convlstm_forward.1} parent=47 // pred_region
        %p4929 = scmp.lt.s32.totalorder %s16, 6
        %s4930 = scalar_select %p4929, %s16, 6
        %s4931 = smul.addr %s4930, 16
        %s4932 = smul.addr %s4931, 8
        %s4933 = scalar_lea.vmem %s4, %s4932
      $region52: #{convlstm_forward.1} parent=47 // pred_fallthru
        _
    $region48: #{convlstm_forward.1} parent=5 // pred_fallthru
      _
  $region6: #{convlstm_forward.1} parent=0 // loop_footer
    %s14 = sadd.s32 1, %s10
  $region7: #{convlstm_forward.1} parent=0 // loop_footer_branch
    %9 = sbr.rel target = $region3
  $region8: #{convlstm_forward.1} parent=0 // loop_exit
    _

</llo_original>
